<compile_context>
chip_gen: v7x
topology: tpu7x:2x2x1
jax: 0.10.0
libtpu: 0.0.40
codegen_flags: <defaults>
</compile_context>

<pallas_src>
import functools

import jax
import jax.numpy as jnp
from jax.experimental import pallas as pl
from jax.experimental.pallas import tpu as pltpu

LANE = 128       # vreg lane width
SUBLANE = 8      # vreg sublane count
MAX_V_TILE = 512  # vocab tile for the streamed output projection


def _round_up(x, m):
    return (x + m - 1) // m * m


def _choose_v_tile(vocab):
    return min(MAX_V_TILE, _round_up(vocab, LANE))


def _vmem_limit_bytes(layers, bp, seq, hp, vp, vt):
    """Footprint-based VMEM limit; 1.5x headroom for (possibly) double-buffered constant blocks,
    clamped to [32 MiB, 64 MiB] so the request is valid on v7x as well as v5e/v6e."""
    bf2, f4 = 2, 4
    fixed = (layers * bp * hp * f4                 # h0
             + bp * seq * hp * bf2                 # encoder outputs
             + 2 * layers * hp * 3 * hp * bf2      # fused GRU weights (wi + wh)
             + 2 * layers * SUBLANE * 3 * hp * f4  # fused GRU biases (sublane padded)
             + 2 * hp * hp * bf2                   # fused concat weight
             + SUBLANE * hp * f4                   # concat bias
             + bp * vp * f4                        # resident softmax output block
             + layers * bp * hp * f4               # new-hidden output block
             + 2 * bp * hp * f4                    # emb / concat scratch
             + 2 * bp * LANE * f4)                 # m / l scratch
    streamed = 2 * (hp * vt * bf2 + SUBLANE * vt * f4)   # double-buffered w_out / b_out tiles
    total = int(1.5 * fixed) + streamed + (4 << 20)
    return max(32 << 20, min(total, 64 << 20))


def attn_decoder_kernel(
    # scalar prefetch
    tok_ref,
    # inputs
    emb_hbm, h0_ref, enc_ref,
    wi_ref, wh_ref, bi_ref, bh_ref,
    w_cat_ref, b_c_ref, w_out_ref, b_out_ref,
    # outputs
    out_ref, hnew_ref,
    # scratch
    emb_sc, concat_sc, m_sc, l_sc, gather_sem,
    *, layers, hidden_pad, batch, v_tile,
):
    """grid = (Vp // v_tile,)  (sequential / 'arbitrary': online-softmax carry).

    j == 0         : gather token embeddings from HBM, run the multi-layer GRU, dot attention
                     and the fused concat projection; init online-softmax stats.
    every j        : stream one w_out tile, compute its logits once, update running (m, l),
                     stash raw logits into the resident output block.
    j == last      : normalize the whole output block in place (exact division).
    """
    j = pl.program_id(0)
    n_tiles = pl.num_programs(0)
    H = hidden_pad
    f32, bf16 = jnp.float32, jnp.bfloat16

    @pl.when(j == 0)
    def _prologue():
        # ---- embedding gather: one small DMA per real batch row from the HBM table ----
        copies = []
        for b in range(batch):
            cp = pltpu.make_async_copy(
                emb_hbm.at[pl.ds(tok_ref[b], 1)],     # (1, Hp) row of the embedding table
                emb_sc.at[pl.ds(b, 1)],
                gather_sem.at[b])
            cp.start()
            copies.append(cp)
        for cp in copies:
            cp.wait()
        pad_rows = emb_sc.shape[0] - batch
        if pad_rows:
            emb_sc[pl.ds(batch, pad_rows), :] = jnp.zeros((pad_rows, H), f32)

        # ---- multi-layer GRU, seq_len == 1 (PyTorch gate order r, z, n) ----
        # TODO(synk): embedding_dropout / inter-layer GRU dropout are identity (eval mode).
        x = emb_sc[...]                                               # (B, H) f32
        for l in range(layers):
            h = h0_ref[l]                                             # (B, H) f32
            gi = jnp.dot(x.astype(bf16), wi_ref[l],
                         preferred_element_type=f32) + bi_ref[l]      # (B, 3H)
            gh = jnp.dot(h.astype(bf16), wh_ref[l],
                         preferred_element_type=f32) + bh_ref[l]      # (B, 3H)
            r = jax.nn.sigmoid(gi[:, :H] + gh[:, :H])
            z = jax.nn.sigmoid(gi[:, H:2 * H] + gh[:, H:2 * H])
            n = jnp.tanh(gi[:, 2 * H:] + r * gh[:, 2 * H:])
            h_new = (1.0 - z) * n + z * h
            hnew_ref[l] = h_new
            x = h_new
        rnn_out = x                                                   # (B, H) top layer, f32

        # ---- dot attention ----
        enc = enc_ref[...]                                            # (B, L, H) bf16
        seq_len = enc.shape[1]
        if seq_len < LANE:
            # Small L: VPU broadcast-multiply + XLU reduce (no underfilled MXU passes).
            encf = enc.astype(f32)
            q = rnn_out.astype(bf16).astype(f32)
            s = jnp.sum(q[:, None, :] * encf, axis=-1)                # (B, L)
            m = jnp.max(s, axis=-1, keepdims=True)
            e = jnp.exp(s - m)
            attn = e / jnp.sum(e, axis=-1, keepdims=True)             # exact normalization
            attn = attn.astype(bf16).astype(f32)
            ctx = jnp.sum(attn[:, :, None] * encf, axis=1)            # (B, H)
        else:
            # Large L: MXU batched einsum path.
            q = rnn_out[:, None, :].astype(bf16)                      # (B, 1, H)
            s = jnp.einsum("bqh,blh->bql", q, enc,
                           preferred_element_type=f32)                # (B, 1, L)
            m = jnp.max(s, axis=-1, keepdims=True)
            e = jnp.exp(s - m)
            attn = e / jnp.sum(e, axis=-1, keepdims=True)
            ctx = jnp.einsum("bql,blh->bqh", attn.astype(bf16), enc,
                             preferred_element_type=f32)[:, 0, :]     # (B, H)

        # ---- concat(rnn_out, context) -> fused Linear -> tanh ----
        cat = jnp.concatenate([rnn_out.astype(bf16), ctx.astype(bf16)], axis=-1)   # (B, 2H)
        concat_sc[...] = jnp.tanh(
            jnp.dot(cat, w_cat_ref[...], preferred_element_type=f32) + b_c_ref[...])

        # ---- init online-softmax stats ----
        m_sc[...] = jnp.full(m_sc.shape, -jnp.inf, f32)
        l_sc[...] = jnp.zeros(l_sc.shape, f32)

    # ---- output projection: one vocab tile per grid step (computed exactly once) ----
    logits = (jnp.dot(concat_sc[...].astype(bf16), w_out_ref[...],
                      preferred_element_type=f32) + b_out_ref[...])   # (B, V_TILE)
    m_prev = m_sc[...]
    m_new = jnp.maximum(m_prev, jnp.max(logits, axis=-1, keepdims=True))
    l_sc[...] = (l_sc[...] * jnp.exp(m_prev - m_new)
                 + jnp.sum(jnp.exp(logits - m_new), axis=-1, keepdims=True))
    m_sc[...] = m_new
    col = pl.multiple_of(j * v_tile, v_tile)
    out_ref[:, pl.ds(col, v_tile)] = logits          # stash raw logits in the resident block

    @pl.when(j == n_tiles - 1)
    def _epilogue():
        # Exact normalization (no approx reciprocal) so each row sums to 1.
        out_ref[...] = jnp.exp(out_ref[...] - m_sc[...]) / l_sc[...]


def pad_params(params):
    """Pad / fuse the natural-shape f32 params ONCE into lane-dense, MXU-friendly device params."""
    f32, bf16 = jnp.float32, jnp.bfloat16
    layers, H, _ = params["w_ir"].shape
    V = params["w_out"].shape[-1]
    Hp = _round_up(H, LANE)
    vt = _choose_v_tile(V)
    Vp = _round_up(V, vt)

    def pad2(w, rows, cols):
        return jnp.pad(w, ((0, rows - w.shape[0]), (0, cols - w.shape[1])))

    def fuse_w(names):  # -> (layers, Hp, 3*Hp) bf16, gate order [r | z | n]
        per_layer = [jnp.concatenate([pad2(params[n][l], Hp, Hp) for n in names], axis=1)
                     for l in range(layers)]
        return jnp.stack(per_layer, axis=0).astype(bf16)

    def fuse_b(names):  # -> (layers, 1, 3*Hp) f32
        per_layer = [jnp.concatenate([jnp.pad(params[n][l], (0, Hp - H))[None, :]
                                      for n in names], axis=1)
                     for l in range(layers)]
        return jnp.stack(per_layer, axis=0)

    w_cat = jnp.concatenate([pad2(params["w_c_rnn"], Hp, Hp),
                             pad2(params["w_c_ctx"], Hp, Hp)], axis=0).astype(bf16)
    # Padded vocab columns get a -1e30 bias so exp(logit - m) underflows to 0 in the softmax.
    b_out = jnp.full((1, Vp), -1e30, f32).at[:, :V].set(params["b_out"])

    return {
        "emb": jnp.pad(params["emb"], ((0, 0), (0, Hp - H))),           # (V, Hp) f32 (stays in HBM)
        "wi": fuse_w(("w_ir", "w_iz", "w_in")),                         # (layers, Hp, 3Hp) bf16
        "wh": fuse_w(("w_hr", "w_hz", "w_hn")),                         # (layers, Hp, 3Hp) bf16
        "bi": fuse_b(("b_ir", "b_iz", "b_in")),                         # (layers, 1, 3Hp) f32
        "bh": fuse_b(("b_hr", "b_hz", "b_hn")),                         # (layers, 1, 3Hp) f32
        "w_cat": w_cat,                                                 # (2Hp, Hp) bf16
        "b_c": pad2(params["b_c"], 1, Hp),                              # (1, Hp) f32
        "w_out": pad2(params["w_out"], Hp, Vp).astype(bf16),            # (Hp, Vp) bf16
        "b_out": b_out,                                                 # (1, Vp) f32
    }


@jax.jit
def attn_decoder_forward(tokens, last_hidden, encoder_outputs, dev):
    """tokens: (B,1) int32; last_hidden: (B,LAYERS,H); encoder_outputs: (B,L,H) (module interface)."""
    B, L, H = encoder_outputs.shape
    layers = last_hidden.shape[1]
    V = dev["emb"].shape[0]
    Hp = dev["w_cat"].shape[1]
    Vp = dev["w_out"].shape[1]
    Bp = _round_up(B, SUBLANE)
    vt = _choose_v_tile(V)
    n_vtiles = Vp // vt

    # Glue kept in the wrapper: pad hidden / encoder outputs to (8,128)-aligned shapes.
    # TODO(synk): in an autoregressive decode loop keep the hidden state layer-major / padded
    # end-to-end and move the step loop inside the kernel to avoid per-step pad/transpose glue
    # and per-call weight re-DMA.
    tok = tokens[:, 0].astype(jnp.int32)                                        # (B,) scalar prefetch
    h0 = jnp.pad(jnp.transpose(last_hidden, (1, 0, 2)),
                 ((0, 0), (0, Bp - B), (0, Hp - H)))                            # (layers, Bp, Hp) f32
    enc = jnp.pad(encoder_outputs,
                  ((0, Bp - B), (0, 0), (0, Hp - H))).astype(jnp.bfloat16)      # (Bp, L, Hp) bf16

    kernel = functools.partial(attn_decoder_kernel,
                               layers=layers, hidden_pad=Hp, batch=B, v_tile=vt)
    c2 = lambda j, tok: (0, 0)
    c3 = lambda j, tok: (0, 0, 0)
    vmap = lambda j, tok: (0, j)

    grid_spec = pltpu.PrefetchScalarGridSpec(
        num_scalar_prefetch=1,
        grid=(n_vtiles,),
        in_specs=[
            pl.BlockSpec(memory_space=pl.ANY),                # embedding table stays in HBM
            pl.BlockSpec((layers, Bp, Hp), c3),               # h0 (aliased with new-hidden output)
            pl.BlockSpec((Bp, L, Hp), c3),                    # encoder outputs (bf16)
            pl.BlockSpec((layers, Hp, 3 * Hp), c3),           # fused GRU input weights (bf16)
            pl.BlockSpec((layers, Hp, 3 * Hp), c3),           # fused GRU hidden weights (bf16)
            pl.BlockSpec((layers, 1, 3 * Hp), c3),            # fused GRU input biases
            pl.BlockSpec((layers, 1, 3 * Hp), c3),            # fused GRU hidden biases
            pl.BlockSpec((2 * Hp, Hp), c2),                   # fused concat-linear weight (bf16)
            pl.BlockSpec((1, Hp), c2),                        # concat-linear bias
            pl.BlockSpec((Hp, vt), vmap),                     # output weight, V-tiled stream (bf16)
            pl.BlockSpec((1, vt), vmap),                      # output bias, V-tiled stream
        ],
        out_specs=(
            pl.BlockSpec((Bp, Vp), c2),                       # softmax probs (resident whole block)
            pl.BlockSpec((layers, Bp, Hp), c3),               # new hidden state
        ),
        scratch_shapes=[
            pltpu.VMEM((Bp, Hp), jnp.float32),                # gathered embeddings
            pltpu.VMEM((Bp, Hp), jnp.float32),                # concat projection output
            pltpu.VMEM((Bp, 1), jnp.float32),                 # running softmax max
            pltpu.VMEM((Bp, 1), jnp.float32),                 # running softmax sum
            pltpu.SemaphoreType.DMA((B,)),                    # embedding-gather semaphores
        ],
    )

    out_p, hnew_p = pl.pallas_call(
        kernel,
        grid_spec=grid_spec,
        out_shape=(jax.ShapeDtypeStruct((Bp, Vp), jnp.float32),
                   jax.ShapeDtypeStruct((layers, Bp, Hp), jnp.float32)),
        # args: (tok, emb, h0, enc, ...) -> h0 is flattened input index 2; new hidden is output 1.
        input_output_aliases={2: 1},
        compiler_params=pltpu.CompilerParams(
            # vocab axis carries the online-softmax stats -> must stay sequential ("arbitrary").
            dimension_semantics=("arbitrary",),
            vmem_limit_bytes=_vmem_limit_bytes(layers, Bp, L, Hp, Vp, vt)),
    )(tok, dev["emb"], h0, enc,
      dev["wi"], dev["wh"], dev["bi"], dev["bh"],
      dev["w_cat"], dev["b_c"], dev["w_out"], dev["b_out"])

    out = out_p[:B, :V]
    new_hidden = jnp.transpose(hnew_p[:, :B, :H], (1, 0, 2))
    return out, new_hidden


def init_params(key, hidden, output_size, layers):
    """Deterministic synthetic parameters. Weight matrices are stored pre-transposed
    (input_dim, output_dim) so the math computes x @ W directly."""
    scale = 1.0 / float(hidden) ** 0.5
    names_lhh = ["w_ir", "w_iz", "w_in", "w_hr", "w_hz", "w_hn"]
    names_lh = ["b_ir", "b_iz", "b_in", "b_hr", "b_hz", "b_hn"]
    keys = jax.random.split(key, len(names_lhh) + len(names_lh) + 6)
    params = {}
    i = 0
    for n in names_lhh:
        params[n] = jax.random.uniform(keys[i], (layers, hidden, hidden),
                                       jnp.float32, -scale, scale); i += 1
    for n in names_lh:
        params[n] = jax.random.uniform(keys[i], (layers, hidden),
                                       jnp.float32, -scale, scale); i += 1
    params["emb"] = jax.random.normal(keys[i], (output_size, hidden), jnp.float32); i += 1
    params["w_c_rnn"] = jax.random.uniform(keys[i], (hidden, hidden), jnp.float32, -scale, scale); i += 1
    params["w_c_ctx"] = jax.random.uniform(keys[i], (hidden, hidden), jnp.float32, -scale, scale); i += 1
    params["b_c"] = jax.random.uniform(keys[i], (1, hidden), jnp.float32, -scale, scale); i += 1
    params["w_out"] = jax.random.uniform(keys[i], (hidden, output_size), jnp.float32, -scale, scale); i += 1
    params["b_out"] = jax.random.uniform(keys[i], (1, output_size), jnp.float32, -scale, scale); i += 1
    return params


def reference_forward(tokens, last_hidden, encoder_outputs, params):
    """Pure-JAX reference mirroring the PyTorch forward (eval mode), with the same precision
    policy as the kernel (bf16 matmul operands, f32 accumulation / elementwise math)."""
    f32, bf16 = jnp.float32, jnp.bfloat16

    def mm(a, w):
        return jnp.dot(a.astype(bf16), w.astype(bf16), preferred_element_type=f32)

    emb = params["emb"][tokens[:, 0]]
    h0 = jnp.transpose(last_hidden, (1, 0, 2))
    x = emb
    hs = []
    for l in range(h0.shape[0]):
        h = h0[l]
        r = jax.nn.sigmoid(mm(x, params["w_ir"][l]) + params["b_ir"][l]
                           + mm(h, params["w_hr"][l]) + params["b_hr"][l])
        z = jax.nn.sigmoid(mm(x, params["w_iz"][l]) + params["b_iz"][l]
                           + mm(h, params["w_hz"][l]) + params["b_hz"][l])
        n = jnp.tanh(mm(x, params["w_in"][l]) + params["b_in"][l]
                     + r * (mm(h, params["w_hn"][l]) + params["b_hn"][l]))
        hn = (1.0 - z) * n + z * h
        hs.append(hn)
        x = hn
    enc_b = encoder_outputs.astype(bf16)
    scores = jnp.einsum("bh,blh->bl", x.astype(bf16), enc_b, preferred_element_type=f32)
    attn = jax.nn.softmax(scores, axis=1)
    context = jnp.einsum("bl,blh->bh", attn.astype(bf16), enc_b, preferred_element_type=f32)
    co = jnp.tanh(mm(x, params["w_c_rnn"]) + mm(context, params["w_c_ctx"]) + params["b_c"])
    logits = mm(co, params["w_out"]) + params["b_out"]
    return jax.nn.softmax(logits, axis=1), jnp.transpose(jnp.stack(hs, 0), (1, 0, 2))


if __name__ == "__main__":
    B, H, L, V, LAYERS = 2, 32, 8, 64, 3

    key = jax.random.PRNGKey(0)
    k_tok, k_hid, k_enc, k_par = jax.random.split(key, 4)

    tokens = jax.random.randint(k_tok, (B, 1), 0, V, dtype=jnp.int32)
    last_hidden = jax.random.normal(k_hid, (B, LAYERS, H), jnp.float32)
    encoder_outputs = jax.random.normal(k_enc, (B, L, H), jnp.float32)
    params = init_params(k_par, H, V, LAYERS)
    dev_params = pad_params(params)   # pad/fuse/bf16-cast weights ONCE

    out, new_hidden = attn_decoder_forward(tokens, last_hidden, encoder_outputs, dev_params)
    out = jax.block_until_ready(out)
    new_hidden = jax.block_until_ready(new_hidden)

    ref_out, ref_hidden = reference_forward(tokens, last_hidden, encoder_outputs, params)

    assert out.shape == (B, V) and new_hidden.shape == (B, LAYERS, H)
    assert jnp.allclose(out, ref_out, atol=2e-3, rtol=2e-2), \
        float(jnp.max(jnp.abs(out - ref_out)))
    assert jnp.allclose(new_hidden, ref_hidden, atol=2e-3, rtol=2e-2), \
        float(jnp.max(jnp.abs(new_hidden - ref_hidden)))
    assert jnp.allclose(jnp.sum(out, axis=1), 1.0, atol=2e-3)

    print("KERNEL_OK")
</pallas_src>

<mosaic_0001>
module attributes {stable_mosaic.version = 11 : i64} {
  func.func @attn_decoder_kernel(%arg0: i32, %arg1: memref<2xi32, #tpu.memory_space<smem>>, %arg2: memref<64x128xf32, #tpu.memory_space<any>>, %arg3: memref<3x8x128xf32, #tpu.memory_space<vmem>>, %arg4: memref<8x8x128xbf16, #tpu.memory_space<vmem>>, %arg5: memref<3x128x384xbf16, #tpu.memory_space<vmem>>, %arg6: memref<3x128x384xbf16, #tpu.memory_space<vmem>>, %arg7: memref<3x1x384xf32, #tpu.memory_space<vmem>>, %arg8: memref<3x1x384xf32, #tpu.memory_space<vmem>>, %arg9: memref<256x128xbf16, #tpu.memory_space<vmem>>, %arg10: memref<1x128xf32, #tpu.memory_space<vmem>>, %arg11: memref<128x128xbf16, #tpu.memory_space<vmem>>, %arg12: memref<1x128xf32, #tpu.memory_space<vmem>>, %arg13: memref<8x128xf32, #tpu.memory_space<vmem>>, %arg14: memref<3x8x128xf32, #tpu.memory_space<vmem>>, %arg15: memref<8x128xf32, #tpu.memory_space<vmem>>, %arg16: memref<8x128xf32, #tpu.memory_space<vmem>>, %arg17: memref<8x1xf32, #tpu.memory_space<vmem>>, %arg18: memref<8x1xf32, #tpu.memory_space<vmem>>, %arg19: memref<2x!tpu.dma_semaphore, #tpu.memory_space<semaphore_mem>>) attributes {dimension_semantics = [#tpu.dimension_semantics<arbitrary>], iteration_bounds = array<i64: 1>, scalar_prefetch = 1 : i64, scratch_operands = 5 : i64, tpu.core_type = #tpu.core_type<tc>, window_params = [{}, {pipeline_mode = #tpu.pipeline_mode<synchronous>, transform_indices = @transform_1, window_bounds = array<i64: 3, 8, 128>}, {pipeline_mode = #tpu.pipeline_mode<synchronous>, transform_indices = @transform_2, window_bounds = array<i64: 8, 8, 128>}, {pipeline_mode = #tpu.pipeline_mode<synchronous>, transform_indices = @transform_3, window_bounds = array<i64: 3, 128, 384>}, {pipeline_mode = #tpu.pipeline_mode<synchronous>, transform_indices = @transform_4, window_bounds = array<i64: 3, 128, 384>}, {pipeline_mode = #tpu.pipeline_mode<synchronous>, transform_indices = @transform_5, window_bounds = array<i64: 3, 1, 384>}, {pipeline_mode = #tpu.pipeline_mode<synchronous>, transform_indices = @transform_6, window_bounds = array<i64: 3, 1, 384>}, {pipeline_mode = #tpu.pipeline_mode<synchronous>, transform_indices = @transform_7, window_bounds = array<i64: 256, 128>}, {pipeline_mode = #tpu.pipeline_mode<synchronous>, transform_indices = @transform_8, window_bounds = array<i64: 1, 128>}, {transform_indices = @transform_9, window_bounds = array<i64: 128, 128>}, {transform_indices = @transform_10, window_bounds = array<i64: 1, 128>}, {pipeline_mode = #tpu.pipeline_mode<synchronous>, transform_indices = @transform_11, window_bounds = array<i64: 8, 128>}, {pipeline_mode = #tpu.pipeline_mode<synchronous>, transform_indices = @transform_12, window_bounds = array<i64: 3, 8, 128>}]} {
    %c0_i32 = arith.constant 0 : i32
    %0 = arith.cmpi eq, %arg0, %c0_i32 : i32
    %1 = arith.extui %0 : i1 to i32
    %c0_i32_0 = arith.constant 0 : i32
    %2 = arith.cmpi ne, %1, %c0_i32_0 : i32
    scf.if %2 {
      %c0_19 = arith.constant 0 : index
      %33 = memref.load %arg1[%c0_19] : memref<2xi32, #tpu.memory_space<smem>>
      %c0_i32_20 = arith.constant 0 : i32
      %c0_i32_21 = arith.constant 0 : i32
      %34 = tpu.memref_slice %arg2[%33, %c0_i32_21] : memref<64x128xf32, #tpu.memory_space<any>> -> memref<1x128xf32, #tpu.memory_space<any>>
      %c0_i32_22 = arith.constant 0 : i32
      %c0_i32_23 = arith.constant 0 : i32
      %35 = tpu.memref_slice %arg15[%c0_i32_22, %c0_i32_23] : memref<8x128xf32, #tpu.memory_space<vmem>> -> memref<1x128xf32, #tpu.memory_space<vmem>>
      %36 = tpu.memref_slice %arg19[%c0_i32_20] : memref<2x!tpu.dma_semaphore, #tpu.memory_space<semaphore_mem>> -> memref<1x!tpu.dma_semaphore, #tpu.memory_space<semaphore_mem>>
      %37 = tpu.memref_squeeze %36 : memref<1x!tpu.dma_semaphore, #tpu.memory_space<semaphore_mem>> -> memref<!tpu.dma_semaphore, #tpu.memory_space<semaphore_mem>>
      tpu.enqueue_dma source(%34 : memref<1x128xf32, #tpu.memory_space<any>>) target(%35 : memref<1x128xf32, #tpu.memory_space<vmem>>) target_semaphore(%37 : memref<!tpu.dma_semaphore, #tpu.memory_space<semaphore_mem>>)
      %c1 = arith.constant 1 : index
      %38 = memref.load %arg1[%c1] : memref<2xi32, #tpu.memory_space<smem>>
      %c1_i32 = arith.constant 1 : i32
      %c0_i32_24 = arith.constant 0 : i32
      %39 = tpu.memref_slice %arg2[%38, %c0_i32_24] : memref<64x128xf32, #tpu.memory_space<any>> -> memref<1x128xf32, #tpu.memory_space<any>>
      %c1_i32_25 = arith.constant 1 : i32
      %c0_i32_26 = arith.constant 0 : i32
      %40 = tpu.memref_slice %arg15[%c1_i32_25, %c0_i32_26] : memref<8x128xf32, #tpu.memory_space<vmem>> -> memref<1x128xf32, #tpu.memory_space<vmem>>
      %41 = tpu.memref_slice %arg19[%c1_i32] : memref<2x!tpu.dma_semaphore, #tpu.memory_space<semaphore_mem>> -> memref<1x!tpu.dma_semaphore, #tpu.memory_space<semaphore_mem>>
      %42 = tpu.memref_squeeze %41 : memref<1x!tpu.dma_semaphore, #tpu.memory_space<semaphore_mem>> -> memref<!tpu.dma_semaphore, #tpu.memory_space<semaphore_mem>>
      tpu.enqueue_dma source(%39 : memref<1x128xf32, #tpu.memory_space<any>>) target(%40 : memref<1x128xf32, #tpu.memory_space<vmem>>) target_semaphore(%42 : memref<!tpu.dma_semaphore, #tpu.memory_space<semaphore_mem>>)
      %c0_i32_27 = arith.constant 0 : i32
      %c0_i32_28 = arith.constant 0 : i32
      %43 = tpu.memref_slice %arg2[%33, %c0_i32_28] : memref<64x128xf32, #tpu.memory_space<any>> -> memref<1x128xf32, #tpu.memory_space<any>>
      %c0_i32_29 = arith.constant 0 : i32
      %c0_i32_30 = arith.constant 0 : i32
      %44 = tpu.memref_slice %arg15[%c0_i32_29, %c0_i32_30] : memref<8x128xf32, #tpu.memory_space<vmem>> -> memref<1x128xf32, #tpu.memory_space<vmem>>
      %45 = tpu.memref_slice %arg19[%c0_i32_27] : memref<2x!tpu.dma_semaphore, #tpu.memory_space<semaphore_mem>> -> memref<1x!tpu.dma_semaphore, #tpu.memory_space<semaphore_mem>>
      %46 = tpu.memref_squeeze %45 : memref<1x!tpu.dma_semaphore, #tpu.memory_space<semaphore_mem>> -> memref<!tpu.dma_semaphore, #tpu.memory_space<semaphore_mem>>
      tpu.wait_dma2 semaphore(%46 : memref<!tpu.dma_semaphore, #tpu.memory_space<semaphore_mem>>) src(%43 : memref<1x128xf32, #tpu.memory_space<any>>) dst(%44 : memref<1x128xf32, #tpu.memory_space<vmem>>)
      %c1_i32_31 = arith.constant 1 : i32
      %c0_i32_32 = arith.constant 0 : i32
      %47 = tpu.memref_slice %arg2[%38, %c0_i32_32] : memref<64x128xf32, #tpu.memory_space<any>> -> memref<1x128xf32, #tpu.memory_space<any>>
      %c1_i32_33 = arith.constant 1 : i32
      %c0_i32_34 = arith.constant 0 : i32
      %48 = tpu.memref_slice %arg15[%c1_i32_33, %c0_i32_34] : memref<8x128xf32, #tpu.memory_space<vmem>> -> memref<1x128xf32, #tpu.memory_space<vmem>>
      %49 = tpu.memref_slice %arg19[%c1_i32_31] : memref<2x!tpu.dma_semaphore, #tpu.memory_space<semaphore_mem>> -> memref<1x!tpu.dma_semaphore, #tpu.memory_space<semaphore_mem>>
      %50 = tpu.memref_squeeze %49 : memref<1x!tpu.dma_semaphore, #tpu.memory_space<semaphore_mem>> -> memref<!tpu.dma_semaphore, #tpu.memory_space<semaphore_mem>>
      tpu.wait_dma2 semaphore(%50 : memref<!tpu.dma_semaphore, #tpu.memory_space<semaphore_mem>>) src(%47 : memref<1x128xf32, #tpu.memory_space<any>>) dst(%48 : memref<1x128xf32, #tpu.memory_space<vmem>>)
      %cst_35 = arith.constant 0.000000e+00 : f32
      %51 = vector.broadcast %cst_35 : f32 to vector<6x128xf32>
      %c2 = arith.constant 2 : index
      %c0_36 = arith.constant 0 : index
      %52 = vector.load %arg15[%c2, %c0_36] : memref<8x128xf32, #tpu.memory_space<vmem>>, vector<6x128xf32>
      tpu.vector_store %arg15[%c2, %c0_36], %51 {strides = array<i32>} : memref<8x128xf32, #tpu.memory_space<vmem>>, vector<6x128xf32>,
      %c0_37 = arith.constant 0 : index
      %c0_38 = arith.constant 0 : index
      %53 = vector.load %arg15[%c0_37, %c0_38] : memref<8x128xf32, #tpu.memory_space<vmem>>, vector<8x128xf32>
      %c0_39 = arith.constant 0 : index
      %c0_40 = arith.constant 0 : index
      %c0_41 = arith.constant 0 : index
      %54 = vector.load %arg3[%c0_39, %c0_40, %c0_41] : memref<3x8x128xf32, #tpu.memory_space<vmem>>, vector<1x8x128xf32>
      %55 = vector.shape_cast %54 : vector<1x8x128xf32> to vector<8x128xf32>
      %56 = arith.truncf %53 : vector<8x128xf32> to vector<8x128xbf16>
      %c0_42 = arith.constant 0 : index
      %c0_43 = arith.constant 0 : index
      %c0_44 = arith.constant 0 : index
      %57 = vector.load %arg5[%c0_42, %c0_43, %c0_44] : memref<3x128x384xbf16, #tpu.memory_space<vmem>>, vector<1x128x384xbf16>
      %58 = vector.shape_cast %57 : vector<1x128x384xbf16> to vector<128x384xbf16>
      %cst_45 = arith.constant dense<0.000000e+00> : vector<8x384xf32>
      %59 = tpu.matmul %56, %58, %cst_45 {dimension_numbers = #tpu.dot_dimension_numbers<[1], [0], [0], [1], [0, 0, 1, 1], [], []>} : vector<8x128xbf16>, vector<128x384xbf16>, vector<8x384xf32> -> vector<8x384xf32>
      %c0_46 = arith.constant 0 : index
      %c0_47 = arith.constant 0 : index
      %c0_48 = arith.constant 0 : index
      %60 = vector.load %arg7[%c0_46, %c0_47, %c0_48] : memref<3x1x384xf32, #tpu.memory_space<vmem>>, vector<1x1x384xf32>
      %61 = vector.shape_cast %60 : vector<1x1x384xf32> to vector<1x384xf32>
      %62 = vector.broadcast %61 : vector<1x384xf32> to vector<8x384xf32>
      %63 = arith.addf %59, %62 : vector<8x384xf32>
      %64 = arith.truncf %55 : vector<8x128xf32> to vector<8x128xbf16>
      %c0_49 = arith.constant 0 : index
      %c0_50 = arith.constant 0 : index
      %c0_51 = arith.constant 0 : index
      %65 = vector.load %arg6[%c0_49, %c0_50, %c0_51] : memref<3x128x384xbf16, #tpu.memory_space<vmem>>, vector<1x128x384xbf16>
      %66 = vector.shape_cast %65 : vector<1x128x384xbf16> to vector<128x384xbf16>
      %cst_52 = arith.constant dense<0.000000e+00> : vector<8x384xf32>
      %67 = tpu.matmul %64, %66, %cst_52 {dimension_numbers = #tpu.dot_dimension_numbers<[1], [0], [0], [1], [0, 0, 1, 1], [], []>} : vector<8x128xbf16>, vector<128x384xbf16>, vector<8x384xf32> -> vector<8x384xf32>
      %c0_53 = arith.constant 0 : index
      %c0_54 = arith.constant 0 : index
      %c0_55 = arith.constant 0 : index
      %68 = vector.load %arg8[%c0_53, %c0_54, %c0_55] : memref<3x1x384xf32, #tpu.memory_space<vmem>>, vector<1x1x384xf32>
      %69 = vector.shape_cast %68 : vector<1x1x384xf32> to vector<1x384xf32>
      %70 = vector.broadcast %69 : vector<1x384xf32> to vector<8x384xf32>
      %71 = arith.addf %67, %70 : vector<8x384xf32>
      %72 = vector.extract_strided_slice %63 {offsets = [0, 0], sizes = [8, 128], strides = [1, 1]} : vector<8x384xf32> to vector<8x128xf32>
      %73 = vector.extract_strided_slice %71 {offsets = [0, 0], sizes = [8, 128], strides = [1, 1]} : vector<8x384xf32> to vector<8x128xf32>
      %74 = arith.addf %72, %73 : vector<8x128xf32>
      %75 = arith.negf %74 : vector<8x128xf32>
      %76 = math.exp %75 : vector<8x128xf32>
      %cst_56 = arith.constant 1.000000e+00 : f32
      %77 = vector.broadcast %cst_56 : f32 to vector<8x128xf32>
      %78 = arith.addf %77, %76 : vector<8x128xf32>
      %79 = arith.divf %77, %78 : vector<8x128xf32>
      %80 = vector.extract_strided_slice %63 {offsets = [0, 128], sizes = [8, 128], strides = [1, 1]} : vector<8x384xf32> to vector<8x128xf32>
      %81 = vector.extract_strided_slice %71 {offsets = [0, 128], sizes = [8, 128], strides = [1, 1]} : vector<8x384xf32> to vector<8x128xf32>
      %82 = arith.addf %80, %81 : vector<8x128xf32>
      %83 = arith.negf %82 : vector<8x128xf32>
      %84 = math.exp %83 : vector<8x128xf32>
      %cst_57 = arith.constant 1.000000e+00 : f32
      %85 = vector.broadcast %cst_57 : f32 to vector<8x128xf32>
      %86 = arith.addf %85, %84 : vector<8x128xf32>
      %87 = arith.divf %85, %86 : vector<8x128xf32>
      %88 = vector.extract_strided_slice %63 {offsets = [0, 256], sizes = [8, 128], strides = [1, 1]} : vector<8x384xf32> to vector<8x128xf32>
      %89 = vector.extract_strided_slice %71 {offsets = [0, 256], sizes = [8, 128], strides = [1, 1]} : vector<8x384xf32> to vector<8x128xf32>
      %90 = arith.mulf %79, %89 : vector<8x128xf32>
      %91 = arith.addf %88, %90 : vector<8x128xf32>
      %92 = math.tanh %91 : vector<8x128xf32>
      %cst_58 = arith.constant 1.000000e+00 : f32
      %93 = vector.broadcast %cst_58 : f32 to vector<8x128xf32>
      %94 = arith.subf %93, %87 : vector<8x128xf32>
      %95 = arith.mulf %94, %92 : vector<8x128xf32>
      %96 = arith.mulf %87, %55 : vector<8x128xf32>
      %97 = arith.addf %95, %96 : vector<8x128xf32>
      %c0_59 = arith.constant 0 : index
      %c0_60 = arith.constant 0 : index
      %c0_61 = arith.constant 0 : index
      %98 = vector.load %arg14[%c0_59, %c0_60, %c0_61] : memref<3x8x128xf32, #tpu.memory_space<vmem>>, vector<1x8x128xf32>
      %99 = vector.shape_cast %98 : vector<1x8x128xf32> to vector<8x128xf32>
      %100 = vector.shape_cast %97 : vector<8x128xf32> to vector<1x8x128xf32>
      tpu.vector_store %arg14[%c0_59, %c0_60, %c0_61], %100 {strides = array<i32>} : memref<3x8x128xf32, #tpu.memory_space<vmem>>, vector<1x8x128xf32>,
      %c1_62 = arith.constant 1 : index
      %c0_63 = arith.constant 0 : index
      %c0_64 = arith.constant 0 : index
      %101 = vector.load %arg3[%c1_62, %c0_63, %c0_64] : memref<3x8x128xf32, #tpu.memory_space<vmem>>, vector<1x8x128xf32>
      %102 = vector.shape_cast %101 : vector<1x8x128xf32> to vector<8x128xf32>
      %103 = arith.truncf %97 : vector<8x128xf32> to vector<8x128xbf16>
      %c1_65 = arith.constant 1 : index
      %c0_66 = arith.constant 0 : index
      %c0_67 = arith.constant 0 : index
      %104 = vector.load %arg5[%c1_65, %c0_66, %c0_67] : memref<3x128x384xbf16, #tpu.memory_space<vmem>>, vector<1x128x384xbf16>
      %105 = vector.shape_cast %104 : vector<1x128x384xbf16> to vector<128x384xbf16>
      %cst_68 = arith.constant dense<0.000000e+00> : vector<8x384xf32>
      %106 = tpu.matmul %103, %105, %cst_68 {dimension_numbers = #tpu.dot_dimension_numbers<[1], [0], [0], [1], [0, 0, 1, 1], [], []>} : vector<8x128xbf16>, vector<128x384xbf16>, vector<8x384xf32> -> vector<8x384xf32>
      %c1_69 = arith.constant 1 : index
      %c0_70 = arith.constant 0 : index
      %c0_71 = arith.constant 0 : index
      %107 = vector.load %arg7[%c1_69, %c0_70, %c0_71] : memref<3x1x384xf32, #tpu.memory_space<vmem>>, vector<1x1x384xf32>
      %108 = vector.shape_cast %107 : vector<1x1x384xf32> to vector<1x384xf32>
      %109 = vector.broadcast %108 : vector<1x384xf32> to vector<8x384xf32>
      %110 = arith.addf %106, %109 : vector<8x384xf32>
      %111 = arith.truncf %102 : vector<8x128xf32> to vector<8x128xbf16>
      %c1_72 = arith.constant 1 : index
      %c0_73 = arith.constant 0 : index
      %c0_74 = arith.constant 0 : index
      %112 = vector.load %arg6[%c1_72, %c0_73, %c0_74] : memref<3x128x384xbf16, #tpu.memory_space<vmem>>, vector<1x128x384xbf16>
      %113 = vector.shape_cast %112 : vector<1x128x384xbf16> to vector<128x384xbf16>
      %cst_75 = arith.constant dense<0.000000e+00> : vector<8x384xf32>
      %114 = tpu.matmul %111, %113, %cst_75 {dimension_numbers = #tpu.dot_dimension_numbers<[1], [0], [0], [1], [0, 0, 1, 1], [], []>} : vector<8x128xbf16>, vector<128x384xbf16>, vector<8x384xf32> -> vector<8x384xf32>
      %c1_76 = arith.constant 1 : index
      %c0_77 = arith.constant 0 : index
      %c0_78 = arith.constant 0 : index
      %115 = vector.load %arg8[%c1_76, %c0_77, %c0_78] : memref<3x1x384xf32, #tpu.memory_space<vmem>>, vector<1x1x384xf32>
      %116 = vector.shape_cast %115 : vector<1x1x384xf32> to vector<1x384xf32>
      %117 = vector.broadcast %116 : vector<1x384xf32> to vector<8x384xf32>
      %118 = arith.addf %114, %117 : vector<8x384xf32>
      %119 = vector.extract_strided_slice %110 {offsets = [0, 0], sizes = [8, 128], strides = [1, 1]} : vector<8x384xf32> to vector<8x128xf32>
      %120 = vector.extract_strided_slice %118 {offsets = [0, 0], sizes = [8, 128], strides = [1, 1]} : vector<8x384xf32> to vector<8x128xf32>
      %121 = arith.addf %119, %120 : vector<8x128xf32>
      %122 = arith.negf %121 : vector<8x128xf32>
      %123 = math.exp %122 : vector<8x128xf32>
      %cst_79 = arith.constant 1.000000e+00 : f32
      %124 = vector.broadcast %cst_79 : f32 to vector<8x128xf32>
      %125 = arith.addf %124, %123 : vector<8x128xf32>
      %126 = arith.divf %124, %125 : vector<8x128xf32>
      %127 = vector.extract_strided_slice %110 {offsets = [0, 128], sizes = [8, 128], strides = [1, 1]} : vector<8x384xf32> to vector<8x128xf32>
      %128 = vector.extract_strided_slice %118 {offsets = [0, 128], sizes = [8, 128], strides = [1, 1]} : vector<8x384xf32> to vector<8x128xf32>
      %129 = arith.addf %127, %128 : vector<8x128xf32>
      %130 = arith.negf %129 : vector<8x128xf32>
      %131 = math.exp %130 : vector<8x128xf32>
      %cst_80 = arith.constant 1.000000e+00 : f32
      %132 = vector.broadcast %cst_80 : f32 to vector<8x128xf32>
      %133 = arith.addf %132, %131 : vector<8x128xf32>
      %134 = arith.divf %132, %133 : vector<8x128xf32>
      %135 = vector.extract_strided_slice %110 {offsets = [0, 256], sizes = [8, 128], strides = [1, 1]} : vector<8x384xf32> to vector<8x128xf32>
      %136 = vector.extract_strided_slice %118 {offsets = [0, 256], sizes = [8, 128], strides = [1, 1]} : vector<8x384xf32> to vector<8x128xf32>
      %137 = arith.mulf %126, %136 : vector<8x128xf32>
      %138 = arith.addf %135, %137 : vector<8x128xf32>
      %139 = math.tanh %138 : vector<8x128xf32>
      %cst_81 = arith.constant 1.000000e+00 : f32
      %140 = vector.broadcast %cst_81 : f32 to vector<8x128xf32>
      %141 = arith.subf %140, %134 : vector<8x128xf32>
      %142 = arith.mulf %141, %139 : vector<8x128xf32>
      %143 = arith.mulf %134, %102 : vector<8x128xf32>
      %144 = arith.addf %142, %143 : vector<8x128xf32>
      %c1_82 = arith.constant 1 : index
      %c0_83 = arith.constant 0 : index
      %c0_84 = arith.constant 0 : index
      %145 = vector.load %arg14[%c1_82, %c0_83, %c0_84] : memref<3x8x128xf32, #tpu.memory_space<vmem>>, vector<1x8x128xf32>
      %146 = vector.shape_cast %145 : vector<1x8x128xf32> to vector<8x128xf32>
      %147 = vector.shape_cast %144 : vector<8x128xf32> to vector<1x8x128xf32>
      tpu.vector_store %arg14[%c1_82, %c0_83, %c0_84], %147 {strides = array<i32>} : memref<3x8x128xf32, #tpu.memory_space<vmem>>, vector<1x8x128xf32>,
      %c2_85 = arith.constant 2 : index
      %c0_86 = arith.constant 0 : index
      %c0_87 = arith.constant 0 : index
      %148 = vector.load %arg3[%c2_85, %c0_86, %c0_87] : memref<3x8x128xf32, #tpu.memory_space<vmem>>, vector<1x8x128xf32>
      %149 = vector.shape_cast %148 : vector<1x8x128xf32> to vector<8x128xf32>
      %150 = arith.truncf %144 : vector<8x128xf32> to vector<8x128xbf16>
      %c2_88 = arith.constant 2 : index
      %c0_89 = arith.constant 0 : index
      %c0_90 = arith.constant 0 : index
      %151 = vector.load %arg5[%c2_88, %c0_89, %c0_90] : memref<3x128x384xbf16, #tpu.memory_space<vmem>>, vector<1x128x384xbf16>
      %152 = vector.shape_cast %151 : vector<1x128x384xbf16> to vector<128x384xbf16>
      %cst_91 = arith.constant dense<0.000000e+00> : vector<8x384xf32>
      %153 = tpu.matmul %150, %152, %cst_91 {dimension_numbers = #tpu.dot_dimension_numbers<[1], [0], [0], [1], [0, 0, 1, 1], [], []>} : vector<8x128xbf16>, vector<128x384xbf16>, vector<8x384xf32> -> vector<8x384xf32>
      %c2_92 = arith.constant 2 : index
      %c0_93 = arith.constant 0 : index
      %c0_94 = arith.constant 0 : index
      %154 = vector.load %arg7[%c2_92, %c0_93, %c0_94] : memref<3x1x384xf32, #tpu.memory_space<vmem>>, vector<1x1x384xf32>
      %155 = vector.shape_cast %154 : vector<1x1x384xf32> to vector<1x384xf32>
      %156 = vector.broadcast %155 : vector<1x384xf32> to vector<8x384xf32>
      %157 = arith.addf %153, %156 : vector<8x384xf32>
      %158 = arith.truncf %149 : vector<8x128xf32> to vector<8x128xbf16>
      %c2_95 = arith.constant 2 : index
      %c0_96 = arith.constant 0 : index
      %c0_97 = arith.constant 0 : index
      %159 = vector.load %arg6[%c2_95, %c0_96, %c0_97] : memref<3x128x384xbf16, #tpu.memory_space<vmem>>, vector<1x128x384xbf16>
      %160 = vector.shape_cast %159 : vector<1x128x384xbf16> to vector<128x384xbf16>
      %cst_98 = arith.constant dense<0.000000e+00> : vector<8x384xf32>
      %161 = tpu.matmul %158, %160, %cst_98 {dimension_numbers = #tpu.dot_dimension_numbers<[1], [0], [0], [1], [0, 0, 1, 1], [], []>} : vector<8x128xbf16>, vector<128x384xbf16>, vector<8x384xf32> -> vector<8x384xf32>
      %c2_99 = arith.constant 2 : index
      %c0_100 = arith.constant 0 : index
      %c0_101 = arith.constant 0 : index
      %162 = vector.load %arg8[%c2_99, %c0_100, %c0_101] : memref<3x1x384xf32, #tpu.memory_space<vmem>>, vector<1x1x384xf32>
      %163 = vector.shape_cast %162 : vector<1x1x384xf32> to vector<1x384xf32>
      %164 = vector.broadcast %163 : vector<1x384xf32> to vector<8x384xf32>
      %165 = arith.addf %161, %164 : vector<8x384xf32>
      %166 = vector.extract_strided_slice %157 {offsets = [0, 0], sizes = [8, 128], strides = [1, 1]} : vector<8x384xf32> to vector<8x128xf32>
      %167 = vector.extract_strided_slice %165 {offsets = [0, 0], sizes = [8, 128], strides = [1, 1]} : vector<8x384xf32> to vector<8x128xf32>
      %168 = arith.addf %166, %167 : vector<8x128xf32>
      %169 = arith.negf %168 : vector<8x128xf32>
      %170 = math.exp %169 : vector<8x128xf32>
      %cst_102 = arith.constant 1.000000e+00 : f32
      %171 = vector.broadcast %cst_102 : f32 to vector<8x128xf32>
      %172 = arith.addf %171, %170 : vector<8x128xf32>
      %173 = arith.divf %171, %172 : vector<8x128xf32>
      %174 = vector.extract_strided_slice %157 {offsets = [0, 128], sizes = [8, 128], strides = [1, 1]} : vector<8x384xf32> to vector<8x128xf32>
      %175 = vector.extract_strided_slice %165 {offsets = [0, 128], sizes = [8, 128], strides = [1, 1]} : vector<8x384xf32> to vector<8x128xf32>
      %176 = arith.addf %174, %175 : vector<8x128xf32>
      %177 = arith.negf %176 : vector<8x128xf32>
      %178 = math.exp %177 : vector<8x128xf32>
      %cst_103 = arith.constant 1.000000e+00 : f32
      %179 = vector.broadcast %cst_103 : f32 to vector<8x128xf32>
      %180 = arith.addf %179, %178 : vector<8x128xf32>
      %181 = arith.divf %179, %180 : vector<8x128xf32>
      %182 = vector.extract_strided_slice %157 {offsets = [0, 256], sizes = [8, 128], strides = [1, 1]} : vector<8x384xf32> to vector<8x128xf32>
      %183 = vector.extract_strided_slice %165 {offsets = [0, 256], sizes = [8, 128], strides = [1, 1]} : vector<8x384xf32> to vector<8x128xf32>
      %184 = arith.mulf %173, %183 : vector<8x128xf32>
      %185 = arith.addf %182, %184 : vector<8x128xf32>
      %186 = math.tanh %185 : vector<8x128xf32>
      %cst_104 = arith.constant 1.000000e+00 : f32
      %187 = vector.broadcast %cst_104 : f32 to vector<8x128xf32>
      %188 = arith.subf %187, %181 : vector<8x128xf32>
      %189 = arith.mulf %188, %186 : vector<8x128xf32>
      %190 = arith.mulf %181, %149 : vector<8x128xf32>
      %191 = arith.addf %189, %190 : vector<8x128xf32>
      %c2_105 = arith.constant 2 : index
      %c0_106 = arith.constant 0 : index
      %c0_107 = arith.constant 0 : index
      %192 = vector.load %arg14[%c2_105, %c0_106, %c0_107] : memref<3x8x128xf32, #tpu.memory_space<vmem>>, vector<1x8x128xf32>
      %193 = vector.shape_cast %192 : vector<1x8x128xf32> to vector<8x128xf32>
      %194 = vector.shape_cast %191 : vector<8x128xf32> to vector<1x8x128xf32>
      tpu.vector_store %arg14[%c2_105, %c0_106, %c0_107], %194 {strides = array<i32>} : memref<3x8x128xf32, #tpu.memory_space<vmem>>, vector<1x8x128xf32>,
      %c0_108 = arith.constant 0 : index
      %c0_109 = arith.constant 0 : index
      %c0_110 = arith.constant 0 : index
      %195 = vector.load %arg4[%c0_108, %c0_109, %c0_110] : memref<8x8x128xbf16, #tpu.memory_space<vmem>>, vector<8x8x128xbf16>
      %196 = arith.extf %195 : vector<8x8x128xbf16> to vector<8x8x128xf32>
      %197 = arith.truncf %191 : vector<8x128xf32> to vector<8x128xbf16>
      %198 = arith.extf %197 : vector<8x128xbf16> to vector<8x128xf32>
      %199 = vector.shape_cast %198 : vector<8x128xf32> to vector<8x1x128xf32>
      %200 = vector.broadcast %199 : vector<8x1x128xf32> to vector<8x8x128xf32>
      %201 = arith.mulf %200, %196 : vector<8x8x128xf32>
      %cst_111 = arith.constant dense<0.000000e+00> : vector<8x8xf32>
      %202 = vector.multi_reduction <add>, %201, %cst_111 [2] : vector<8x8x128xf32> to vector<8x8xf32>
      %cst_112 = arith.constant dense<0xFF800000> : vector<8xf32>
      %203 = vector.multi_reduction <maximumf>, %202, %cst_112 [1] : vector<8x8xf32> to vector<8xf32>
      %204 = vector.shape_cast %203 : vector<8xf32> to vector<8x1xf32>
      %205 = vector.broadcast %204 : vector<8x1xf32> to vector<8x8xf32>
      %206 = arith.subf %202, %205 : vector<8x8xf32>
      %207 = math.exp %206 : vector<8x8xf32>
      %cst_113 = arith.constant dense<0.000000e+00> : vector<8xf32>
      %208 = vector.multi_reduction <add>, %207, %cst_113 [1] : vector<8x8xf32> to vector<8xf32>
      %209 = vector.shape_cast %208 : vector<8xf32> to vector<8x1xf32>
      %210 = vector.broadcast %209 : vector<8x1xf32> to vector<8x8xf32>
      %211 = arith.divf %207, %210 : vector<8x8xf32>
      %212 = arith.truncf %211 : vector<8x8xf32> to vector<8x8xbf16>
      %213 = arith.extf %212 : vector<8x8xbf16> to vector<8x8xf32>
      %214 = vector.shape_cast %213 : vector<8x8xf32> to vector<8x8x1xf32>
      %215 = vector.broadcast %214 : vector<8x8x1xf32> to vector<8x8x128xf32>
      %216 = arith.mulf %215, %196 : vector<8x8x128xf32>
      %cst_114 = arith.constant dense<0.000000e+00> : vector<8x128xf32>
      %217 = vector.multi_reduction <add>, %216, %cst_114 [1] : vector<8x8x128xf32> to vector<8x128xf32>
      %218 = arith.truncf %191 : vector<8x128xf32> to vector<8x128xbf16>
      %219 = arith.truncf %217 : vector<8x128xf32> to vector<8x128xbf16>
      %220 = tpu.concatenate %218, %219 in 1 : vector<8x128xbf16>, vector<8x128xbf16> -> vector<8x256xbf16>
      %c0_115 = arith.constant 0 : index
      %c0_116 = arith.constant 0 : index
      %221 = vector.load %arg9[%c0_115, %c0_116] : memref<256x128xbf16, #tpu.memory_space<vmem>>, vector<256x128xbf16>
      %cst_117 = arith.constant dense<0.000000e+00> : vector<8x128xf32>
      %222 = tpu.matmul %220, %221, %cst_117 {dimension_numbers = #tpu.dot_dimension_numbers<[1], [0], [0], [1], [0, 0, 1, 1], [], []>} : vector<8x256xbf16>, vector<256x128xbf16>, vector<8x128xf32> -> vector<8x128xf32>
      %c0_118 = arith.constant 0 : index
      %c0_119 = arith.constant 0 : index
      %223 = vector.load %arg10[%c0_118, %c0_119] : memref<1x128xf32, #tpu.memory_space<vmem>>, vector<1x128xf32>
      %224 = vector.broadcast %223 : vector<1x128xf32> to vector<8x128xf32>
      %225 = arith.addf %222, %224 : vector<8x128xf32>
      %226 = math.tanh %225 : vector<8x128xf32>
      %c0_120 = arith.constant 0 : index
      %c0_121 = arith.constant 0 : index
      %227 = vector.load %arg16[%c0_120, %c0_121] : memref<8x128xf32, #tpu.memory_space<vmem>>, vector<8x128xf32>
      tpu.vector_store %arg16[%c0_120, %c0_121], %226 {strides = array<i32>} : memref<8x128xf32, #tpu.memory_space<vmem>>, vector<8x128xf32>,
      %cst_122 = arith.constant 0xFF800000 : f32
      %228 = vector.broadcast %cst_122 : f32 to vector<8x1xf32>
      %c0_123 = arith.constant 0 : index
      %c0_124 = arith.constant 0 : index
      %229 = vector.load %arg17[%c0_123, %c0_124] : memref<8x1xf32, #tpu.memory_space<vmem>>, vector<8x1xf32>
      tpu.vector_store %arg17[%c0_123, %c0_124], %228 {strides = array<i32>} : memref<8x1xf32, #tpu.memory_space<vmem>>, vector<8x1xf32>,
      %cst_125 = arith.constant 0.000000e+00 : f32
      %230 = vector.broadcast %cst_125 : f32 to vector<8x1xf32>
      %c0_126 = arith.constant 0 : index
      %c0_127 = arith.constant 0 : index
      %231 = vector.load %arg18[%c0_126, %c0_127] : memref<8x1xf32, #tpu.memory_space<vmem>>, vector<8x1xf32>
      tpu.vector_store %arg18[%c0_126, %c0_127], %230 {strides = array<i32>} : memref<8x1xf32, #tpu.memory_space<vmem>>, vector<8x1xf32>,
    } else {
    }
    %c0 = arith.constant 0 : index
    %c0_1 = arith.constant 0 : index
    %3 = vector.load %arg16[%c0, %c0_1] : memref<8x128xf32, #tpu.memory_space<vmem>>, vector<8x128xf32>
    %4 = arith.truncf %3 : vector<8x128xf32> to vector<8x128xbf16>
    %c0_2 = arith.constant 0 : index
    %c0_3 = arith.constant 0 : index
    %5 = vector.load %arg11[%c0_2, %c0_3] : memref<128x128xbf16, #tpu.memory_space<vmem>>, vector<128x128xbf16>
    %cst = arith.constant dense<0.000000e+00> : vector<8x128xf32>
    %6 = tpu.matmul %4, %5, %cst {dimension_numbers = #tpu.dot_dimension_numbers<[1], [0], [0], [1], [0, 0, 1, 1], [], []>} : vector<8x128xbf16>, vector<128x128xbf16>, vector<8x128xf32> -> vector<8x128xf32>
    %c0_4 = arith.constant 0 : index
    %c0_5 = arith.constant 0 : index
    %7 = vector.load %arg12[%c0_4, %c0_5] : memref<1x128xf32, #tpu.memory_space<vmem>>, vector<1x128xf32>
    %8 = vector.broadcast %7 : vector<1x128xf32> to vector<8x128xf32>
    %9 = arith.addf %6, %8 : vector<8x128xf32>
    %c0_6 = arith.constant 0 : index
    %c0_7 = arith.constant 0 : index
    %10 = vector.load %arg17[%c0_6, %c0_7] : memref<8x1xf32, #tpu.memory_space<vmem>>, vector<8x1xf32>
    %cst_8 = arith.constant dense<0xFF800000> : vector<8xf32>
    %11 = vector.multi_reduction <maximumf>, %9, %cst_8 [1] : vector<8x128xf32> to vector<8xf32>
    %12 = vector.shape_cast %11 : vector<8xf32> to vector<8x1xf32>
    %13 = arith.maximumf %10, %12 : vector<8x1xf32>
    %c0_9 = arith.constant 0 : index
    %c0_10 = arith.constant 0 : index
    %14 = vector.load %arg18[%c0_9, %c0_10] : memref<8x1xf32, #tpu.memory_space<vmem>>, vector<8x1xf32>
    %15 = arith.subf %10, %13 : vector<8x1xf32>
    %16 = math.exp %15 : vector<8x1xf32>
    %17 = arith.mulf %14, %16 : vector<8x1xf32>
    %18 = vector.broadcast %13 : vector<8x1xf32> to vector<8x128xf32>
    %19 = arith.subf %9, %18 : vector<8x128xf32>
    %20 = math.exp %19 : vector<8x128xf32>
    %cst_11 = arith.constant dense<0.000000e+00> : vector<8xf32>
    %21 = vector.multi_reduction <add>, %20, %cst_11 [1] : vector<8x128xf32> to vector<8xf32>
    %22 = vector.shape_cast %21 : vector<8xf32> to vector<8x1xf32>
    %23 = arith.addf %17, %22 : vector<8x1xf32>
    %c0_12 = arith.constant 0 : index
    %c0_13 = arith.constant 0 : index
    %24 = vector.load %arg18[%c0_12, %c0_13] : memref<8x1xf32, #tpu.memory_space<vmem>>, vector<8x1xf32>
    tpu.vector_store %arg18[%c0_12, %c0_13], %23 {strides = array<i32>} : memref<8x1xf32, #tpu.memory_space<vmem>>, vector<8x1xf32>,
    %c0_14 = arith.constant 0 : index
    %c0_15 = arith.constant 0 : index
    %25 = vector.load %arg17[%c0_14, %c0_15] : memref<8x1xf32, #tpu.memory_space<vmem>>, vector<8x1xf32>
    tpu.vector_store %arg17[%c0_14, %c0_15], %13 {strides = array<i32>} : memref<8x1xf32, #tpu.memory_space<vmem>>, vector<8x1xf32>,
    %c128_i32 = arith.constant 128 : i32
    %26 = arith.muli %arg0, %c128_i32 : i32
    %27 = tpu.assume_multiple %26, 128 : i32
    %c0_16 = arith.constant 0 : index
    %28 = arith.index_cast %27 : i32 to index
    %29 = vector.load %arg13[%c0_16, %28] : memref<8x128xf32, #tpu.memory_space<vmem>>, vector<8x128xf32>
    tpu.vector_store %arg13[%c0_16, %28], %9 {strides = array<i32>} : memref<8x128xf32, #tpu.memory_space<vmem>>, vector<8x128xf32>,
    %c0_i32_17 = arith.constant 0 : i32
    %30 = arith.cmpi eq, %arg0, %c0_i32_17 : i32
    %31 = arith.extui %30 : i1 to i32
    %c0_i32_18 = arith.constant 0 : i32
    %32 = arith.cmpi ne, %31, %c0_i32_18 : i32
    scf.if %32 {
      %c0_19 = arith.constant 0 : index
      %c0_20 = arith.constant 0 : index
      %33 = vector.load %arg13[%c0_19, %c0_20] : memref<8x128xf32, #tpu.memory_space<vmem>>, vector<8x128xf32>
      %c0_21 = arith.constant 0 : index
      %c0_22 = arith.constant 0 : index
      %34 = vector.load %arg17[%c0_21, %c0_22] : memref<8x1xf32, #tpu.memory_space<vmem>>, vector<8x1xf32>
      %35 = vector.broadcast %34 : vector<8x1xf32> to vector<8x128xf32>
      %36 = arith.subf %33, %35 : vector<8x128xf32>
      %37 = math.exp %36 : vector<8x128xf32>
      %c0_23 = arith.constant 0 : index
      %c0_24 = arith.constant 0 : index
      %38 = vector.load %arg18[%c0_23, %c0_24] : memref<8x1xf32, #tpu.memory_space<vmem>>, vector<8x1xf32>
      %39 = vector.broadcast %38 : vector<8x1xf32> to vector<8x128xf32>
      %40 = arith.divf %37, %39 : vector<8x128xf32>
      %c0_25 = arith.constant 0 : index
      %c0_26 = arith.constant 0 : index
      %41 = vector.load %arg13[%c0_25, %c0_26] : memref<8x128xf32, #tpu.memory_space<vmem>>, vector<8x128xf32>
      tpu.vector_store %arg13[%c0_25, %c0_26], %40 {strides = array<i32>} : memref<8x128xf32, #tpu.memory_space<vmem>>, vector<8x128xf32>,
    } else {
    }
    return
  }
  func.func @transform_1(%arg0: i32, %arg1: memref<2xi32, #tpu.memory_space<smem>>) -> (i32, i32, i32) {
    %c0_i32 = arith.constant 0 : i32
    %c0_i32_0 = arith.constant 0 : i32
    %c0_i32_1 = arith.constant 0 : i32
    %c0_i32_2 = arith.constant 0 : i32
    return %c0_i32, %c0_i32_0, %c0_i32_1 : i32, i32, i32
  }
  func.func @transform_2(%arg0: i32, %arg1: memref<2xi32, #tpu.memory_space<smem>>) -> (i32, i32, i32) {
    %c0_i32 = arith.constant 0 : i32
    %c0_i32_0 = arith.constant 0 : i32
    %c0_i32_1 = arith.constant 0 : i32
    %c0_i32_2 = arith.constant 0 : i32
    return %c0_i32, %c0_i32_0, %c0_i32_1 : i32, i32, i32
  }
  func.func @transform_3(%arg0: i32, %arg1: memref<2xi32, #tpu.memory_space<smem>>) -> (i32, i32, i32) {
    %c0_i32 = arith.constant 0 : i32
    %c0_i32_0 = arith.constant 0 : i32
    %c0_i32_1 = arith.constant 0 : i32
    %c0_i32_2 = arith.constant 0 : i32
    return %c0_i32, %c0_i32_0, %c0_i32_1 : i32, i32, i32
  }
  func.func @transform_4(%arg0: i32, %arg1: memref<2xi32, #tpu.memory_space<smem>>) -> (i32, i32, i32) {
    %c0_i32 = arith.constant 0 : i32
    %c0_i32_0 = arith.constant 0 : i32
    %c0_i32_1 = arith.constant 0 : i32
    %c0_i32_2 = arith.constant 0 : i32
    return %c0_i32, %c0_i32_0, %c0_i32_1 : i32, i32, i32
  }
  func.func @transform_5(%arg0: i32, %arg1: memref<2xi32, #tpu.memory_space<smem>>) -> (i32, i32, i32) {
    %c0_i32 = arith.constant 0 : i32
    %c0_i32_0 = arith.constant 0 : i32
    %c0_i32_1 = arith.constant 0 : i32
    %c0_i32_2 = arith.constant 0 : i32
    return %c0_i32, %c0_i32_0, %c0_i32_1 : i32, i32, i32
  }
  func.func @transform_6(%arg0: i32, %arg1: memref<2xi32, #tpu.memory_space<smem>>) -> (i32, i32, i32) {
    %c0_i32 = arith.constant 0 : i32
    %c0_i32_0 = arith.constant 0 : i32
    %c0_i32_1 = arith.constant 0 : i32
    %c0_i32_2 = arith.constant 0 : i32
    return %c0_i32, %c0_i32_0, %c0_i32_1 : i32, i32, i32
  }
  func.func @transform_7(%arg0: i32, %arg1: memref<2xi32, #tpu.memory_space<smem>>) -> (i32, i32) {
    %c0_i32 = arith.constant 0 : i32
    %c0_i32_0 = arith.constant 0 : i32
    %c0_i32_1 = arith.constant 0 : i32
    return %c0_i32, %c0_i32_0 : i32, i32
  }
  func.func @transform_8(%arg0: i32, %arg1: memref<2xi32, #tpu.memory_space<smem>>) -> (i32, i32) {
    %c0_i32 = arith.constant 0 : i32
    %c0_i32_0 = arith.constant 0 : i32
    %c0_i32_1 = arith.constant 0 : i32
    return %c0_i32, %c0_i32_0 : i32, i32
  }
  func.func @transform_9(%arg0: i32, %arg1: memref<2xi32, #tpu.memory_space<smem>>) -> (i32, i32) {
    %c0_i32 = arith.constant 0 : i32
    %c0_i32_0 = arith.constant 0 : i32
    return %c0_i32, %arg0 : i32, i32
  }
  func.func @transform_10(%arg0: i32, %arg1: memref<2xi32, #tpu.memory_space<smem>>) -> (i32, i32) {
    %c0_i32 = arith.constant 0 : i32
    %c0_i32_0 = arith.constant 0 : i32
    return %c0_i32, %arg0 : i32, i32
  }
  func.func @transform_11(%arg0: i32, %arg1: memref<2xi32, #tpu.memory_space<smem>>) -> (i32, i32) {
    %c0_i32 = arith.constant 0 : i32
    %c0_i32_0 = arith.constant 0 : i32
    %c0_i32_1 = arith.constant 0 : i32
    return %c0_i32, %c0_i32_0 : i32, i32
  }
  func.func @transform_12(%arg0: i32, %arg1: memref<2xi32, #tpu.memory_space<smem>>) -> (i32, i32, i32) {
    %c0_i32 = arith.constant 0 : i32
    %c0_i32_0 = arith.constant 0 : i32
    %c0_i32_1 = arith.constant 0 : i32
    %c0_i32_2 = arith.constant 0 : i32
    return %c0_i32, %c0_i32_0, %c0_i32_1 : i32, i32, i32
  }
}

</mosaic_0001>

<llo_original>
// kernel: attn_decoder_forward.1
$region0: #{attn_decoder_forward.1}
  #allocation0 [shape = 'u32[]', space=smem, size = 0x4, offset = 0x4, fixed_abs, tag = 'smem constant byte address 0x4 - core index']
  #allocation1 [shape = 'u32[144,128]{1,0:T(1,128)}', space=vmem, size = 0x12000, scoped, tag = 'internal scratch']
  #allocation2 [shape = 'f32[8,128]{1,0:T(8,128)}', space=vmem, size = 0x1000, scoped, tag = 'scratch operand']
  #allocation3 [shape = 'f32[8,128]{1,0:T(8,128)}', space=vmem, size = 0x1000, scoped, tag = 'scratch operand']
  #allocation4 [shape = 'f32[8,1]{1,0:T(8,128)}', space=vmem, size = 0x1000, scoped, tag = 'scratch operand']
  #allocation5 [shape = 'f32[8,1]{1,0:T(8,128)}', space=vmem, size = 0x1000, scoped, tag = 'scratch operand']
  #allocation6 [shape = 's32[2]{0}', space=sflag, size = 0x8, scoped, tag = 'scratch operand']
  #allocation7 [shape = 's32[1]{0}', space=sflag, size = 0x4, scoped, tag = 'scoped memory for attn_decoder_forward.1']
  #allocation8 [shape = 'u8[512]{0}', space=smem, size = 0x200, scoped, tag = 'prefetched SMEM operand 0']
  #allocation17 [shape = 's32[]', space=sflag, size = 0x4, offset = 0, fixed_abs, tag = 'sflag constant byte address 0x0 - dummy sync flag']
  #allocation18 [shape = 's32[]', space=sflag, size = 0x4, offset = 0, fixed_abs, tag = 'sflag constant byte address 0x0 - dummy sync flag']
  #allocation19 [shape = 'u32[]', space=smem, size = 0x4, offset = 0x44, fixed_abs, tag = 'smem constant byte address 0x44 - assertion arg 0']
  #allocation20 [shape = 'u32[]', space=smem, size = 0x4, offset = 0x48, fixed_abs, tag = 'smem constant byte address 0x48 - assertion arg 1']
  #allocation21 [shape = 's32[]', space=sflag, size = 0x4, offset = 0, fixed_abs, tag = 'sflag constant byte address 0x0 - dummy sync flag']
  #allocation22 [shape = 's32[]', space=sflag, size = 0x4, offset = 0, fixed_abs, tag = 'sflag constant byte address 0x0 - dummy sync flag']
  %s0 = inlined_call_operand.vmem [shape: s32[2], index: 0, kind: input, shape index: {}]
  %s1 = inlined_call_operand.hbm [shape: f32[64,128], index: 1, kind: input, shape index: {}]
  %s2 = inlined_call_operand.vmem [shape: f32[3,8,128], index: 2, kind: input, shape index: {}, may-alias: {2,13}]
  %s3 = inlined_call_operand.vmem [shape: bf16[8,8,128], index: 3, kind: input, shape index: {}]
  %s4 = inlined_call_operand.hbm [shape: bf16[3,128,384], index: 4, kind: input, shape index: {}]
  %s5 = inlined_call_operand.hbm [shape: bf16[3,128,384], index: 5, kind: input, shape index: {}]
  %s6 = inlined_call_operand.hbm [shape: f32[3,1,384], index: 6, kind: input, shape index: {}]
  %s7 = inlined_call_operand.hbm [shape: f32[3,1,384], index: 7, kind: input, shape index: {}]
  %s8 = inlined_call_operand.vmem [shape: bf16[256,128], index: 8, kind: input, shape index: {}]
  %s9 = inlined_call_operand.vmem [shape: f32[1,128], index: 9, kind: input, shape index: {}]
  %s10 = inlined_call_operand.hbm [shape: bf16[128,128], index: 10, kind: input, shape index: {}]
  %s11 = inlined_call_operand.vmem [shape: f32[1,128], index: 11, kind: input, shape index: {}]
  %s12 = inlined_call_operand.vmem [shape: f32[8,128], index: 12, kind: output, shape index: {0}]
  %s13 = inlined_call_operand.vmem [shape: f32[3,8,128], index: 13, kind: output, shape index: {1}, may-alias: {2,13}]
  %14 = xla_tuple %s12, %s13
  %s15 = sld [smem:[#allocation0]]
  $region94: #{attn_decoder_forward.1} parent=0
    _
  %s17 = ssub.s32 1, %s15
  %s18 = scalar_select 0, %s17, %s15
  %s19 = sshll.u32 %s0, 4
  %s20 = int_to_ptr.vmem [resolvable:$true] %s19
  %22 = dma.vmem_to_smem %s20, 16, [#allocation8], [#allocation7]
  %23 = dma.done [#allocation7], 16
  %24 = sfence
  $region1: #{attn_decoder_forward.1} parent=0
    #allocation9 [shape = 'u8[294912]{0}', space=vmem, size = 0x48000, scoped, tag = 'input window, operand 4, single buffered']
    #allocation10 [shape = 's32[1]{0}', space=sflag, size = 0x4, scoped, tag = 'scoped memory for attn_decoder_forward.1']
    #allocation11 [shape = 'u8[294912]{0}', space=vmem, size = 0x48000, scoped, tag = 'input window, operand 5, single buffered']
    #allocation12 [shape = 's32[1]{0}', space=sflag, size = 0x4, scoped, tag = 'scoped memory for attn_decoder_forward.1']
    #allocation13 [shape = 'u8[4608]{0}', space=vmem, size = 0x1400, scoped, tag = 'input window, operand 6, single buffered']
    #allocation14 [shape = 'u8[4608]{0}', space=vmem, size = 0x1400, scoped, tag = 'input window, operand 7, single buffered']
    #allocation15 [shape = 's32[1]{0}', space=sflag, size = 0x4, scoped, tag = 'scoped memory for attn_decoder_forward.1']
    #allocation16 [shape = 'u8[32768]{0}', space=vmem, size = 0x8000, scoped, tag = 'input window, operand 10, single buffered']
    %25 = vsyncpa [#allocation10], 0
    %26 = vsyncpa [#allocation12], 0
    %27 = vsyncpa [#allocation15], 0
    // Predicated region
    $region2: #{attn_decoder_forward.1} parent=1 // pred_check
      _
    $region3: #{attn_decoder_forward.1} parent=1 // pred_check_branch
      %29 = sbr.rel (0) target = $region5
    $region4: #{attn_decoder_forward.1} parent=1 // pred_region
      _
    $region5: #{attn_decoder_forward.1} parent=1 // pred_fallthru
      _
    // Predicated region
    $region6: #{attn_decoder_forward.1} parent=1 // pred_check
      _
    $region7: #{attn_decoder_forward.1} parent=1 // pred_check_branch
      %31 = sbr.rel (0) target = $region9
    $region8: #{attn_decoder_forward.1} parent=1 // pred_region
      _
    $region9: #{attn_decoder_forward.1} parent=1 // pred_fallthru
      _
    // Predicated region
    $region10: #{attn_decoder_forward.1} parent=1 // pred_check
      _
    $region11: #{attn_decoder_forward.1} parent=1 // pred_check_branch
      %33 = sbr.rel (0) target = $region13
    $region12: #{attn_decoder_forward.1} parent=1 // pred_region
      %s35 = ssub.s32 9216, 9216
      %36 = vsyncadd [#allocation10], %s35
      %s37 = sshll.u32 [#allocation9], 4
      %s38 = int_to_ptr.vmem [resolvable:$true] %s37
      %43 = dma.hbm_to_vmem [thread:$0]  %s4, 9216, %s38, [#allocation10], 192, 192, 12
    $region13: #{attn_decoder_forward.1} parent=1 // pred_fallthru
      _
    // Predicated region
    $region14: #{attn_decoder_forward.1} parent=1 // pred_check
      _
    $region15: #{attn_decoder_forward.1} parent=1 // pred_check_branch
      %45 = sbr.rel (0) target = $region17
    $region16: #{attn_decoder_forward.1} parent=1 // pred_region
      %s47 = ssub.s32 9216, 9216
      %48 = vsyncadd [#allocation12], %s47
      %s49 = sshll.u32 [#allocation11], 4
      %s50 = int_to_ptr.vmem [resolvable:$true] %s49
      %55 = dma.hbm_to_vmem [thread:$0]  %s5, 9216, %s50, [#allocation12], 192, 192, 12
    $region17: #{attn_decoder_forward.1} parent=1 // pred_fallthru
      _
    // Predicated region
    $region18: #{attn_decoder_forward.1} parent=1 // pred_check
      _
    $region19: #{attn_decoder_forward.1} parent=1 // pred_check_branch
      %57 = sbr.rel (0) target = $region21
    $region20: #{attn_decoder_forward.1} parent=1 // pred_region
      %s59 = ssub.s32 144, 144
      %60 = vsyncadd [#allocation12], %s59
      %s61 = sshll.u32 [#allocation13], 4
      %s62 = int_to_ptr.vmem [resolvable:$true] %s61
      %67 = dma.hbm_to_vmem [thread:$0]  %s6, 144, %s62, [#allocation12], 48, 48, 3
    $region21: #{attn_decoder_forward.1} parent=1 // pred_fallthru
      _
    // Predicated region
    $region22: #{attn_decoder_forward.1} parent=1 // pred_check
      _
    $region23: #{attn_decoder_forward.1} parent=1 // pred_check_branch
      %69 = sbr.rel (0) target = $region25
    $region24: #{attn_decoder_forward.1} parent=1 // pred_region
      %s71 = ssub.s32 144, 144
      %72 = vsyncadd [#allocation15], %s71
      %s73 = sshll.u32 [#allocation14], 4
      %s74 = int_to_ptr.vmem [resolvable:$true] %s73
      %79 = dma.hbm_to_vmem [thread:$0]  %s7, 144, %s74, [#allocation15], 48, 48, 3
    $region25: #{attn_decoder_forward.1} parent=1 // pred_fallthru
      _
    // Predicated region
    $region26: #{attn_decoder_forward.1} parent=1 // pred_check
      _
    $region27: #{attn_decoder_forward.1} parent=1 // pred_check_branch
      %81 = sbr.rel (0) target = $region29
    $region28: #{attn_decoder_forward.1} parent=1 // pred_region
      _
    $region29: #{attn_decoder_forward.1} parent=1 // pred_fallthru
      _
    // Predicated region
    $region30: #{attn_decoder_forward.1} parent=1 // pred_check
      _
    $region31: #{attn_decoder_forward.1} parent=1 // pred_check_branch
      %83 = sbr.rel (0) target = $region33
    $region32: #{attn_decoder_forward.1} parent=1 // pred_region
      _
    $region33: #{attn_decoder_forward.1} parent=1 // pred_fallthru
      _
    // Predicated region
    $region34: #{attn_decoder_forward.1} parent=1 // pred_check
      _
    $region35: #{attn_decoder_forward.1} parent=1 // pred_check_branch
      %85 = sbr.rel (0) target = $region37
    $region36: #{attn_decoder_forward.1} parent=1 // pred_region
      %s87 = ssub.s32 1024, 1024
      %88 = vsyncadd [#allocation15], %s87
      %s89 = sshll.u32 [#allocation16], 4
      %s90 = int_to_ptr.vmem [resolvable:$true] %s89
      %95 = dma.hbm_to_vmem [thread:$0]  %s10, 1024, %s90, [#allocation15], 64, 64, 4
    $region37: #{attn_decoder_forward.1} parent=1 // pred_fallthru
      _
    // Predicated region
    $region38: #{attn_decoder_forward.1} parent=1 // pred_check
      _
    $region39: #{attn_decoder_forward.1} parent=1 // pred_check_branch
      %97 = sbr.rel (0) target = $region41
    $region40: #{attn_decoder_forward.1} parent=1 // pred_region
      _
    $region41: #{attn_decoder_forward.1} parent=1 // pred_fallthru
      _
    // Predicated region
    $region42: #{attn_decoder_forward.1} parent=1 // pred_check
      _
    $region43: #{attn_decoder_forward.1} parent=1 // pred_check_branch
      %99 = sbr.rel (0) target = $region45
    $region44: #{attn_decoder_forward.1} parent=1 // pred_region
      %100 = dma.done [#allocation10], 9216
    $region45: #{attn_decoder_forward.1} parent=1 // pred_fallthru
      _
    // Predicated region
    $region46: #{attn_decoder_forward.1} parent=1 // pred_check
      _
    $region47: #{attn_decoder_forward.1} parent=1 // pred_check_branch
      %102 = sbr.rel (0) target = $region49
    $region48: #{attn_decoder_forward.1} parent=1 // pred_region
      %103 = dma.done [#allocation12], 9216
    $region49: #{attn_decoder_forward.1} parent=1 // pred_fallthru
      _
    // Predicated region
    $region50: #{attn_decoder_forward.1} parent=1 // pred_check
      _
    $region51: #{attn_decoder_forward.1} parent=1 // pred_check_branch
      %105 = sbr.rel (0) target = $region53
    $region52: #{attn_decoder_forward.1} parent=1 // pred_region
      %106 = dma.done [#allocation12], 144
    $region53: #{attn_decoder_forward.1} parent=1 // pred_fallthru
      _
    // Predicated region
    $region54: #{attn_decoder_forward.1} parent=1 // pred_check
      _
    $region55: #{attn_decoder_forward.1} parent=1 // pred_check_branch
      %108 = sbr.rel (0) target = $region57
    $region56: #{attn_decoder_forward.1} parent=1 // pred_region
      %109 = dma.done [#allocation15], 144
    $region57: #{attn_decoder_forward.1} parent=1 // pred_fallthru
      _
    // Predicated region
    $region58: #{attn_decoder_forward.1} parent=1 // pred_check
      _
    $region59: #{attn_decoder_forward.1} parent=1 // pred_check_branch
      %111 = sbr.rel (0) target = $region61
    $region60: #{attn_decoder_forward.1} parent=1 // pred_region
      %112 = dma.done [#allocation15], 1024
    $region61: #{attn_decoder_forward.1} parent=1 // pred_fallthru
      _
    %p114 = scmp.eq.s32.totalorder 0, 0
    // Predicated region
    $region62: #{attn_decoder_forward.1} parent=1 // pred_check
      %p115 = pneg %p114
    $region63: #{attn_decoder_forward.1} parent=1 // pred_check_branch
      %117 = sbr.rel (%p115) target = $region65
    $region64: #{attn_decoder_forward.1} parent=1 // pred_region
      %s118 = sld [smem:[#allocation8]]
      %s119 = smul.addr %s118, 16
      %s120 = scalar_lea.hbm %s1, %s119
      // Predicated region
      $region66: #{attn_decoder_forward.1} parent=64 // pred_check
        _
      $region67: #{attn_decoder_forward.1} parent=64 // pred_check_branch
        %122 = sbr.rel target = $region69
      $region68: #{attn_decoder_forward.1} parent=64 // pred_region
        %123 = sst [smem:[#allocation19]] [#allocation18]
        %124 = sst [smem:[#allocation20]] [#allocation17]
      $region69: #{attn_decoder_forward.1} parent=64 // pred_fallthru
        _
      %126 = shalt.err (0)
      %s128 = sshll.u32 [#allocation2], 4
      %s129 = int_to_ptr.vmem [resolvable:$true] %s128
      %131 = dma.hbm_to_vmem [thread:$0]  %s120, 16, %s129, [#allocation6]
      %s132 = sld [smem:[#allocation8 + $0x1]]
      %s133 = smul.addr %s132, 16
      %s134 = scalar_lea.hbm %s1, %s133
      %s135 = scalar_lea.vmem [#allocation2], 1
      %s136 = scalar_lea.sflag [#allocation6], 1
      // Predicated region
      $region70: #{attn_decoder_forward.1} parent=64 // pred_check
        _
      $region71: #{attn_decoder_forward.1} parent=64 // pred_check_branch
        %138 = sbr.rel target = $region73
      $region72: #{attn_decoder_forward.1} parent=64 // pred_region
        %139 = sst [smem:[#allocation19]] [#allocation22]
        %140 = sst [smem:[#allocation20]] [#allocation21]
      $region73: #{attn_decoder_forward.1} parent=64 // pred_fallthru
        _
      %142 = shalt.err (0)
      %s144 = sshll.u32 %s135, 4
      %s145 = int_to_ptr.vmem [resolvable:$true] %s144
      %147 = dma.hbm_to_vmem [thread:$0]  %s134, 16, %s145, %s136
      %s148 = smul.u32 1, 1
      %s149 = sshll.u32 %s148, 4
      %150 = dma.done [#allocation6], %s149
      %s151 = sshll.u32 %s148, 4
      %152 = dma.done %s136, %s151
      %153 = vst [vmem:[#allocation2 + $0x2] sm:$0x3f] 0.0
      %v154 = vld [vmem:[#allocation2] sm:$0xff]
      %v155 = vld [vmem:[%s2] sm:$0xff]
      %v156 = vpack.c.bf16 %v154, %v154
      %v157 = vld [vmem:[#allocation9] sm:$0xff]
      %v158 = vld [vmem:[#allocation9 + $0x8] sm:$0xf]
      %v159 = vld [vmem:[#allocation9 + $0xc] sm:$0xff]
      %v160 = vld [vmem:[#allocation9 + $0x14] sm:$0xf]
      %v161 = vld [vmem:[#allocation9 + $0x18] sm:$0xff]
      %v162 = vld [vmem:[#allocation9 + $0x20] sm:$0xf]
      %v163 = vld [vmem:[#allocation9 + $0x24] sm:$0xff]
      %v164 = vld [vmem:[#allocation9 + $0x2c] sm:$0xf]
      %v165 = vld [vmem:[#allocation9 + $0x30] sm:$0xff]
      %v166 = vld [vmem:[#allocation9 + $0x38] sm:$0xf]
      %v167 = vld [vmem:[#allocation9 + $0x3c] sm:$0xff]
      %v168 = vld [vmem:[#allocation9 + $0x44] sm:$0xf]
      %v169 = vld [vmem:[#allocation9 + $0x48] sm:$0xff]
      %v170 = vld [vmem:[#allocation9 + $0x50] sm:$0xf]
      %v171 = vld [vmem:[#allocation9 + $0x54] sm:$0xff]
      %v172 = vld [vmem:[#allocation9 + $0x5c] sm:$0xf]
      %v173 = vld [vmem:[#allocation9 + $0x60] sm:$0xff]
      %v174 = vld [vmem:[#allocation9 + $0x68] sm:$0xf]
      %v175 = vld [vmem:[#allocation9 + $0x6c] sm:$0xff]
      %v176 = vld [vmem:[#allocation9 + $0x74] sm:$0xf]
      %v177 = vld [vmem:[#allocation9 + $0x78] sm:$0xff]
      %v178 = vld [vmem:[#allocation9 + $0x80] sm:$0xf]
      %v179 = vld [vmem:[#allocation9 + $0x84] sm:$0xff]
      %v180 = vld [vmem:[#allocation9 + $0x8c] sm:$0xf]
      %v181 = vld [vmem:[#allocation9 + $0x90] sm:$0xff]
      %v182 = vld [vmem:[#allocation9 + $0x98] sm:$0xf]
      %v183 = vld [vmem:[#allocation9 + $0x9c] sm:$0xff]
      %v184 = vld [vmem:[#allocation9 + $0xa4] sm:$0xf]
      %v185 = vld [vmem:[#allocation9 + $0xa8] sm:$0xff]
      %v186 = vld [vmem:[#allocation9 + $0xb0] sm:$0xf]
      %v187 = vld [vmem:[#allocation9 + $0xb4] sm:$0xff]
      %v188 = vld [vmem:[#allocation9 + $0xbc] sm:$0xf]
      %v189 = vld [vmem:[#allocation13] sm:$0x7]
      %v191 = vlaneseq
      %v192 = vshrl.u32 %v191, 7
      %v193 = vsub.s32 0, %v192
      %v194 = vrot.slane %v189, %v193
      %v195 = vlaneseq
      %v196 = vshrl.u32 %v195, 7
      %v197 = vsub.s32 1, %v196
      %v198 = vrot.slane %v189, %v197
      %v199 = vlaneseq
      %v200 = vshrl.u32 %v199, 7
      %v201 = vsub.s32 2, %v200
      %v202 = vrot.slane %v189, %v201
      %v238 = vunpack.c.l.b16 %v157
      %v239 = vunpack.c.h.b16 %v157
      %v240 = vunpack.c.l.b16 %v158
      %v241 = vunpack.c.l.b16 %v159
      %v242 = vunpack.c.h.b16 %v159
      %v243 = vunpack.c.l.b16 %v160
      %v244 = vunpack.c.l.b16 %v161
      %v245 = vunpack.c.h.b16 %v161
      %v246 = vunpack.c.l.b16 %v162
      %v247 = vunpack.c.l.b16 %v163
      %v248 = vunpack.c.h.b16 %v163
      %v249 = vunpack.c.l.b16 %v164
      %v250 = vunpack.c.l.b16 %v165
      %v251 = vunpack.c.h.b16 %v165
      %v252 = vunpack.c.l.b16 %v166
      %v253 = vunpack.c.l.b16 %v167
      %v254 = vunpack.c.h.b16 %v167
      %v255 = vunpack.c.l.b16 %v168
      %v256 = vunpack.c.l.b16 %v169
      %v257 = vunpack.c.h.b16 %v169
      %v258 = vunpack.c.l.b16 %v170
      %v259 = vunpack.c.l.b16 %v171
      %v260 = vunpack.c.h.b16 %v171
      %v261 = vunpack.c.l.b16 %v172
      %v262 = vunpack.c.l.b16 %v173
      %v263 = vunpack.c.h.b16 %v173
      %v264 = vunpack.c.l.b16 %v174
      %v265 = vunpack.c.l.b16 %v175
      %v266 = vunpack.c.h.b16 %v175
      %v267 = vunpack.c.l.b16 %v176
      %v268 = vunpack.c.l.b16 %v177
      %v269 = vunpack.c.h.b16 %v177
      %v270 = vunpack.c.l.b16 %v178
      %v271 = vunpack.c.l.b16 %v179
      %v272 = vunpack.c.h.b16 %v179
      %v273 = vunpack.c.l.b16 %v180
      %v274 = vunpack.c.l.b16 %v181
      %v275 = vunpack.c.h.b16 %v181
      %v276 = vunpack.c.l.b16 %v182
      %v277 = vunpack.c.l.b16 %v183
      %v278 = vunpack.c.h.b16 %v183
      %v279 = vunpack.c.l.b16 %v184
      %v280 = vunpack.c.l.b16 %v185
      %v281 = vunpack.c.h.b16 %v185
      %v282 = vunpack.c.l.b16 %v186
      %v283 = vunpack.c.l.b16 %v187
      %v284 = vunpack.c.h.b16 %v187
      %v285 = vunpack.c.l.b16 %v188
      %v286 = vpack.c.b16 %v241, %v238
      %v287 = vpack.c.b16 %v242, %v239
      %v288 = vpack.c.b16 %v243, %v240
      %v289 = vpack.c.b16 %v247, %v244
      %v290 = vpack.c.b16 %v248, %v245
      %v291 = vpack.c.b16 %v249, %v246
      %v292 = vpack.c.b16 %v253, %v250
      %v293 = vpack.c.b16 %v254, %v251
      %v294 = vpack.c.b16 %v255, %v252
      %v295 = vpack.c.b16 %v259, %v256
      %v296 = vpack.c.b16 %v260, %v257
      %v297 = vpack.c.b16 %v261, %v258
      %v298 = vpack.c.b16 %v265, %v262
      %v299 = vpack.c.b16 %v266, %v263
      %v300 = vpack.c.b16 %v267, %v264
      %v301 = vpack.c.b16 %v271, %v268
      %v302 = vpack.c.b16 %v272, %v269
      %v303 = vpack.c.b16 %v273, %v270
      %v304 = vpack.c.b16 %v277, %v274
      %v305 = vpack.c.b16 %v278, %v275
      %v306 = vpack.c.b16 %v279, %v276
      %v307 = vpack.c.b16 %v283, %v280
      %v308 = vpack.c.b16 %v284, %v281
      %v309 = vpack.c.b16 %v285, %v282
      %334 = vmatprep.subr.bf16.mxu0 %v287
      %335 = vmatpush1.bf16.msra.mxu0 %v286
      %336 = vmatprep.subr.bf16.mxu0 %v290
      %337 = vmatpush1.bf16.msra.mxu0 %v289
      %338 = vmatprep.subr.bf16.mxu0 %v293
      %339 = vmatpush1.bf16.msra.mxu0 %v292
      %340 = vmatprep.subr.bf16.mxu0 %v296
      %341 = vmatpush1.bf16.msra.mxu0 %v295
      %342 = vmatprep.subr.bf16.mxu0 %v299
      %343 = vmatpush1.bf16.msra.mxu0 %v298
      %344 = vmatprep.subr.bf16.mxu0 %v302
      %345 = vmatpush1.bf16.msra.mxu0 %v301
      %346 = vmatprep.subr.bf16.mxu0 %v305
      %347 = vmatpush1.bf16.msra.mxu0 %v304
      %348 = vmatprep.subr.bf16.mxu0 %v308
      %349 = vmatpush1.bf16.msra.mxu0 %v307
      %350 = vmatprep.subr.bf16.mxu0 0
      %351 = vmatpush1.bf16.msra.mxu0 0
      %352 = vmatprep.subr.bf16.mxu0 0
      %353 = vmatpush1.bf16.msra.mxu0 0
      %354 = vmatprep.subr.bf16.mxu0 0
      %355 = vmatpush1.bf16.msra.mxu0 0
      %356 = vmatprep.subr.bf16.mxu0 0
      %357 = vmatpush1.bf16.msra.mxu0 0
      %358 = vmatprep.subr.bf16.mxu0 0
      %359 = vmatpush1.bf16.msra.mxu0 0
      %360 = vmatprep.subr.bf16.mxu0 0
      %361 = vmatpush1.bf16.msra.mxu0 0
      %362 = vmatprep.subr.bf16.mxu0 0
      %363 = vmatpush1.bf16.msra.mxu0 0
      %364 = vmatprep.subr.bf16.mxu0 0
      %365 = vmatpush1.bf16.msra.mxu0 0
      %366 = vmatprep.mubr.bf16.mxu0 0
      %367 = vmatmul.mubr.bf16.gmra.mrb[0].mxu0 %v156
      %v368 = vpop.f32.mrb[0].mxu0
      %v369 = vadd.f32 %v194, %v368
      %v370 = vpop.f32.mrb[0].mxu0
      %v371 = vadd.f32 %v198, %v370
      %v372 = vpop.f32.mrb[0].mxu0
      %v373 = vpop.f32.mrb[0].mxu0
      %374 = vdwg.mxu0
      %375 = vmatprep.subr.bf16.mxu0 0
      %376 = vmatpush1.bf16.msra.mxu0 %v288
      %377 = vmatprep.subr.bf16.mxu0 0
      %378 = vmatpush1.bf16.msra.mxu0 %v291
      %379 = vmatprep.subr.bf16.mxu0 0
      %380 = vmatpush1.bf16.msra.mxu0 %v294
      %381 = vmatprep.subr.bf16.mxu0 0
      %382 = vmatpush1.bf16.msra.mxu0 %v297
      %383 = vmatprep.subr.bf16.mxu0 0
      %384 = vmatpush1.bf16.msra.mxu0 %v300
      %385 = vmatprep.subr.bf16.mxu0 0
      %386 = vmatpush1.bf16.msra.mxu0 %v303
      %387 = vmatprep.subr.bf16.mxu0 0
      %388 = vmatpush1.bf16.msra.mxu0 %v306
      %389 = vmatprep.subr.bf16.mxu0 0
      %390 = vmatpush1.bf16.msra.mxu0 %v309
      %391 = vmatprep.subr.bf16.mxu0 0
      %392 = vmatpush1.bf16.msra.mxu0 0
      %393 = vmatprep.subr.bf16.mxu0 0
      %394 = vmatpush1.bf16.msra.mxu0 0
      %395 = vmatprep.subr.bf16.mxu0 0
      %396 = vmatpush1.bf16.msra.mxu0 0
      %397 = vmatprep.subr.bf16.mxu0 0
      %398 = vmatpush1.bf16.msra.mxu0 0
      %399 = vmatprep.subr.bf16.mxu0 0
      %400 = vmatpush1.bf16.msra.mxu0 0
      %401 = vmatprep.subr.bf16.mxu0 0
      %402 = vmatpush1.bf16.msra.mxu0 0
      %403 = vmatprep.subr.bf16.mxu0 0
      %404 = vmatpush1.bf16.msra.mxu0 0
      %405 = vmatprep.subr.bf16.mxu0 0
      %406 = vmatpush1.bf16.msra.mxu0 0
      %407 = vmatprep.mubr.bf16.mxu0 0
      %408 = vmatmul.mubr.bf16.gmra.mrb[0].mxu0 %v156
      %v409 = vpop.f32.mrb[0].mxu0
      %v410 = vadd.f32 %v202, %v409
      %v411 = vpop.f32.mrb[0].mxu0
      %v412 = vpop.f32.mrb[0].mxu0
      %v413 = vpop.f32.mrb[0].mxu0
      %414 = vdwg.mxu0
      %v415 = vpack.c.bf16 %v155, %v155
      %v416 = vld [vmem:[#allocation11] sm:$0xff]
      %v417 = vld [vmem:[#allocation11 + $0x8] sm:$0xf]
      %v418 = vld [vmem:[#allocation11 + $0xc] sm:$0xff]
      %v419 = vld [vmem:[#allocation11 + $0x14] sm:$0xf]
      %v420 = vld [vmem:[#allocation11 + $0x18] sm:$0xff]
      %v421 = vld [vmem:[#allocation11 + $0x20] sm:$0xf]
      %v422 = vld [vmem:[#allocation11 + $0x24] sm:$0xff]
      %v423 = vld [vmem:[#allocation11 + $0x2c] sm:$0xf]
      %v424 = vld [vmem:[#allocation11 + $0x30] sm:$0xff]
      %v425 = vld [vmem:[#allocation11 + $0x38] sm:$0xf]
      %v426 = vld [vmem:[#allocation11 + $0x3c] sm:$0xff]
      %v427 = vld [vmem:[#allocation11 + $0x44] sm:$0xf]
      %v428 = vld [vmem:[#allocation11 + $0x48] sm:$0xff]
      %v429 = vld [vmem:[#allocation11 + $0x50] sm:$0xf]
      %v430 = vld [vmem:[#allocation11 + $0x54] sm:$0xff]
      %v431 = vld [vmem:[#allocation11 + $0x5c] sm:$0xf]
      %v432 = vld [vmem:[#allocation11 + $0x60] sm:$0xff]
      %v433 = vld [vmem:[#allocation11 + $0x68] sm:$0xf]
      %v434 = vld [vmem:[#allocation11 + $0x6c] sm:$0xff]
      %v435 = vld [vmem:[#allocation11 + $0x74] sm:$0xf]
      %v436 = vld [vmem:[#allocation11 + $0x78] sm:$0xff]
      %v437 = vld [vmem:[#allocation11 + $0x80] sm:$0xf]
      %v438 = vld [vmem:[#allocation11 + $0x84] sm:$0xff]
      %v439 = vld [vmem:[#allocation11 + $0x8c] sm:$0xf]
      %v440 = vld [vmem:[#allocation11 + $0x90] sm:$0xff]
      %v441 = vld [vmem:[#allocation11 + $0x98] sm:$0xf]
      %v442 = vld [vmem:[#allocation11 + $0x9c] sm:$0xff]
      %v443 = vld [vmem:[#allocation11 + $0xa4] sm:$0xf]
      %v444 = vld [vmem:[#allocation11 + $0xa8] sm:$0xff]
      %v445 = vld [vmem:[#allocation11 + $0xb0] sm:$0xf]
      %v446 = vld [vmem:[#allocation11 + $0xb4] sm:$0xff]
      %v447 = vld [vmem:[#allocation11 + $0xbc] sm:$0xf]
      %v448 = vld [vmem:[#allocation14] sm:$0x7]
      %v450 = vlaneseq
      %v451 = vshrl.u32 %v450, 7
      %v452 = vsub.s32 0, %v451
      %v453 = vrot.slane %v448, %v452
      %v454 = vlaneseq
      %v455 = vshrl.u32 %v454, 7
      %v456 = vsub.s32 1, %v455
      %v457 = vrot.slane %v448, %v456
      %v458 = vlaneseq
      %v459 = vshrl.u32 %v458, 7
      %v460 = vsub.s32 2, %v459
      %v461 = vrot.slane %v448, %v460
      %v497 = vunpack.c.l.b16 %v416
      %v498 = vunpack.c.h.b16 %v416
      %v499 = vunpack.c.l.b16 %v417
      %v500 = vunpack.c.l.b16 %v418
      %v501 = vunpack.c.h.b16 %v418
      %v502 = vunpack.c.l.b16 %v419
      %v503 = vunpack.c.l.b16 %v420
      %v504 = vunpack.c.h.b16 %v420
      %v505 = vunpack.c.l.b16 %v421
      %v506 = vunpack.c.l.b16 %v422
      %v507 = vunpack.c.h.b16 %v422
      %v508 = vunpack.c.l.b16 %v423
      %v509 = vunpack.c.l.b16 %v424
      %v510 = vunpack.c.h.b16 %v424
      %v511 = vunpack.c.l.b16 %v425
      %v512 = vunpack.c.l.b16 %v426
      %v513 = vunpack.c.h.b16 %v426
      %v514 = vunpack.c.l.b16 %v427
      %v515 = vunpack.c.l.b16 %v428
      %v516 = vunpack.c.h.b16 %v428
      %v517 = vunpack.c.l.b16 %v429
      %v518 = vunpack.c.l.b16 %v430
      %v519 = vunpack.c.h.b16 %v430
      %v520 = vunpack.c.l.b16 %v431
      %v521 = vunpack.c.l.b16 %v432
      %v522 = vunpack.c.h.b16 %v432
      %v523 = vunpack.c.l.b16 %v433
      %v524 = vunpack.c.l.b16 %v434
      %v525 = vunpack.c.h.b16 %v434
      %v526 = vunpack.c.l.b16 %v435
      %v527 = vunpack.c.l.b16 %v436
      %v528 = vunpack.c.h.b16 %v436
      %v529 = vunpack.c.l.b16 %v437
      %v530 = vunpack.c.l.b16 %v438
      %v531 = vunpack.c.h.b16 %v438
      %v532 = vunpack.c.l.b16 %v439
      %v533 = vunpack.c.l.b16 %v440
      %v534 = vunpack.c.h.b16 %v440
      %v535 = vunpack.c.l.b16 %v441
      %v536 = vunpack.c.l.b16 %v442
      %v537 = vunpack.c.h.b16 %v442
      %v538 = vunpack.c.l.b16 %v443
      %v539 = vunpack.c.l.b16 %v444
      %v540 = vunpack.c.h.b16 %v444
      %v541 = vunpack.c.l.b16 %v445
      %v542 = vunpack.c.l.b16 %v446
      %v543 = vunpack.c.h.b16 %v446
      %v544 = vunpack.c.l.b16 %v447
      %v545 = vpack.c.b16 %v500, %v497
      %v546 = vpack.c.b16 %v501, %v498
      %v547 = vpack.c.b16 %v502, %v499
      %v548 = vpack.c.b16 %v506, %v503
      %v549 = vpack.c.b16 %v507, %v504
      %v550 = vpack.c.b16 %v508, %v505
      %v551 = vpack.c.b16 %v512, %v509
      %v552 = vpack.c.b16 %v513, %v510
      %v553 = vpack.c.b16 %v514, %v511
      %v554 = vpack.c.b16 %v518, %v515
      %v555 = vpack.c.b16 %v519, %v516
      %v556 = vpack.c.b16 %v520, %v517
      %v557 = vpack.c.b16 %v524, %v521
      %v558 = vpack.c.b16 %v525, %v522
      %v559 = vpack.c.b16 %v526, %v523
      %v560 = vpack.c.b16 %v530, %v527
      %v561 = vpack.c.b16 %v531, %v528
      %v562 = vpack.c.b16 %v532, %v529
      %v563 = vpack.c.b16 %v536, %v533
      %v564 = vpack.c.b16 %v537, %v534
      %v565 = vpack.c.b16 %v538, %v535
      %v566 = vpack.c.b16 %v542, %v539
      %v567 = vpack.c.b16 %v543, %v540
      %v568 = vpack.c.b16 %v544, %v541
      %593 = vmatprep.subr.bf16.mxu0 %v546
      %594 = vmatpush1.bf16.msra.mxu0 %v545
      %595 = vmatprep.subr.bf16.mxu0 %v549
      %596 = vmatpush1.bf16.msra.mxu0 %v548
      %597 = vmatprep.subr.bf16.mxu0 %v552
      %598 = vmatpush1.bf16.msra.mxu0 %v551
      %599 = vmatprep.subr.bf16.mxu0 %v555
      %600 = vmatpush1.bf16.msra.mxu0 %v554
      %601 = vmatprep.subr.bf16.mxu0 %v558
      %602 = vmatpush1.bf16.msra.mxu0 %v557
      %603 = vmatprep.subr.bf16.mxu0 %v561
      %604 = vmatpush1.bf16.msra.mxu0 %v560
      %605 = vmatprep.subr.bf16.mxu0 %v564
      %606 = vmatpush1.bf16.msra.mxu0 %v563
      %607 = vmatprep.subr.bf16.mxu0 %v567
      %608 = vmatpush1.bf16.msra.mxu0 %v566
      %609 = vmatprep.subr.bf16.mxu0 0
      %610 = vmatpush1.bf16.msra.mxu0 0
      %611 = vmatprep.subr.bf16.mxu0 0
      %612 = vmatpush1.bf16.msra.mxu0 0
      %613 = vmatprep.subr.bf16.mxu0 0
      %614 = vmatpush1.bf16.msra.mxu0 0
      %615 = vmatprep.subr.bf16.mxu0 0
      %616 = vmatpush1.bf16.msra.mxu0 0
      %617 = vmatprep.subr.bf16.mxu0 0
      %618 = vmatpush1.bf16.msra.mxu0 0
      %619 = vmatprep.subr.bf16.mxu0 0
      %620 = vmatpush1.bf16.msra.mxu0 0
      %621 = vmatprep.subr.bf16.mxu0 0
      %622 = vmatpush1.bf16.msra.mxu0 0
      %623 = vmatprep.subr.bf16.mxu0 0
      %624 = vmatpush1.bf16.msra.mxu0 0
      %625 = vmatprep.mubr.bf16.mxu0 0
      %626 = vmatmul.mubr.bf16.gmra.mrb[0].mxu0 %v415
      %v627 = vpop.f32.mrb[0].mxu0
      %v628 = vadd.f32 %v453, %v627
      %v629 = vpop.f32.mrb[0].mxu0
      %v630 = vadd.f32 %v457, %v629
      %v631 = vpop.f32.mrb[0].mxu0
      %v632 = vpop.f32.mrb[0].mxu0
      %633 = vdwg.mxu0
      %634 = vmatprep.subr.bf16.mxu0 0
      %635 = vmatpush1.bf16.msra.mxu0 %v547
      %636 = vmatprep.subr.bf16.mxu0 0
      %637 = vmatpush1.bf16.msra.mxu0 %v550
      %638 = vmatprep.subr.bf16.mxu0 0
      %639 = vmatpush1.bf16.msra.mxu0 %v553
      %640 = vmatprep.subr.bf16.mxu0 0
      %641 = vmatpush1.bf16.msra.mxu0 %v556
      %642 = vmatprep.subr.bf16.mxu0 0
      %643 = vmatpush1.bf16.msra.mxu0 %v559
      %644 = vmatprep.subr.bf16.mxu0 0
      %645 = vmatpush1.bf16.msra.mxu0 %v562
      %646 = vmatprep.subr.bf16.mxu0 0
      %647 = vmatpush1.bf16.msra.mxu0 %v565
      %648 = vmatprep.subr.bf16.mxu0 0
      %649 = vmatpush1.bf16.msra.mxu0 %v568
      %650 = vmatprep.subr.bf16.mxu0 0
      %651 = vmatpush1.bf16.msra.mxu0 0
      %652 = vmatprep.subr.bf16.mxu0 0
      %653 = vmatpush1.bf16.msra.mxu0 0
      %654 = vmatprep.subr.bf16.mxu0 0
      %655 = vmatpush1.bf16.msra.mxu0 0
      %656 = vmatprep.subr.bf16.mxu0 0
      %657 = vmatpush1.bf16.msra.mxu0 0
      %658 = vmatprep.subr.bf16.mxu0 0
      %659 = vmatpush1.bf16.msra.mxu0 0
      %660 = vmatprep.subr.bf16.mxu0 0
      %661 = vmatpush1.bf16.msra.mxu0 0
      %662 = vmatprep.subr.bf16.mxu0 0
      %663 = vmatpush1.bf16.msra.mxu0 0
      %664 = vmatprep.subr.bf16.mxu0 0
      %665 = vmatpush1.bf16.msra.mxu0 0
      %666 = vmatprep.mubr.bf16.mxu0 0
      %667 = vmatmul.mubr.bf16.gmra.mrb[0].mxu0 %v415
      %v668 = vpop.f32.mrb[0].mxu0
      %v669 = vadd.f32 %v461, %v668
      %v670 = vpop.f32.mrb[0].mxu0
      %v671 = vpop.f32.mrb[0].mxu0
      %v672 = vpop.f32.mrb[0].mxu0
      %673 = vdwg.mxu0
      %v674 = vadd.f32 %v369, %v628
      %v675 = vxor.u32 %v674, 2147483648
      %v676 = vmul.f32 %v675, 1.442695
      %v677 = vpow.pop %v676
      %v678 = vadd.f32 %v677, 1.0
      %v679 = vrcp.pop %v678
      %v680 = vmul.f32 1.0, %v679
      %v681 = vadd.f32 %v371, %v630
      %v682 = vxor.u32 %v681, 2147483648
      %v683 = vmul.f32 %v682, 1.442695
      %v684 = vpow.pop %v683
      %v685 = vadd.f32 %v684, 1.0
      %v686 = vrcp.pop %v685
      %v687 = vmul.f32 1.0, %v686
      %v688 = vmul.f32 %v680, %v669
      %v689 = vadd.f32 %v410, %v688
      %v690 = vtanh.pop %v689
      %v691 = vsub.f32 1.0, %v687
      %v692 = vmul.f32 %v691, %v690
      %v693 = vmul.f32 %v687, %v155
      %v694 = vadd.f32 %v692, %v693
      %695 = vst [vmem:[%s13] sm:$0xff] %v694
      %s696 = scalar_lea.vmem %s2, 8
      %v697 = vld [vmem:[%s696] sm:$0xff]
      %v698 = vpack.c.bf16 %v694, %v694
      %s699 = scalar_lea.vmem [#allocation9], 192
      %v700 = vld [vmem:[%s699] sm:$0xff]
      %v701 = vld [vmem:[%s699 + $0x8] sm:$0xf]
      %v702 = vld [vmem:[%s699 + $0xc] sm:$0xff]
      %v703 = vld [vmem:[%s699 + $0x14] sm:$0xf]
      %v704 = vld [vmem:[%s699 + $0x18] sm:$0xff]
      %v705 = vld [vmem:[%s699 + $0x20] sm:$0xf]
      %v706 = vld [vmem:[%s699 + $0x24] sm:$0xff]
      %v707 = vld [vmem:[%s699 + $0x2c] sm:$0xf]
      %v708 = vld [vmem:[%s699 + $0x30] sm:$0xff]
      %v709 = vld [vmem:[%s699 + $0x38] sm:$0xf]
      %v710 = vld [vmem:[%s699 + $0x3c] sm:$0xff]
      %v711 = vld [vmem:[%s699 + $0x44] sm:$0xf]
      %v712 = vld [vmem:[%s699 + $0x48] sm:$0xff]
      %v713 = vld [vmem:[%s699 + $0x50] sm:$0xf]
      %v714 = vld [vmem:[%s699 + $0x54] sm:$0xff]
      %v715 = vld [vmem:[%s699 + $0x5c] sm:$0xf]
      %v716 = vld [vmem:[%s699 + $0x60] sm:$0xff]
      %v717 = vld [vmem:[%s699 + $0x68] sm:$0xf]
      %v718 = vld [vmem:[%s699 + $0x6c] sm:$0xff]
      %v719 = vld [vmem:[%s699 + $0x74] sm:$0xf]
      %v720 = vld [vmem:[%s699 + $0x78] sm:$0xff]
      %v721 = vld [vmem:[%s699 + $0x80] sm:$0xf]
      %v722 = vld [vmem:[%s699 + $0x84] sm:$0xff]
      %v723 = vld [vmem:[%s699 + $0x8c] sm:$0xf]
      %v724 = vld [vmem:[%s699 + $0x90] sm:$0xff]
      %v725 = vld [vmem:[%s699 + $0x98] sm:$0xf]
      %v726 = vld [vmem:[%s699 + $0x9c] sm:$0xff]
      %v727 = vld [vmem:[%s699 + $0xa4] sm:$0xf]
      %v728 = vld [vmem:[%s699 + $0xa8] sm:$0xff]
      %v729 = vld [vmem:[%s699 + $0xb0] sm:$0xf]
      %v730 = vld [vmem:[%s699 + $0xb4] sm:$0xff]
      %v731 = vld [vmem:[%s699 + $0xbc] sm:$0xf]
      %s732 = scalar_lea.vmem [#allocation13], 3
      %v733 = vld [vmem:[%s732] sm:$0x7]
      %v735 = vlaneseq
      %v736 = vshrl.u32 %v735, 7
      %v737 = vsub.s32 0, %v736
      %v738 = vrot.slane %v733, %v737
      %v739 = vlaneseq
      %v740 = vshrl.u32 %v739, 7
      %v741 = vsub.s32 1, %v740
      %v742 = vrot.slane %v733, %v741
      %v743 = vlaneseq
      %v744 = vshrl.u32 %v743, 7
      %v745 = vsub.s32 2, %v744
      %v746 = vrot.slane %v733, %v745
      %v782 = vunpack.c.l.b16 %v700
      %v783 = vunpack.c.h.b16 %v700
      %v784 = vunpack.c.l.b16 %v701
      %v785 = vunpack.c.l.b16 %v702
      %v786 = vunpack.c.h.b16 %v702
      %v787 = vunpack.c.l.b16 %v703
      %v788 = vunpack.c.l.b16 %v704
      %v789 = vunpack.c.h.b16 %v704
      %v790 = vunpack.c.l.b16 %v705
      %v791 = vunpack.c.l.b16 %v706
      %v792 = vunpack.c.h.b16 %v706
      %v793 = vunpack.c.l.b16 %v707
      %v794 = vunpack.c.l.b16 %v708
      %v795 = vunpack.c.h.b16 %v708
      %v796 = vunpack.c.l.b16 %v709
      %v797 = vunpack.c.l.b16 %v710
      %v798 = vunpack.c.h.b16 %v710
      %v799 = vunpack.c.l.b16 %v711
      %v800 = vunpack.c.l.b16 %v712
      %v801 = vunpack.c.h.b16 %v712
      %v802 = vunpack.c.l.b16 %v713
      %v803 = vunpack.c.l.b16 %v714
      %v804 = vunpack.c.h.b16 %v714
      %v805 = vunpack.c.l.b16 %v715
      %v806 = vunpack.c.l.b16 %v716
      %v807 = vunpack.c.h.b16 %v716
      %v808 = vunpack.c.l.b16 %v717
      %v809 = vunpack.c.l.b16 %v718
      %v810 = vunpack.c.h.b16 %v718
      %v811 = vunpack.c.l.b16 %v719
      %v812 = vunpack.c.l.b16 %v720
      %v813 = vunpack.c.h.b16 %v720
      %v814 = vunpack.c.l.b16 %v721
      %v815 = vunpack.c.l.b16 %v722
      %v816 = vunpack.c.h.b16 %v722
      %v817 = vunpack.c.l.b16 %v723
      %v818 = vunpack.c.l.b16 %v724
      %v819 = vunpack.c.h.b16 %v724
      %v820 = vunpack.c.l.b16 %v725
      %v821 = vunpack.c.l.b16 %v726
      %v822 = vunpack.c.h.b16 %v726
      %v823 = vunpack.c.l.b16 %v727
      %v824 = vunpack.c.l.b16 %v728
      %v825 = vunpack.c.h.b16 %v728
      %v826 = vunpack.c.l.b16 %v729
      %v827 = vunpack.c.l.b16 %v730
      %v828 = vunpack.c.h.b16 %v730
      %v829 = vunpack.c.l.b16 %v731
      %v830 = vpack.c.b16 %v785, %v782
      %v831 = vpack.c.b16 %v786, %v783
      %v832 = vpack.c.b16 %v787, %v784
      %v833 = vpack.c.b16 %v791, %v788
      %v834 = vpack.c.b16 %v792, %v789
      %v835 = vpack.c.b16 %v793, %v790
      %v836 = vpack.c.b16 %v797, %v794
      %v837 = vpack.c.b16 %v798, %v795
      %v838 = vpack.c.b16 %v799, %v796
      %v839 = vpack.c.b16 %v803, %v800
      %v840 = vpack.c.b16 %v804, %v801
      %v841 = vpack.c.b16 %v805, %v802
      %v842 = vpack.c.b16 %v809, %v806
      %v843 = vpack.c.b16 %v810, %v807
      %v844 = vpack.c.b16 %v811, %v808
      %v845 = vpack.c.b16 %v815, %v812
      %v846 = vpack.c.b16 %v816, %v813
      %v847 = vpack.c.b16 %v817, %v814
      %v848 = vpack.c.b16 %v821, %v818
      %v849 = vpack.c.b16 %v822, %v819
      %v850 = vpack.c.b16 %v823, %v820
      %v851 = vpack.c.b16 %v827, %v824
      %v852 = vpack.c.b16 %v828, %v825
      %v853 = vpack.c.b16 %v829, %v826
      %878 = vmatprep.subr.bf16.mxu0 %v831
      %879 = vmatpush1.bf16.msra.mxu0 %v830
      %880 = vmatprep.subr.bf16.mxu0 %v834
      %881 = vmatpush1.bf16.msra.mxu0 %v833
      %882 = vmatprep.subr.bf16.mxu0 %v837
      %883 = vmatpush1.bf16.msra.mxu0 %v836
      %884 = vmatprep.subr.bf16.mxu0 %v840
      %885 = vmatpush1.bf16.msra.mxu0 %v839
      %886 = vmatprep.subr.bf16.mxu0 %v843
      %887 = vmatpush1.bf16.msra.mxu0 %v842
      %888 = vmatprep.subr.bf16.mxu0 %v846
      %889 = vmatpush1.bf16.msra.mxu0 %v845
      %890 = vmatprep.subr.bf16.mxu0 %v849
      %891 = vmatpush1.bf16.msra.mxu0 %v848
      %892 = vmatprep.subr.bf16.mxu0 %v852
      %893 = vmatpush1.bf16.msra.mxu0 %v851
      %894 = vmatprep.subr.bf16.mxu0 0
      %895 = vmatpush1.bf16.msra.mxu0 0
      %896 = vmatprep.subr.bf16.mxu0 0
      %897 = vmatpush1.bf16.msra.mxu0 0
      %898 = vmatprep.subr.bf16.mxu0 0
      %899 = vmatpush1.bf16.msra.mxu0 0
      %900 = vmatprep.subr.bf16.mxu0 0
      %901 = vmatpush1.bf16.msra.mxu0 0
      %902 = vmatprep.subr.bf16.mxu0 0
      %903 = vmatpush1.bf16.msra.mxu0 0
      %904 = vmatprep.subr.bf16.mxu0 0
      %905 = vmatpush1.bf16.msra.mxu0 0
      %906 = vmatprep.subr.bf16.mxu0 0
      %907 = vmatpush1.bf16.msra.mxu0 0
      %908 = vmatprep.subr.bf16.mxu0 0
      %909 = vmatpush1.bf16.msra.mxu0 0
      %910 = vmatprep.mubr.bf16.mxu0 0
      %911 = vmatmul.mubr.bf16.gmra.mrb[0].mxu0 %v698
      %v912 = vpop.f32.mrb[0].mxu0
      %v913 = vadd.f32 %v738, %v912
      %v914 = vpop.f32.mrb[0].mxu0
      %v915 = vadd.f32 %v742, %v914
      %v916 = vpop.f32.mrb[0].mxu0
      %v917 = vpop.f32.mrb[0].mxu0
      %918 = vdwg.mxu0
      %919 = vmatprep.subr.bf16.mxu0 0
      %920 = vmatpush1.bf16.msra.mxu0 %v832
      %921 = vmatprep.subr.bf16.mxu0 0
      %922 = vmatpush1.bf16.msra.mxu0 %v835
      %923 = vmatprep.subr.bf16.mxu0 0
      %924 = vmatpush1.bf16.msra.mxu0 %v838
      %925 = vmatprep.subr.bf16.mxu0 0
      %926 = vmatpush1.bf16.msra.mxu0 %v841
      %927 = vmatprep.subr.bf16.mxu0 0
      %928 = vmatpush1.bf16.msra.mxu0 %v844
      %929 = vmatprep.subr.bf16.mxu0 0
      %930 = vmatpush1.bf16.msra.mxu0 %v847
      %931 = vmatprep.subr.bf16.mxu0 0
      %932 = vmatpush1.bf16.msra.mxu0 %v850
      %933 = vmatprep.subr.bf16.mxu0 0
      %934 = vmatpush1.bf16.msra.mxu0 %v853
      %935 = vmatprep.subr.bf16.mxu0 0
      %936 = vmatpush1.bf16.msra.mxu0 0
      %937 = vmatprep.subr.bf16.mxu0 0
      %938 = vmatpush1.bf16.msra.mxu0 0
      %939 = vmatprep.subr.bf16.mxu0 0
      %940 = vmatpush1.bf16.msra.mxu0 0
      %941 = vmatprep.subr.bf16.mxu0 0
      %942 = vmatpush1.bf16.msra.mxu0 0
      %943 = vmatprep.subr.bf16.mxu0 0
      %944 = vmatpush1.bf16.msra.mxu0 0
      %945 = vmatprep.subr.bf16.mxu0 0
      %946 = vmatpush1.bf16.msra.mxu0 0
      %947 = vmatprep.subr.bf16.mxu0 0
      %948 = vmatpush1.bf16.msra.mxu0 0
      %949 = vmatprep.subr.bf16.mxu0 0
      %950 = vmatpush1.bf16.msra.mxu0 0
      %951 = vmatprep.mubr.bf16.mxu0 0
      %952 = vmatmul.mubr.bf16.gmra.mrb[0].mxu0 %v698
      %v953 = vpop.f32.mrb[0].mxu0
      %v954 = vadd.f32 %v746, %v953
      %v955 = vpop.f32.mrb[0].mxu0
      %v956 = vpop.f32.mrb[0].mxu0
      %v957 = vpop.f32.mrb[0].mxu0
      %958 = vdwg.mxu0
      %v959 = vpack.c.bf16 %v697, %v697
      %s960 = scalar_lea.vmem [#allocation11], 192
      %v961 = vld [vmem:[%s960] sm:$0xff]
      %v962 = vld [vmem:[%s960 + $0x8] sm:$0xf]
      %v963 = vld [vmem:[%s960 + $0xc] sm:$0xff]
      %v964 = vld [vmem:[%s960 + $0x14] sm:$0xf]
      %v965 = vld [vmem:[%s960 + $0x18] sm:$0xff]
      %v966 = vld [vmem:[%s960 + $0x20] sm:$0xf]
      %v967 = vld [vmem:[%s960 + $0x24] sm:$0xff]
      %v968 = vld [vmem:[%s960 + $0x2c] sm:$0xf]
      %v969 = vld [vmem:[%s960 + $0x30] sm:$0xff]
      %v970 = vld [vmem:[%s960 + $0x38] sm:$0xf]
      %v971 = vld [vmem:[%s960 + $0x3c] sm:$0xff]
      %v972 = vld [vmem:[%s960 + $0x44] sm:$0xf]
      %v973 = vld [vmem:[%s960 + $0x48] sm:$0xff]
      %v974 = vld [vmem:[%s960 + $0x50] sm:$0xf]
      %v975 = vld [vmem:[%s960 + $0x54] sm:$0xff]
      %v976 = vld [vmem:[%s960 + $0x5c] sm:$0xf]
      %v977 = vld [vmem:[%s960 + $0x60] sm:$0xff]
      %v978 = vld [vmem:[%s960 + $0x68] sm:$0xf]
      %v979 = vld [vmem:[%s960 + $0x6c] sm:$0xff]
      %v980 = vld [vmem:[%s960 + $0x74] sm:$0xf]
      %v981 = vld [vmem:[%s960 + $0x78] sm:$0xff]
      %v982 = vld [vmem:[%s960 + $0x80] sm:$0xf]
      %v983 = vld [vmem:[%s960 + $0x84] sm:$0xff]
      %v984 = vld [vmem:[%s960 + $0x8c] sm:$0xf]
      %v985 = vld [vmem:[%s960 + $0x90] sm:$0xff]
      %v986 = vld [vmem:[%s960 + $0x98] sm:$0xf]
      %v987 = vld [vmem:[%s960 + $0x9c] sm:$0xff]
      %v988 = vld [vmem:[%s960 + $0xa4] sm:$0xf]
      %v989 = vld [vmem:[%s960 + $0xa8] sm:$0xff]
      %v990 = vld [vmem:[%s960 + $0xb0] sm:$0xf]
      %v991 = vld [vmem:[%s960 + $0xb4] sm:$0xff]
      %v992 = vld [vmem:[%s960 + $0xbc] sm:$0xf]
      %s993 = scalar_lea.vmem [#allocation14], 3
      %v994 = vld [vmem:[%s993] sm:$0x7]
      %v996 = vlaneseq
      %v997 = vshrl.u32 %v996, 7
      %v998 = vsub.s32 0, %v997
      %v999 = vrot.slane %v994, %v998
      %v1000 = vlaneseq
      %v1001 = vshrl.u32 %v1000, 7
      %v1002 = vsub.s32 1, %v1001
      %v1003 = vrot.slane %v994, %v1002
      %v1004 = vlaneseq
      %v1005 = vshrl.u32 %v1004, 7
      %v1006 = vsub.s32 2, %v1005
      %v1007 = vrot.slane %v994, %v1006
      %v1043 = vunpack.c.l.b16 %v961
      %v1044 = vunpack.c.h.b16 %v961
      %v1045 = vunpack.c.l.b16 %v962
      %v1046 = vunpack.c.l.b16 %v963
      %v1047 = vunpack.c.h.b16 %v963
      %v1048 = vunpack.c.l.b16 %v964
      %v1049 = vunpack.c.l.b16 %v965
      %v1050 = vunpack.c.h.b16 %v965
      %v1051 = vunpack.c.l.b16 %v966
      %v1052 = vunpack.c.l.b16 %v967
      %v1053 = vunpack.c.h.b16 %v967
      %v1054 = vunpack.c.l.b16 %v968
      %v1055 = vunpack.c.l.b16 %v969
      %v1056 = vunpack.c.h.b16 %v969
      %v1057 = vunpack.c.l.b16 %v970
      %v1058 = vunpack.c.l.b16 %v971
      %v1059 = vunpack.c.h.b16 %v971
      %v1060 = vunpack.c.l.b16 %v972
      %v1061 = vunpack.c.l.b16 %v973
      %v1062 = vunpack.c.h.b16 %v973
      %v1063 = vunpack.c.l.b16 %v974
      %v1064 = vunpack.c.l.b16 %v975
      %v1065 = vunpack.c.h.b16 %v975
      %v1066 = vunpack.c.l.b16 %v976
      %v1067 = vunpack.c.l.b16 %v977
      %v1068 = vunpack.c.h.b16 %v977
      %v1069 = vunpack.c.l.b16 %v978
      %v1070 = vunpack.c.l.b16 %v979
      %v1071 = vunpack.c.h.b16 %v979
      %v1072 = vunpack.c.l.b16 %v980
      %v1073 = vunpack.c.l.b16 %v981
      %v1074 = vunpack.c.h.b16 %v981
      %v1075 = vunpack.c.l.b16 %v982
      %v1076 = vunpack.c.l.b16 %v983
      %v1077 = vunpack.c.h.b16 %v983
      %v1078 = vunpack.c.l.b16 %v984
      %v1079 = vunpack.c.l.b16 %v985
      %v1080 = vunpack.c.h.b16 %v985
      %v1081 = vunpack.c.l.b16 %v986
      %v1082 = vunpack.c.l.b16 %v987
      %v1083 = vunpack.c.h.b16 %v987
      %v1084 = vunpack.c.l.b16 %v988
      %v1085 = vunpack.c.l.b16 %v989
      %v1086 = vunpack.c.h.b16 %v989
      %v1087 = vunpack.c.l.b16 %v990
      %v1088 = vunpack.c.l.b16 %v991
      %v1089 = vunpack.c.h.b16 %v991
      %v1090 = vunpack.c.l.b16 %v992
      %v1091 = vpack.c.b16 %v1046, %v1043
      %v1092 = vpack.c.b16 %v1047, %v1044
      %v1093 = vpack.c.b16 %v1048, %v1045
      %v1094 = vpack.c.b16 %v1052, %v1049
      %v1095 = vpack.c.b16 %v1053, %v1050
      %v1096 = vpack.c.b16 %v1054, %v1051
      %v1097 = vpack.c.b16 %v1058, %v1055
      %v1098 = vpack.c.b16 %v1059, %v1056
      %v1099 = vpack.c.b16 %v1060, %v1057
      %v1100 = vpack.c.b16 %v1064, %v1061
      %v1101 = vpack.c.b16 %v1065, %v1062
      %v1102 = vpack.c.b16 %v1066, %v1063
      %v1103 = vpack.c.b16 %v1070, %v1067
      %v1104 = vpack.c.b16 %v1071, %v1068
      %v1105 = vpack.c.b16 %v1072, %v1069
      %v1106 = vpack.c.b16 %v1076, %v1073
      %v1107 = vpack.c.b16 %v1077, %v1074
      %v1108 = vpack.c.b16 %v1078, %v1075
      %v1109 = vpack.c.b16 %v1082, %v1079
      %v1110 = vpack.c.b16 %v1083, %v1080
      %v1111 = vpack.c.b16 %v1084, %v1081
      %v1112 = vpack.c.b16 %v1088, %v1085
      %v1113 = vpack.c.b16 %v1089, %v1086
      %v1114 = vpack.c.b16 %v1090, %v1087
      %1139 = vmatprep.subr.bf16.mxu0 %v1092
      %1140 = vmatpush1.bf16.msra.mxu0 %v1091
      %1141 = vmatprep.subr.bf16.mxu0 %v1095
      %1142 = vmatpush1.bf16.msra.mxu0 %v1094
      %1143 = vmatprep.subr.bf16.mxu0 %v1098
      %1144 = vmatpush1.bf16.msra.mxu0 %v1097
      %1145 = vmatprep.subr.bf16.mxu0 %v1101
      %1146 = vmatpush1.bf16.msra.mxu0 %v1100
      %1147 = vmatprep.subr.bf16.mxu0 %v1104
      %1148 = vmatpush1.bf16.msra.mxu0 %v1103
      %1149 = vmatprep.subr.bf16.mxu0 %v1107
      %1150 = vmatpush1.bf16.msra.mxu0 %v1106
      %1151 = vmatprep.subr.bf16.mxu0 %v1110
      %1152 = vmatpush1.bf16.msra.mxu0 %v1109
      %1153 = vmatprep.subr.bf16.mxu0 %v1113
      %1154 = vmatpush1.bf16.msra.mxu0 %v1112
      %1155 = vmatprep.subr.bf16.mxu0 0
      %1156 = vmatpush1.bf16.msra.mxu0 0
      %1157 = vmatprep.subr.bf16.mxu0 0
      %1158 = vmatpush1.bf16.msra.mxu0 0
      %1159 = vmatprep.subr.bf16.mxu0 0
      %1160 = vmatpush1.bf16.msra.mxu0 0
      %1161 = vmatprep.subr.bf16.mxu0 0
      %1162 = vmatpush1.bf16.msra.mxu0 0
      %1163 = vmatprep.subr.bf16.mxu0 0
      %1164 = vmatpush1.bf16.msra.mxu0 0
      %1165 = vmatprep.subr.bf16.mxu0 0
      %1166 = vmatpush1.bf16.msra.mxu0 0
      %1167 = vmatprep.subr.bf16.mxu0 0
      %1168 = vmatpush1.bf16.msra.mxu0 0
      %1169 = vmatprep.subr.bf16.mxu0 0
      %1170 = vmatpush1.bf16.msra.mxu0 0
      %1171 = vmatprep.mubr.bf16.mxu0 0
      %1172 = vmatmul.mubr.bf16.gmra.mrb[0].mxu0 %v959
      %v1173 = vpop.f32.mrb[0].mxu0
      %v1174 = vadd.f32 %v999, %v1173
      %v1175 = vpop.f32.mrb[0].mxu0
      %v1176 = vadd.f32 %v1003, %v1175
      %v1177 = vpop.f32.mrb[0].mxu0
      %v1178 = vpop.f32.mrb[0].mxu0
      %1179 = vdwg.mxu0
      %1180 = vmatprep.subr.bf16.mxu0 0
      %1181 = vmatpush1.bf16.msra.mxu0 %v1093
      %1182 = vmatprep.subr.bf16.mxu0 0
      %1183 = vmatpush1.bf16.msra.mxu0 %v1096
      %1184 = vmatprep.subr.bf16.mxu0 0
      %1185 = vmatpush1.bf16.msra.mxu0 %v1099
      %1186 = vmatprep.subr.bf16.mxu0 0
      %1187 = vmatpush1.bf16.msra.mxu0 %v1102
      %1188 = vmatprep.subr.bf16.mxu0 0
      %1189 = vmatpush1.bf16.msra.mxu0 %v1105
      %1190 = vmatprep.subr.bf16.mxu0 0
      %1191 = vmatpush1.bf16.msra.mxu0 %v1108
      %1192 = vmatprep.subr.bf16.mxu0 0
      %1193 = vmatpush1.bf16.msra.mxu0 %v1111
      %1194 = vmatprep.subr.bf16.mxu0 0
      %1195 = vmatpush1.bf16.msra.mxu0 %v1114
      %1196 = vmatprep.subr.bf16.mxu0 0
      %1197 = vmatpush1.bf16.msra.mxu0 0
      %1198 = vmatprep.subr.bf16.mxu0 0
      %1199 = vmatpush1.bf16.msra.mxu0 0
      %1200 = vmatprep.subr.bf16.mxu0 0
      %1201 = vmatpush1.bf16.msra.mxu0 0
      %1202 = vmatprep.subr.bf16.mxu0 0
      %1203 = vmatpush1.bf16.msra.mxu0 0
      %1204 = vmatprep.subr.bf16.mxu0 0
      %1205 = vmatpush1.bf16.msra.mxu0 0
      %1206 = vmatprep.subr.bf16.mxu0 0
      %1207 = vmatpush1.bf16.msra.mxu0 0
      %1208 = vmatprep.subr.bf16.mxu0 0
      %1209 = vmatpush1.bf16.msra.mxu0 0
      %1210 = vmatprep.subr.bf16.mxu0 0
      %1211 = vmatpush1.bf16.msra.mxu0 0
      %1212 = vmatprep.mubr.bf16.mxu0 0
      %1213 = vmatmul.mubr.bf16.gmra.mrb[0].mxu0 %v959
      %v1214 = vpop.f32.mrb[0].mxu0
      %v1215 = vadd.f32 %v1007, %v1214
      %v1216 = vpop.f32.mrb[0].mxu0
      %v1217 = vpop.f32.mrb[0].mxu0
      %v1218 = vpop.f32.mrb[0].mxu0
      %1219 = vdwg.mxu0
      %v1220 = vadd.f32 %v913, %v1174
      %v1221 = vxor.u32 %v1220, 2147483648
      %v1222 = vmul.f32 %v1221, 1.442695
      %v1223 = vpow.pop %v1222
      %v1224 = vadd.f32 %v1223, 1.0
      %v1225 = vrcp.pop %v1224
      %v1226 = vmul.f32 1.0, %v1225
      %v1227 = vadd.f32 %v915, %v1176
      %v1228 = vxor.u32 %v1227, 2147483648
      %v1229 = vmul.f32 %v1228, 1.442695
      %v1230 = vpow.pop %v1229
      %v1231 = vadd.f32 %v1230, 1.0
      %v1232 = vrcp.pop %v1231
      %v1233 = vmul.f32 1.0, %v1232
      %v1234 = vmul.f32 %v1226, %v1215
      %v1235 = vadd.f32 %v954, %v1234
      %v1236 = vtanh.pop %v1235
      %v1237 = vsub.f32 1.0, %v1233
      %v1238 = vmul.f32 %v1237, %v1236
      %v1239 = vmul.f32 %v1233, %v697
      %v1240 = vadd.f32 %v1238, %v1239
      %s1241 = scalar_lea.vmem %s13, 8
      %1242 = vst [vmem:[%s1241] sm:$0xff] %v1240
      %s1243 = scalar_lea.vmem %s2, 16
      %v1244 = vld [vmem:[%s1243] sm:$0xff]
      %v1245 = vpack.c.bf16 %v1240, %v1240
      %s1246 = scalar_lea.vmem [#allocation9], 384
      %v1247 = vld [vmem:[%s1246] sm:$0xff]
      %v1248 = vld [vmem:[%s1246 + $0x8] sm:$0xf]
      %v1249 = vld [vmem:[%s1246 + $0xc] sm:$0xff]
      %v1250 = vld [vmem:[%s1246 + $0x14] sm:$0xf]
      %v1251 = vld [vmem:[%s1246 + $0x18] sm:$0xff]
      %v1252 = vld [vmem:[%s1246 + $0x20] sm:$0xf]
      %v1253 = vld [vmem:[%s1246 + $0x24] sm:$0xff]
      %v1254 = vld [vmem:[%s1246 + $0x2c] sm:$0xf]
      %v1255 = vld [vmem:[%s1246 + $0x30] sm:$0xff]
      %v1256 = vld [vmem:[%s1246 + $0x38] sm:$0xf]
      %v1257 = vld [vmem:[%s1246 + $0x3c] sm:$0xff]
      %v1258 = vld [vmem:[%s1246 + $0x44] sm:$0xf]
      %v1259 = vld [vmem:[%s1246 + $0x48] sm:$0xff]
      %v1260 = vld [vmem:[%s1246 + $0x50] sm:$0xf]
      %v1261 = vld [vmem:[%s1246 + $0x54] sm:$0xff]
      %v1262 = vld [vmem:[%s1246 + $0x5c] sm:$0xf]
      %v1263 = vld [vmem:[%s1246 + $0x60] sm:$0xff]
      %v1264 = vld [vmem:[%s1246 + $0x68] sm:$0xf]
      %v1265 = vld [vmem:[%s1246 + $0x6c] sm:$0xff]
      %v1266 = vld [vmem:[%s1246 + $0x74] sm:$0xf]
      %v1267 = vld [vmem:[%s1246 + $0x78] sm:$0xff]
      %v1268 = vld [vmem:[%s1246 + $0x80] sm:$0xf]
      %v1269 = vld [vmem:[%s1246 + $0x84] sm:$0xff]
      %v1270 = vld [vmem:[%s1246 + $0x8c] sm:$0xf]
      %v1271 = vld [vmem:[%s1246 + $0x90] sm:$0xff]
      %v1272 = vld [vmem:[%s1246 + $0x98] sm:$0xf]
      %v1273 = vld [vmem:[%s1246 + $0x9c] sm:$0xff]
      %v1274 = vld [vmem:[%s1246 + $0xa4] sm:$0xf]
      %v1275 = vld [vmem:[%s1246 + $0xa8] sm:$0xff]
      %v1276 = vld [vmem:[%s1246 + $0xb0] sm:$0xf]
      %v1277 = vld [vmem:[%s1246 + $0xb4] sm:$0xff]
      %v1278 = vld [vmem:[%s1246 + $0xbc] sm:$0xf]
      %s1279 = scalar_lea.vmem [#allocation13], 6
      %v1280 = vld [vmem:[%s1279] sm:$0x7]
      %v1282 = vlaneseq
      %v1283 = vshrl.u32 %v1282, 7
      %v1284 = vsub.s32 0, %v1283
      %v1285 = vrot.slane %v1280, %v1284
      %v1286 = vlaneseq
      %v1287 = vshrl.u32 %v1286, 7
      %v1288 = vsub.s32 1, %v1287
      %v1289 = vrot.slane %v1280, %v1288
      %v1290 = vlaneseq
      %v1291 = vshrl.u32 %v1290, 7
      %v1292 = vsub.s32 2, %v1291
      %v1293 = vrot.slane %v1280, %v1292
      %v1329 = vunpack.c.l.b16 %v1247
      %v1330 = vunpack.c.h.b16 %v1247
      %v1331 = vunpack.c.l.b16 %v1248
      %v1332 = vunpack.c.l.b16 %v1249
      %v1333 = vunpack.c.h.b16 %v1249
      %v1334 = vunpack.c.l.b16 %v1250
      %v1335 = vunpack.c.l.b16 %v1251
      %v1336 = vunpack.c.h.b16 %v1251
      %v1337 = vunpack.c.l.b16 %v1252
      %v1338 = vunpack.c.l.b16 %v1253
      %v1339 = vunpack.c.h.b16 %v1253
      %v1340 = vunpack.c.l.b16 %v1254
      %v1341 = vunpack.c.l.b16 %v1255
      %v1342 = vunpack.c.h.b16 %v1255
      %v1343 = vunpack.c.l.b16 %v1256
      %v1344 = vunpack.c.l.b16 %v1257
      %v1345 = vunpack.c.h.b16 %v1257
      %v1346 = vunpack.c.l.b16 %v1258
      %v1347 = vunpack.c.l.b16 %v1259
      %v1348 = vunpack.c.h.b16 %v1259
      %v1349 = vunpack.c.l.b16 %v1260
      %v1350 = vunpack.c.l.b16 %v1261
      %v1351 = vunpack.c.h.b16 %v1261
      %v1352 = vunpack.c.l.b16 %v1262
      %v1353 = vunpack.c.l.b16 %v1263
      %v1354 = vunpack.c.h.b16 %v1263
      %v1355 = vunpack.c.l.b16 %v1264
      %v1356 = vunpack.c.l.b16 %v1265
      %v1357 = vunpack.c.h.b16 %v1265
      %v1358 = vunpack.c.l.b16 %v1266
      %v1359 = vunpack.c.l.b16 %v1267
      %v1360 = vunpack.c.h.b16 %v1267
      %v1361 = vunpack.c.l.b16 %v1268
      %v1362 = vunpack.c.l.b16 %v1269
      %v1363 = vunpack.c.h.b16 %v1269
      %v1364 = vunpack.c.l.b16 %v1270
      %v1365 = vunpack.c.l.b16 %v1271
      %v1366 = vunpack.c.h.b16 %v1271
      %v1367 = vunpack.c.l.b16 %v1272
      %v1368 = vunpack.c.l.b16 %v1273
      %v1369 = vunpack.c.h.b16 %v1273
      %v1370 = vunpack.c.l.b16 %v1274
      %v1371 = vunpack.c.l.b16 %v1275
      %v1372 = vunpack.c.h.b16 %v1275
      %v1373 = vunpack.c.l.b16 %v1276
      %v1374 = vunpack.c.l.b16 %v1277
      %v1375 = vunpack.c.h.b16 %v1277
      %v1376 = vunpack.c.l.b16 %v1278
      %v1377 = vpack.c.b16 %v1332, %v1329
      %v1378 = vpack.c.b16 %v1333, %v1330
      %v1379 = vpack.c.b16 %v1334, %v1331
      %v1380 = vpack.c.b16 %v1338, %v1335
      %v1381 = vpack.c.b16 %v1339, %v1336
      %v1382 = vpack.c.b16 %v1340, %v1337
      %v1383 = vpack.c.b16 %v1344, %v1341
      %v1384 = vpack.c.b16 %v1345, %v1342
      %v1385 = vpack.c.b16 %v1346, %v1343
      %v1386 = vpack.c.b16 %v1350, %v1347
      %v1387 = vpack.c.b16 %v1351, %v1348
      %v1388 = vpack.c.b16 %v1352, %v1349
      %v1389 = vpack.c.b16 %v1356, %v1353
      %v1390 = vpack.c.b16 %v1357, %v1354
      %v1391 = vpack.c.b16 %v1358, %v1355
      %v1392 = vpack.c.b16 %v1362, %v1359
      %v1393 = vpack.c.b16 %v1363, %v1360
      %v1394 = vpack.c.b16 %v1364, %v1361
      %v1395 = vpack.c.b16 %v1368, %v1365
      %v1396 = vpack.c.b16 %v1369, %v1366
      %v1397 = vpack.c.b16 %v1370, %v1367
      %v1398 = vpack.c.b16 %v1374, %v1371
      %v1399 = vpack.c.b16 %v1375, %v1372
      %v1400 = vpack.c.b16 %v1376, %v1373
      %1425 = vmatprep.subr.bf16.mxu0 %v1378
      %1426 = vmatpush1.bf16.msra.mxu0 %v1377
      %1427 = vmatprep.subr.bf16.mxu0 %v1381
      %1428 = vmatpush1.bf16.msra.mxu0 %v1380
      %1429 = vmatprep.subr.bf16.mxu0 %v1384
      %1430 = vmatpush1.bf16.msra.mxu0 %v1383
      %1431 = vmatprep.subr.bf16.mxu0 %v1387
      %1432 = vmatpush1.bf16.msra.mxu0 %v1386
      %1433 = vmatprep.subr.bf16.mxu0 %v1390
      %1434 = vmatpush1.bf16.msra.mxu0 %v1389
      %1435 = vmatprep.subr.bf16.mxu0 %v1393
      %1436 = vmatpush1.bf16.msra.mxu0 %v1392
      %1437 = vmatprep.subr.bf16.mxu0 %v1396
      %1438 = vmatpush1.bf16.msra.mxu0 %v1395
      %1439 = vmatprep.subr.bf16.mxu0 %v1399
      %1440 = vmatpush1.bf16.msra.mxu0 %v1398
      %1441 = vmatprep.subr.bf16.mxu0 0
      %1442 = vmatpush1.bf16.msra.mxu0 0
      %1443 = vmatprep.subr.bf16.mxu0 0
      %1444 = vmatpush1.bf16.msra.mxu0 0
      %1445 = vmatprep.subr.bf16.mxu0 0
      %1446 = vmatpush1.bf16.msra.mxu0 0
      %1447 = vmatprep.subr.bf16.mxu0 0
      %1448 = vmatpush1.bf16.msra.mxu0 0
      %1449 = vmatprep.subr.bf16.mxu0 0
      %1450 = vmatpush1.bf16.msra.mxu0 0
      %1451 = vmatprep.subr.bf16.mxu0 0
      %1452 = vmatpush1.bf16.msra.mxu0 0
      %1453 = vmatprep.subr.bf16.mxu0 0
      %1454 = vmatpush1.bf16.msra.mxu0 0
      %1455 = vmatprep.subr.bf16.mxu0 0
      %1456 = vmatpush1.bf16.msra.mxu0 0
      %1457 = vmatprep.mubr.bf16.mxu0 0
      %1458 = vmatmul.mubr.bf16.gmra.mrb[0].mxu0 %v1245
      %v1459 = vpop.f32.mrb[0].mxu0
      %v1460 = vadd.f32 %v1285, %v1459
      %v1461 = vpop.f32.mrb[0].mxu0
      %v1462 = vadd.f32 %v1289, %v1461
      %v1463 = vpop.f32.mrb[0].mxu0
      %v1464 = vpop.f32.mrb[0].mxu0
      %1465 = vdwg.mxu0
      %1466 = vmatprep.subr.bf16.mxu0 0
      %1467 = vmatpush1.bf16.msra.mxu0 %v1379
      %1468 = vmatprep.subr.bf16.mxu0 0
      %1469 = vmatpush1.bf16.msra.mxu0 %v1382
      %1470 = vmatprep.subr.bf16.mxu0 0
      %1471 = vmatpush1.bf16.msra.mxu0 %v1385
      %1472 = vmatprep.subr.bf16.mxu0 0
      %1473 = vmatpush1.bf16.msra.mxu0 %v1388
      %1474 = vmatprep.subr.bf16.mxu0 0
      %1475 = vmatpush1.bf16.msra.mxu0 %v1391
      %1476 = vmatprep.subr.bf16.mxu0 0
      %1477 = vmatpush1.bf16.msra.mxu0 %v1394
      %1478 = vmatprep.subr.bf16.mxu0 0
      %1479 = vmatpush1.bf16.msra.mxu0 %v1397
      %1480 = vmatprep.subr.bf16.mxu0 0
      %1481 = vmatpush1.bf16.msra.mxu0 %v1400
      %1482 = vmatprep.subr.bf16.mxu0 0
      %1483 = vmatpush1.bf16.msra.mxu0 0
      %1484 = vmatprep.subr.bf16.mxu0 0
      %1485 = vmatpush1.bf16.msra.mxu0 0
      %1486 = vmatprep.subr.bf16.mxu0 0
      %1487 = vmatpush1.bf16.msra.mxu0 0
      %1488 = vmatprep.subr.bf16.mxu0 0
      %1489 = vmatpush1.bf16.msra.mxu0 0
      %1490 = vmatprep.subr.bf16.mxu0 0
      %1491 = vmatpush1.bf16.msra.mxu0 0
      %1492 = vmatprep.subr.bf16.mxu0 0
      %1493 = vmatpush1.bf16.msra.mxu0 0
      %1494 = vmatprep.subr.bf16.mxu0 0
      %1495 = vmatpush1.bf16.msra.mxu0 0
      %1496 = vmatprep.subr.bf16.mxu0 0
      %1497 = vmatpush1.bf16.msra.mxu0 0
      %1498 = vmatprep.mubr.bf16.mxu0 0
      %1499 = vmatmul.mubr.bf16.gmra.mrb[0].mxu0 %v1245
      %v1500 = vpop.f32.mrb[0].mxu0
      %v1501 = vadd.f32 %v1293, %v1500
      %v1502 = vpop.f32.mrb[0].mxu0
      %v1503 = vpop.f32.mrb[0].mxu0
      %v1504 = vpop.f32.mrb[0].mxu0
      %1505 = vdwg.mxu0
      %v1506 = vpack.c.bf16 %v1244, %v1244
      %s1507 = scalar_lea.vmem [#allocation11], 384
      %v1508 = vld [vmem:[%s1507] sm:$0xff]
      %v1509 = vld [vmem:[%s1507 + $0x8] sm:$0xf]
      %v1510 = vld [vmem:[%s1507 + $0xc] sm:$0xff]
      %v1511 = vld [vmem:[%s1507 + $0x14] sm:$0xf]
      %v1512 = vld [vmem:[%s1507 + $0x18] sm:$0xff]
      %v1513 = vld [vmem:[%s1507 + $0x20] sm:$0xf]
      %v1514 = vld [vmem:[%s1507 + $0x24] sm:$0xff]
      %v1515 = vld [vmem:[%s1507 + $0x2c] sm:$0xf]
      %v1516 = vld [vmem:[%s1507 + $0x30] sm:$0xff]
      %v1517 = vld [vmem:[%s1507 + $0x38] sm:$0xf]
      %v1518 = vld [vmem:[%s1507 + $0x3c] sm:$0xff]
      %v1519 = vld [vmem:[%s1507 + $0x44] sm:$0xf]
      %v1520 = vld [vmem:[%s1507 + $0x48] sm:$0xff]
      %v1521 = vld [vmem:[%s1507 + $0x50] sm:$0xf]
      %v1522 = vld [vmem:[%s1507 + $0x54] sm:$0xff]
      %v1523 = vld [vmem:[%s1507 + $0x5c] sm:$0xf]
      %v1524 = vld [vmem:[%s1507 + $0x60] sm:$0xff]
      %v1525 = vld [vmem:[%s1507 + $0x68] sm:$0xf]
      %v1526 = vld [vmem:[%s1507 + $0x6c] sm:$0xff]
      %v1527 = vld [vmem:[%s1507 + $0x74] sm:$0xf]
      %v1528 = vld [vmem:[%s1507 + $0x78] sm:$0xff]
      %v1529 = vld [vmem:[%s1507 + $0x80] sm:$0xf]
      %v1530 = vld [vmem:[%s1507 + $0x84] sm:$0xff]
      %v1531 = vld [vmem:[%s1507 + $0x8c] sm:$0xf]
      %v1532 = vld [vmem:[%s1507 + $0x90] sm:$0xff]
      %v1533 = vld [vmem:[%s1507 + $0x98] sm:$0xf]
      %v1534 = vld [vmem:[%s1507 + $0x9c] sm:$0xff]
      %v1535 = vld [vmem:[%s1507 + $0xa4] sm:$0xf]
      %v1536 = vld [vmem:[%s1507 + $0xa8] sm:$0xff]
      %v1537 = vld [vmem:[%s1507 + $0xb0] sm:$0xf]
      %v1538 = vld [vmem:[%s1507 + $0xb4] sm:$0xff]
      %v1539 = vld [vmem:[%s1507 + $0xbc] sm:$0xf]
      %s1540 = scalar_lea.vmem [#allocation14], 6
      %v1541 = vld [vmem:[%s1540] sm:$0x7]
      %v1543 = vlaneseq
      %v1544 = vshrl.u32 %v1543, 7
      %v1545 = vsub.s32 0, %v1544
      %v1546 = vrot.slane %v1541, %v1545
      %v1547 = vlaneseq
      %v1548 = vshrl.u32 %v1547, 7
      %v1549 = vsub.s32 1, %v1548
      %v1550 = vrot.slane %v1541, %v1549
      %v1551 = vlaneseq
      %v1552 = vshrl.u32 %v1551, 7
      %v1553 = vsub.s32 2, %v1552
      %v1554 = vrot.slane %v1541, %v1553
      %v1590 = vunpack.c.l.b16 %v1508
      %v1591 = vunpack.c.h.b16 %v1508
      %v1592 = vunpack.c.l.b16 %v1509
      %v1593 = vunpack.c.l.b16 %v1510
      %v1594 = vunpack.c.h.b16 %v1510
      %v1595 = vunpack.c.l.b16 %v1511
      %v1596 = vunpack.c.l.b16 %v1512
      %v1597 = vunpack.c.h.b16 %v1512
      %v1598 = vunpack.c.l.b16 %v1513
      %v1599 = vunpack.c.l.b16 %v1514
      %v1600 = vunpack.c.h.b16 %v1514
      %v1601 = vunpack.c.l.b16 %v1515
      %v1602 = vunpack.c.l.b16 %v1516
      %v1603 = vunpack.c.h.b16 %v1516
      %v1604 = vunpack.c.l.b16 %v1517
      %v1605 = vunpack.c.l.b16 %v1518
      %v1606 = vunpack.c.h.b16 %v1518
      %v1607 = vunpack.c.l.b16 %v1519
      %v1608 = vunpack.c.l.b16 %v1520
      %v1609 = vunpack.c.h.b16 %v1520
      %v1610 = vunpack.c.l.b16 %v1521
      %v1611 = vunpack.c.l.b16 %v1522
      %v1612 = vunpack.c.h.b16 %v1522
      %v1613 = vunpack.c.l.b16 %v1523
      %v1614 = vunpack.c.l.b16 %v1524
      %v1615 = vunpack.c.h.b16 %v1524
      %v1616 = vunpack.c.l.b16 %v1525
      %v1617 = vunpack.c.l.b16 %v1526
      %v1618 = vunpack.c.h.b16 %v1526
      %v1619 = vunpack.c.l.b16 %v1527
      %v1620 = vunpack.c.l.b16 %v1528
      %v1621 = vunpack.c.h.b16 %v1528
      %v1622 = vunpack.c.l.b16 %v1529
      %v1623 = vunpack.c.l.b16 %v1530
      %v1624 = vunpack.c.h.b16 %v1530
      %v1625 = vunpack.c.l.b16 %v1531
      %v1626 = vunpack.c.l.b16 %v1532
      %v1627 = vunpack.c.h.b16 %v1532
      %v1628 = vunpack.c.l.b16 %v1533
      %v1629 = vunpack.c.l.b16 %v1534
      %v1630 = vunpack.c.h.b16 %v1534
      %v1631 = vunpack.c.l.b16 %v1535
      %v1632 = vunpack.c.l.b16 %v1536
      %v1633 = vunpack.c.h.b16 %v1536
      %v1634 = vunpack.c.l.b16 %v1537
      %v1635 = vunpack.c.l.b16 %v1538
      %v1636 = vunpack.c.h.b16 %v1538
      %v1637 = vunpack.c.l.b16 %v1539
      %v1638 = vpack.c.b16 %v1593, %v1590
      %v1639 = vpack.c.b16 %v1594, %v1591
      %v1640 = vpack.c.b16 %v1595, %v1592
      %v1641 = vpack.c.b16 %v1599, %v1596
      %v1642 = vpack.c.b16 %v1600, %v1597
      %v1643 = vpack.c.b16 %v1601, %v1598
      %v1644 = vpack.c.b16 %v1605, %v1602
      %v1645 = vpack.c.b16 %v1606, %v1603
      %v1646 = vpack.c.b16 %v1607, %v1604
      %v1647 = vpack.c.b16 %v1611, %v1608
      %v1648 = vpack.c.b16 %v1612, %v1609
      %v1649 = vpack.c.b16 %v1613, %v1610
      %v1650 = vpack.c.b16 %v1617, %v1614
      %v1651 = vpack.c.b16 %v1618, %v1615
      %v1652 = vpack.c.b16 %v1619, %v1616
      %v1653 = vpack.c.b16 %v1623, %v1620
      %v1654 = vpack.c.b16 %v1624, %v1621
      %v1655 = vpack.c.b16 %v1625, %v1622
      %v1656 = vpack.c.b16 %v1629, %v1626
      %v1657 = vpack.c.b16 %v1630, %v1627
      %v1658 = vpack.c.b16 %v1631, %v1628
      %v1659 = vpack.c.b16 %v1635, %v1632
      %v1660 = vpack.c.b16 %v1636, %v1633
      %v1661 = vpack.c.b16 %v1637, %v1634
      %1686 = vmatprep.subr.bf16.mxu0 %v1639
      %1687 = vmatpush1.bf16.msra.mxu0 %v1638
      %1688 = vmatprep.subr.bf16.mxu0 %v1642
      %1689 = vmatpush1.bf16.msra.mxu0 %v1641
      %1690 = vmatprep.subr.bf16.mxu0 %v1645
      %1691 = vmatpush1.bf16.msra.mxu0 %v1644
      %1692 = vmatprep.subr.bf16.mxu0 %v1648
      %1693 = vmatpush1.bf16.msra.mxu0 %v1647
      %1694 = vmatprep.subr.bf16.mxu0 %v1651
      %1695 = vmatpush1.bf16.msra.mxu0 %v1650
      %1696 = vmatprep.subr.bf16.mxu0 %v1654
      %1697 = vmatpush1.bf16.msra.mxu0 %v1653
      %1698 = vmatprep.subr.bf16.mxu0 %v1657
      %1699 = vmatpush1.bf16.msra.mxu0 %v1656
      %1700 = vmatprep.subr.bf16.mxu0 %v1660
      %1701 = vmatpush1.bf16.msra.mxu0 %v1659
      %1702 = vmatprep.subr.bf16.mxu0 0
      %1703 = vmatpush1.bf16.msra.mxu0 0
      %1704 = vmatprep.subr.bf16.mxu0 0
      %1705 = vmatpush1.bf16.msra.mxu0 0
      %1706 = vmatprep.subr.bf16.mxu0 0
      %1707 = vmatpush1.bf16.msra.mxu0 0
      %1708 = vmatprep.subr.bf16.mxu0 0
      %1709 = vmatpush1.bf16.msra.mxu0 0
      %1710 = vmatprep.subr.bf16.mxu0 0
      %1711 = vmatpush1.bf16.msra.mxu0 0
      %1712 = vmatprep.subr.bf16.mxu0 0
      %1713 = vmatpush1.bf16.msra.mxu0 0
      %1714 = vmatprep.subr.bf16.mxu0 0
      %1715 = vmatpush1.bf16.msra.mxu0 0
      %1716 = vmatprep.subr.bf16.mxu0 0
      %1717 = vmatpush1.bf16.msra.mxu0 0
      %1718 = vmatprep.mubr.bf16.mxu0 0
      %1719 = vmatmul.mubr.bf16.gmra.mrb[0].mxu0 %v1506
      %v1720 = vpop.f32.mrb[0].mxu0
      %v1721 = vadd.f32 %v1546, %v1720
      %v1722 = vpop.f32.mrb[0].mxu0
      %v1723 = vadd.f32 %v1550, %v1722
      %v1724 = vpop.f32.mrb[0].mxu0
      %v1725 = vpop.f32.mrb[0].mxu0
      %1726 = vdwg.mxu0
      %1727 = vmatprep.subr.bf16.mxu0 0
      %1728 = vmatpush1.bf16.msra.mxu0 %v1640
      %1729 = vmatprep.subr.bf16.mxu0 0
      %1730 = vmatpush1.bf16.msra.mxu0 %v1643
      %1731 = vmatprep.subr.bf16.mxu0 0
      %1732 = vmatpush1.bf16.msra.mxu0 %v1646
      %1733 = vmatprep.subr.bf16.mxu0 0
      %1734 = vmatpush1.bf16.msra.mxu0 %v1649
      %1735 = vmatprep.subr.bf16.mxu0 0
      %1736 = vmatpush1.bf16.msra.mxu0 %v1652
      %1737 = vmatprep.subr.bf16.mxu0 0
      %1738 = vmatpush1.bf16.msra.mxu0 %v1655
      %1739 = vmatprep.subr.bf16.mxu0 0
      %1740 = vmatpush1.bf16.msra.mxu0 %v1658
      %1741 = vmatprep.subr.bf16.mxu0 0
      %1742 = vmatpush1.bf16.msra.mxu0 %v1661
      %1743 = vmatprep.subr.bf16.mxu0 0
      %1744 = vmatpush1.bf16.msra.mxu0 0
      %1745 = vmatprep.subr.bf16.mxu0 0
      %1746 = vmatpush1.bf16.msra.mxu0 0
      %1747 = vmatprep.subr.bf16.mxu0 0
      %1748 = vmatpush1.bf16.msra.mxu0 0
      %1749 = vmatprep.subr.bf16.mxu0 0
      %1750 = vmatpush1.bf16.msra.mxu0 0
      %1751 = vmatprep.subr.bf16.mxu0 0
      %1752 = vmatpush1.bf16.msra.mxu0 0
      %1753 = vmatprep.subr.bf16.mxu0 0
      %1754 = vmatpush1.bf16.msra.mxu0 0
      %1755 = vmatprep.subr.bf16.mxu0 0
      %1756 = vmatpush1.bf16.msra.mxu0 0
      %1757 = vmatprep.subr.bf16.mxu0 0
      %1758 = vmatpush1.bf16.msra.mxu0 0
      %1759 = vmatprep.mubr.bf16.mxu0 0
      %1760 = vmatmul.mubr.bf16.gmra.mrb[0].mxu0 %v1506
      %v1761 = vpop.f32.mrb[0].mxu0
      %v1762 = vadd.f32 %v1554, %v1761
      %v1763 = vpop.f32.mrb[0].mxu0
      %v1764 = vpop.f32.mrb[0].mxu0
      %v1765 = vpop.f32.mrb[0].mxu0
      %1766 = vdwg.mxu0
      %v1767 = vadd.f32 %v1460, %v1721
      %v1768 = vxor.u32 %v1767, 2147483648
      %v1769 = vmul.f32 %v1768, 1.442695
      %v1770 = vpow.pop %v1769
      %v1771 = vadd.f32 %v1770, 1.0
      %v1772 = vrcp.pop %v1771
      %v1773 = vmul.f32 1.0, %v1772
      %v1774 = vadd.f32 %v1462, %v1723
      %v1775 = vxor.u32 %v1774, 2147483648
      %v1776 = vmul.f32 %v1775, 1.442695
      %v1777 = vpow.pop %v1776
      %v1778 = vadd.f32 %v1777, 1.0
      %v1779 = vrcp.pop %v1778
      %v1780 = vmul.f32 1.0, %v1779
      %v1781 = vmul.f32 %v1773, %v1762
      %v1782 = vadd.f32 %v1501, %v1781
      %v1783 = vtanh.pop %v1782
      %v1784 = vsub.f32 1.0, %v1780
      %v1785 = vmul.f32 %v1784, %v1783
      %v1786 = vmul.f32 %v1780, %v1244
      %v1787 = vadd.f32 %v1785, %v1786
      %s1788 = scalar_lea.vmem %s13, 16
      %1789 = vst [vmem:[%s1788] sm:$0xff] %v1787
      %v1790 = vld [vmem:[%s3] sm:$0xf]
      %v1791 = vld [vmem:[%s3 + $0x4] sm:$0xf]
      %v1792 = vld [vmem:[%s3 + $0x8] sm:$0xf]
      %v1793 = vld [vmem:[%s3 + $0xc] sm:$0xf]
      %v1794 = vld [vmem:[%s3 + $0x10] sm:$0xf]
      %v1795 = vld [vmem:[%s3 + $0x14] sm:$0xf]
      %v1796 = vld [vmem:[%s3 + $0x18] sm:$0xf]
      %v1797 = vld [vmem:[%s3 + $0x1c] sm:$0xf]
      %v1798 = vunpack.c.l.bf16 %v1790
      %v1799 = vunpack.c.l.bf16 %v1791
      %v1800 = vunpack.c.l.bf16 %v1792
      %v1801 = vunpack.c.l.bf16 %v1793
      %v1802 = vunpack.c.l.bf16 %v1794
      %v1803 = vunpack.c.l.bf16 %v1795
      %v1804 = vunpack.c.l.bf16 %v1796
      %v1805 = vunpack.c.l.bf16 %v1797
      %v1806 = vpack.c.bf16 %v1787, %v1787
      %v1807 = vunpack.c.l.bf16 %v1806
      %v1809 = vcombine.high %v1807, %v1807
      %v1811 = vunpack.c.l.s4 1966171168
      %v1812 = vunpack.c.0.s8 %v1811
      %v1813 = vlaneseq
      %v1814 = vshrl.u32 %v1813, 7
      %v1815 = vsub.s32 %v1812, %v1814
      %v1816 = vrot.slane %v1807, %v1815
      %v1818 = vunpack.c.l.s4 1966171168
      %v1819 = vunpack.c.0.s8 %v1818
      %v1820 = vlaneseq
      %v1821 = vshrl.u32 %v1820, 7
      %v1822 = vsub.s32 %v1819, %v1821
      %v1823 = vrot.slane %v1809, %v1822
      %v1824 = vcombine.high %v1816, %v1816
      %v1825 = vcombine.high %v1823, %v1823
      %v1827 = vunpack.c.l.s4 1966171168
      %v1828 = vunpack.c.0.s8 %v1827
      %v1829 = vlaneseq
      %v1830 = vshrl.u32 %v1829, 7
      %v1831 = vsub.s32 %v1828, %v1830
      %v1832 = vrot.slane %v1816, %v1831
      %v1834 = vunpack.c.l.s4 1966171168
      %v1835 = vunpack.c.0.s8 %v1834
      %v1836 = vlaneseq
      %v1837 = vshrl.u32 %v1836, 7
      %v1838 = vsub.s32 %v1835, %v1837
      %v1839 = vrot.slane %v1823, %v1838
      %v1841 = vunpack.c.l.s4 1966171168
      %v1842 = vunpack.c.0.s8 %v1841
      %v1843 = vlaneseq
      %v1844 = vshrl.u32 %v1843, 7
      %v1845 = vsub.s32 %v1842, %v1844
      %v1846 = vrot.slane %v1824, %v1845
      %v1848 = vunpack.c.l.s4 1966171168
      %v1849 = vunpack.c.0.s8 %v1848
      %v1850 = vlaneseq
      %v1851 = vshrl.u32 %v1850, 7
      %v1852 = vsub.s32 %v1849, %v1851
      %v1853 = vrot.slane %v1825, %v1852
      %v1854 = vcombine.high %v1832, %v1832
      %v1855 = vcombine.high %v1839, %v1839
      %v1856 = vcombine.high %v1846, %v1846
      %v1857 = vcombine.high %v1853, %v1853
      %v1858 = vlaneseq
      %v1859 = vshrl.u32 %v1858, 7
      %v1860 = vsub.s32 0, %v1859
      %v1861 = vrot.slane %v1832, %v1860
      %v1862 = vlaneseq
      %v1863 = vshrl.u32 %v1862, 7
      %v1864 = vsub.s32 0, %v1863
      %v1865 = vrot.slane %v1846, %v1864
      %v1866 = vlaneseq
      %v1867 = vshrl.u32 %v1866, 7
      %v1868 = vsub.s32 0, %v1867
      %v1869 = vrot.slane %v1854, %v1868
      %v1870 = vlaneseq
      %v1871 = vshrl.u32 %v1870, 7
      %v1872 = vsub.s32 0, %v1871
      %v1873 = vrot.slane %v1856, %v1872
      %v1874 = vlaneseq
      %v1875 = vshrl.u32 %v1874, 7
      %v1876 = vsub.s32 0, %v1875
      %v1877 = vrot.slane %v1839, %v1876
      %v1878 = vlaneseq
      %v1879 = vshrl.u32 %v1878, 7
      %v1880 = vsub.s32 0, %v1879
      %v1881 = vrot.slane %v1853, %v1880
      %v1882 = vlaneseq
      %v1883 = vshrl.u32 %v1882, 7
      %v1884 = vsub.s32 0, %v1883
      %v1885 = vrot.slane %v1855, %v1884
      %v1886 = vlaneseq
      %v1887 = vshrl.u32 %v1886, 7
      %v1888 = vsub.s32 0, %v1887
      %v1889 = vrot.slane %v1857, %v1888
      %v1898 = vmul.f32 %v1861, %v1798
      %v1899 = vmul.f32 %v1865, %v1799
      %v1900 = vmul.f32 %v1869, %v1800
      %v1901 = vmul.f32 %v1873, %v1801
      %v1902 = vmul.f32 %v1877, %v1802
      %v1903 = vmul.f32 %v1881, %v1803
      %v1904 = vmul.f32 %v1885, %v1804
      %v1905 = vmul.f32 %v1889, %v1805
      %1906 = vadd.xlane.f32.xlu0 %v1898
      %v1907 = vpop.xlane.xlu0 %1906
      %1908 = vadd.xlane.f32.xlu0 %v1899
      %v1909 = vpop.xlane.xlu0 %1908
      %1910 = vadd.xlane.f32.xlu0 %v1900
      %v1911 = vpop.xlane.xlu0 %1910
      %1912 = vadd.xlane.f32.xlu0 %v1901
      %v1913 = vpop.xlane.xlu0 %1912
      %1914 = vadd.xlane.f32.xlu0 %v1902
      %v1915 = vpop.xlane.xlu0 %1914
      %1916 = vadd.xlane.f32.xlu0 %v1903
      %v1917 = vpop.xlane.xlu0 %1916
      %1918 = vadd.xlane.f32.xlu0 %v1904
      %v1919 = vpop.xlane.xlu0 %1918
      %1920 = vadd.xlane.f32.xlu0 %v1905
      %v1921 = vpop.xlane.xlu0 %1920
      %v1930 = vlaneseq
      %v1931 = vand.u32 %v1930, 127
      %v1932 = vlaneseq
      %v1933 = vshrl.u32 %v1932, 7
      %v1934 = vsub.s32 %v1931, %v1933
      %v1935 = vrot.slane %v1907, %v1934
      %v1936 = vlaneseq
      %v1937 = vshrl.u32 %v1936, 7
      %v1938 = vsub.s32 %v1931, %v1937
      %v1939 = vrot.slane %v1909, %v1938
      %v1940 = vlaneseq
      %v1941 = vshrl.u32 %v1940, 7
      %v1942 = vsub.s32 %v1931, %v1941
      %v1943 = vrot.slane %v1911, %v1942
      %v1944 = vlaneseq
      %v1945 = vshrl.u32 %v1944, 7
      %v1946 = vsub.s32 %v1931, %v1945
      %v1947 = vrot.slane %v1913, %v1946
      %v1948 = vlaneseq
      %v1949 = vshrl.u32 %v1948, 7
      %v1950 = vsub.s32 %v1931, %v1949
      %v1951 = vrot.slane %v1915, %v1950
      %v1952 = vlaneseq
      %v1953 = vshrl.u32 %v1952, 7
      %v1954 = vsub.s32 %v1931, %v1953
      %v1955 = vrot.slane %v1917, %v1954
      %v1956 = vlaneseq
      %v1957 = vshrl.u32 %v1956, 7
      %v1958 = vsub.s32 %v1931, %v1957
      %v1959 = vrot.slane %v1919, %v1958
      %v1960 = vlaneseq
      %v1961 = vshrl.u32 %v1960, 7
      %v1962 = vsub.s32 %v1931, %v1961
      %v1963 = vrot.slane %v1921, %v1962
      %vm1964 = vcmask 1041409
      %v1965 = vsel %vm1964, %v1939, %v1935
      %vm1966 = vcmask 1042434
      %v1967 = vsel %vm1966, %v1943, %v1965
      %vm1968 = vcmask 1043459
      %v1969 = vsel %vm1968, %v1947, %v1967
      %vm1970 = vcmask 1044484
      %v1971 = vsel %vm1970, %v1951, %v1969
      %vm1972 = vcmask 1045509
      %v1973 = vsel %vm1972, %v1955, %v1971
      %vm1974 = vcmask 1046534
      %v1975 = vsel %vm1974, %v1959, %v1973
      %vm1976 = vcmask 1047559
      %v1977 = vsel %vm1976, %v1963, %v1975
      %vm1979 = vcmask 64512
      %v1980 = vsel %vm1979, %v1977, -inf
      %1981 = vmax.xlane.f32.xlu0 %v1980
      %v1982 = vpop.xlane.xlu0 %1981
      %v1984 = vlaneseq
      %v1985 = vshrl.u32 %v1984, 7
      %v1986 = vsub.s32 0, %v1985
      %v1987 = vrot.slane %v1982, %v1986
      %v1988 = vlaneseq
      %v1989 = vshrl.u32 %v1988, 7
      %v1990 = vsub.s32 1, %v1989
      %v1991 = vrot.slane %v1982, %v1990
      %v1992 = vlaneseq
      %v1993 = vshrl.u32 %v1992, 7
      %v1994 = vsub.s32 2, %v1993
      %v1995 = vrot.slane %v1982, %v1994
      %v1996 = vlaneseq
      %v1997 = vshrl.u32 %v1996, 7
      %v1998 = vsub.s32 3, %v1997
      %v1999 = vrot.slane %v1982, %v1998
      %v2000 = vlaneseq
      %v2001 = vshrl.u32 %v2000, 7
      %v2002 = vsub.s32 4, %v2001
      %v2003 = vrot.slane %v1982, %v2002
      %v2004 = vlaneseq
      %v2005 = vshrl.u32 %v2004, 7
      %v2006 = vsub.s32 5, %v2005
      %v2007 = vrot.slane %v1982, %v2006
      %v2008 = vlaneseq
      %v2009 = vshrl.u32 %v2008, 7
      %v2010 = vsub.s32 6, %v2009
      %v2011 = vrot.slane %v1982, %v2010
      %v2012 = vlaneseq
      %v2013 = vshrl.u32 %v2012, 7
      %v2014 = vsub.s32 7, %v2013
      %v2015 = vrot.slane %v1982, %v2014
      %v2024 = vsub.f32 %v1907, %v1987
      %v2025 = vsub.f32 %v1909, %v1991
      %v2026 = vsub.f32 %v1911, %v1995
      %v2027 = vsub.f32 %v1913, %v1999
      %v2028 = vsub.f32 %v1915, %v2003
      %v2029 = vsub.f32 %v1917, %v2007
      %v2030 = vsub.f32 %v1919, %v2011
      %v2031 = vsub.f32 %v1921, %v2015
      %v2032 = vmul.f32 %v2024, 1.442695
      %v2033 = vpow.pop %v2032
      %v2034 = vmul.f32 %v2025, 1.442695
      %v2035 = vpow.pop %v2034
      %v2036 = vmul.f32 %v2026, 1.442695
      %v2037 = vpow.pop %v2036
      %v2038 = vmul.f32 %v2027, 1.442695
      %v2039 = vpow.pop %v2038
      %v2040 = vmul.f32 %v2028, 1.442695
      %v2041 = vpow.pop %v2040
      %v2042 = vmul.f32 %v2029, 1.442695
      %v2043 = vpow.pop %v2042
      %v2044 = vmul.f32 %v2030, 1.442695
      %v2045 = vpow.pop %v2044
      %v2046 = vmul.f32 %v2031, 1.442695
      %v2047 = vpow.pop %v2046
      %2056 = vset.pattern.permute.xlu0 0
      %2057 = vperm.xlu0 %2056, %v2033
      %v2058 = vpop.permute.xlu0 %2057
      %2059 = vset.pattern.permute.xlu0 0
      %2060 = vperm.xlu0 %2059, %v2035
      %v2061 = vpop.permute.xlu0 %2060
      %2062 = vset.pattern.permute.xlu0 0
      %2063 = vperm.xlu0 %2062, %v2037
      %v2064 = vpop.permute.xlu0 %2063
      %2065 = vset.pattern.permute.xlu0 0
      %2066 = vperm.xlu0 %2065, %v2039
      %v2067 = vpop.permute.xlu0 %2066
      %2068 = vset.pattern.permute.xlu0 0
      %2069 = vperm.xlu0 %2068, %v2041
      %v2070 = vpop.permute.xlu0 %2069
      %2071 = vset.pattern.permute.xlu0 0
      %2072 = vperm.xlu0 %2071, %v2043
      %v2073 = vpop.permute.xlu0 %2072
      %2074 = vset.pattern.permute.xlu0 0
      %2075 = vperm.xlu0 %2074, %v2045
      %v2076 = vpop.permute.xlu0 %2075
      %2077 = vset.pattern.permute.xlu0 0
      %2078 = vperm.xlu0 %2077, %v2047
      %v2079 = vpop.permute.xlu0 %2078
      %v2080 = vlaneseq
      %v2081 = vshrl.u32 %v2080, 7
      %v2082 = vsub.s32 %v1931, %v2081
      %v2083 = vrot.slane %v2058, %v2082
      %v2084 = vlaneseq
      %v2085 = vshrl.u32 %v2084, 7
      %v2086 = vsub.s32 %v1931, %v2085
      %v2087 = vrot.slane %v2061, %v2086
      %v2088 = vlaneseq
      %v2089 = vshrl.u32 %v2088, 7
      %v2090 = vsub.s32 %v1931, %v2089
      %v2091 = vrot.slane %v2064, %v2090
      %v2092 = vlaneseq
      %v2093 = vshrl.u32 %v2092, 7
      %v2094 = vsub.s32 %v1931, %v2093
      %v2095 = vrot.slane %v2067, %v2094
      %v2096 = vlaneseq
      %v2097 = vshrl.u32 %v2096, 7
      %v2098 = vsub.s32 %v1931, %v2097
      %v2099 = vrot.slane %v2070, %v2098
      %v2100 = vlaneseq
      %v2101 = vshrl.u32 %v2100, 7
      %v2102 = vsub.s32 %v1931, %v2101
      %v2103 = vrot.slane %v2073, %v2102
      %v2104 = vlaneseq
      %v2105 = vshrl.u32 %v2104, 7
      %v2106 = vsub.s32 %v1931, %v2105
      %v2107 = vrot.slane %v2076, %v2106
      %v2108 = vlaneseq
      %v2109 = vshrl.u32 %v2108, 7
      %v2110 = vsub.s32 %v1931, %v2109
      %v2111 = vrot.slane %v2079, %v2110
      %v2112 = vsel %vm1964, %v2087, %v2083
      %v2113 = vsel %vm1966, %v2091, %v2112
      %v2114 = vsel %vm1968, %v2095, %v2113
      %v2115 = vsel %vm1970, %v2099, %v2114
      %v2116 = vsel %vm1972, %v2103, %v2115
      %v2117 = vsel %vm1974, %v2107, %v2116
      %v2118 = vsel %vm1976, %v2111, %v2117
      %v2120 = vsel %vm1979, %v2118, 0.0
      %2121 = vadd.xlane.f32.xlu0 %v2120
      %v2122 = vpop.xlane.xlu0 %2121
      %v2124 = vlaneseq
      %v2125 = vshrl.u32 %v2124, 7
      %v2126 = vsub.s32 0, %v2125
      %v2127 = vrot.slane %v2122, %v2126
      %v2128 = vlaneseq
      %v2129 = vshrl.u32 %v2128, 7
      %v2130 = vsub.s32 1, %v2129
      %v2131 = vrot.slane %v2122, %v2130
      %v2132 = vlaneseq
      %v2133 = vshrl.u32 %v2132, 7
      %v2134 = vsub.s32 2, %v2133
      %v2135 = vrot.slane %v2122, %v2134
      %v2136 = vlaneseq
      %v2137 = vshrl.u32 %v2136, 7
      %v2138 = vsub.s32 3, %v2137
      %v2139 = vrot.slane %v2122, %v2138
      %v2140 = vlaneseq
      %v2141 = vshrl.u32 %v2140, 7
      %v2142 = vsub.s32 4, %v2141
      %v2143 = vrot.slane %v2122, %v2142
      %v2144 = vlaneseq
      %v2145 = vshrl.u32 %v2144, 7
      %v2146 = vsub.s32 5, %v2145
      %v2147 = vrot.slane %v2122, %v2146
      %v2148 = vlaneseq
      %v2149 = vshrl.u32 %v2148, 7
      %v2150 = vsub.s32 6, %v2149
      %v2151 = vrot.slane %v2122, %v2150
      %v2152 = vlaneseq
      %v2153 = vshrl.u32 %v2152, 7
      %v2154 = vsub.s32 7, %v2153
      %v2155 = vrot.slane %v2122, %v2154
      %v2164 = vrcp.pop %v2127
      %v2165 = vmul.f32 %v2033, %v2164
      %v2166 = vrcp.pop %v2131
      %v2167 = vmul.f32 %v2035, %v2166
      %v2168 = vrcp.pop %v2135
      %v2169 = vmul.f32 %v2037, %v2168
      %v2170 = vrcp.pop %v2139
      %v2171 = vmul.f32 %v2039, %v2170
      %v2172 = vrcp.pop %v2143
      %v2173 = vmul.f32 %v2041, %v2172
      %v2174 = vrcp.pop %v2147
      %v2175 = vmul.f32 %v2043, %v2174
      %v2176 = vrcp.pop %v2151
      %v2177 = vmul.f32 %v2045, %v2176
      %v2178 = vrcp.pop %v2155
      %v2179 = vmul.f32 %v2047, %v2178
      %v2180 = vpack.c.bf16 %v2165, %v2165
      %v2181 = vpack.c.bf16 %v2167, %v2167
      %v2182 = vpack.c.bf16 %v2169, %v2169
      %v2183 = vpack.c.bf16 %v2171, %v2171
      %v2184 = vpack.c.bf16 %v2173, %v2173
      %v2185 = vpack.c.bf16 %v2175, %v2175
      %v2186 = vpack.c.bf16 %v2177, %v2177
      %v2187 = vpack.c.bf16 %v2179, %v2179
      %v2188 = vunpack.c.l.bf16 %v2180
      %v2189 = vunpack.c.l.bf16 %v2181
      %v2190 = vunpack.c.l.bf16 %v2182
      %v2191 = vunpack.c.l.bf16 %v2183
      %v2192 = vunpack.c.l.bf16 %v2184
      %v2193 = vunpack.c.l.bf16 %v2185
      %v2194 = vunpack.c.l.bf16 %v2186
      %v2195 = vunpack.c.l.bf16 %v2187
      %2197 = vset.pattern.permute.xlu0 0
      %2198 = vperm.xlu0 %2197, %v2188
      %v2199 = vpop.permute.xlu0 %2198
      %2202 = vset.pattern.permute.xlu0 0
      %2203 = vperm.xlu0 %2202, %v2189
      %v2204 = vpop.permute.xlu0 %2203
      %2207 = vset.pattern.permute.xlu0 0
      %2208 = vperm.xlu0 %2207, %v2190
      %v2209 = vpop.permute.xlu0 %2208
      %2212 = vset.pattern.permute.xlu0 0
      %2213 = vperm.xlu0 %2212, %v2191
      %v2214 = vpop.permute.xlu0 %2213
      %2217 = vset.pattern.permute.xlu0 0
      %2218 = vperm.xlu0 %2217, %v2192
      %v2219 = vpop.permute.xlu0 %2218
      %2222 = vset.pattern.permute.xlu0 0
      %2223 = vperm.xlu0 %2222, %v2193
      %v2224 = vpop.permute.xlu0 %2223
      %2227 = vset.pattern.permute.xlu0 0
      %2228 = vperm.xlu0 %2227, %v2194
      %v2229 = vpop.permute.xlu0 %2228
      %2232 = vset.pattern.permute.xlu0 0
      %2233 = vperm.xlu0 %2232, %v2195
      %v2234 = vpop.permute.xlu0 %2233
      %v2236 = vmul.f32 %v2199, %v1798
      %v2237 = vmul.f32 %v2204, %v1799
      %v2238 = vmul.f32 %v2209, %v1800
      %v2239 = vmul.f32 %v2214, %v1801
      %v2240 = vmul.f32 %v2219, %v1802
      %v2241 = vmul.f32 %v2224, %v1803
      %v2242 = vmul.f32 %v2229, %v1804
      %v2243 = vmul.f32 %v2234, %v1805
      %v2244 = vrot.slane %v2236, 4
      %v2245 = vadd.f32 %v2236, %v2244
      %v2246 = vrot.slane %v2245, 2
      %v2247 = vadd.f32 %v2245, %v2246
      %v2248 = vrot.slane %v2247, 1
      %v2249 = vadd.f32 %v2247, %v2248
      %v2250 = vrot.slane %v2237, 4
      %v2251 = vadd.f32 %v2237, %v2250
      %v2252 = vrot.slane %v2251, 2
      %v2253 = vadd.f32 %v2251, %v2252
      %v2254 = vrot.slane %v2253, 1
      %v2255 = vadd.f32 %v2253, %v2254
      %v2256 = vrot.slane %v2238, 4
      %v2257 = vadd.f32 %v2238, %v2256
      %v2258 = vrot.slane %v2257, 2
      %v2259 = vadd.f32 %v2257, %v2258
      %v2260 = vrot.slane %v2259, 1
      %v2261 = vadd.f32 %v2259, %v2260
      %v2262 = vrot.slane %v2239, 4
      %v2263 = vadd.f32 %v2239, %v2262
      %v2264 = vrot.slane %v2263, 2
      %v2265 = vadd.f32 %v2263, %v2264
      %v2266 = vrot.slane %v2265, 1
      %v2267 = vadd.f32 %v2265, %v2266
      %v2268 = vrot.slane %v2240, 4
      %v2269 = vadd.f32 %v2240, %v2268
      %v2270 = vrot.slane %v2269, 2
      %v2271 = vadd.f32 %v2269, %v2270
      %v2272 = vrot.slane %v2271, 1
      %v2273 = vadd.f32 %v2271, %v2272
      %v2274 = vrot.slane %v2241, 4
      %v2275 = vadd.f32 %v2241, %v2274
      %v2276 = vrot.slane %v2275, 2
      %v2277 = vadd.f32 %v2275, %v2276
      %v2278 = vrot.slane %v2277, 1
      %v2279 = vadd.f32 %v2277, %v2278
      %v2280 = vrot.slane %v2242, 4
      %v2281 = vadd.f32 %v2242, %v2280
      %v2282 = vrot.slane %v2281, 2
      %v2283 = vadd.f32 %v2281, %v2282
      %v2284 = vrot.slane %v2283, 1
      %v2285 = vadd.f32 %v2283, %v2284
      %v2286 = vrot.slane %v2243, 4
      %v2287 = vadd.f32 %v2243, %v2286
      %v2288 = vrot.slane %v2287, 2
      %v2289 = vadd.f32 %v2287, %v2288
      %v2290 = vrot.slane %v2289, 1
      %v2291 = vadd.f32 %v2289, %v2290
      %v2292 = vpack.c.bf16 %v2249, %v2249
      %v2293 = vpack.c.bf16 %v2255, %v2255
      %v2294 = vpack.c.bf16 %v2261, %v2261
      %v2295 = vpack.c.bf16 %v2267, %v2267
      %v2296 = vpack.c.bf16 %v2273, %v2273
      %v2297 = vpack.c.bf16 %v2279, %v2279
      %v2298 = vpack.c.bf16 %v2285, %v2285
      %v2299 = vpack.c.bf16 %v2291, %v2291
      %v2308 = vunpack.c.l.b16 %v2292
      %v2309 = vunpack.c.l.b16 %v2293
      %v2310 = vunpack.c.l.b16 %v2294
      %v2311 = vunpack.c.l.b16 %v2295
      %v2312 = vunpack.c.l.b16 %v2296
      %v2313 = vunpack.c.l.b16 %v2297
      %v2314 = vunpack.c.l.b16 %v2298
      %v2315 = vunpack.c.l.b16 %v2299
      %v2316 = vsel %vm1964, %v2309, %v2308
      %v2317 = vsel %vm1966, %v2310, %v2316
      %v2318 = vsel %vm1968, %v2311, %v2317
      %v2319 = vsel %vm1970, %v2312, %v2318
      %v2320 = vsel %vm1972, %v2313, %v2319
      %v2321 = vsel %vm1974, %v2314, %v2320
      %v2322 = vsel %vm1976, %v2315, %v2321
      %v2323 = vpack.c.b16 %v2322, %v2322
      %v2325 = vld [vmem:[%s8] sm:$0xf]
      %v2326 = vld [vmem:[%s8 + $0x4] sm:$0xf]
      %v2327 = vld [vmem:[%s8 + $0x8] sm:$0xf]
      %v2328 = vld [vmem:[%s8 + $0xc] sm:$0xf]
      %v2329 = vld [vmem:[%s8 + $0x10] sm:$0xf]
      %v2330 = vld [vmem:[%s8 + $0x14] sm:$0xf]
      %v2331 = vld [vmem:[%s8 + $0x18] sm:$0xf]
      %v2332 = vld [vmem:[%s8 + $0x1c] sm:$0xf]
      %v2333 = vld [vmem:[%s8 + $0x20] sm:$0xf]
      %v2334 = vld [vmem:[%s8 + $0x24] sm:$0xf]
      %v2335 = vld [vmem:[%s8 + $0x28] sm:$0xf]
      %v2336 = vld [vmem:[%s8 + $0x2c] sm:$0xf]
      %v2337 = vld [vmem:[%s8 + $0x30] sm:$0xf]
      %v2338 = vld [vmem:[%s8 + $0x34] sm:$0xf]
      %v2339 = vld [vmem:[%s8 + $0x38] sm:$0xf]
      %v2340 = vld [vmem:[%s8 + $0x3c] sm:$0xf]
      %v2341 = vld [vmem:[%s8 + $0x40] sm:$0xf]
      %v2342 = vld [vmem:[%s8 + $0x44] sm:$0xf]
      %v2343 = vld [vmem:[%s8 + $0x48] sm:$0xf]
      %v2344 = vld [vmem:[%s8 + $0x4c] sm:$0xf]
      %v2345 = vld [vmem:[%s8 + $0x50] sm:$0xf]
      %v2346 = vld [vmem:[%s8 + $0x54] sm:$0xf]
      %v2347 = vld [vmem:[%s8 + $0x58] sm:$0xf]
      %v2348 = vld [vmem:[%s8 + $0x5c] sm:$0xf]
      %v2349 = vld [vmem:[%s8 + $0x60] sm:$0xf]
      %v2350 = vld [vmem:[%s8 + $0x64] sm:$0xf]
      %v2351 = vld [vmem:[%s8 + $0x68] sm:$0xf]
      %v2352 = vld [vmem:[%s8 + $0x6c] sm:$0xf]
      %v2353 = vld [vmem:[%s8 + $0x70] sm:$0xf]
      %v2354 = vld [vmem:[%s8 + $0x74] sm:$0xf]
      %v2355 = vld [vmem:[%s8 + $0x78] sm:$0xf]
      %v2356 = vld [vmem:[%s8 + $0x7c] sm:$0xf]
      %v2357 = vld [vmem:[%s9] sm:$0x1]
      %v2359 = vlaneseq
      %v2360 = vshrl.u32 %v2359, 7
      %v2361 = vsub.s32 0, %v2360
      %v2362 = vrot.slane %v2357, %v2361
      %v2396 = vunpack.c.l.b16 %v2325
      %v2397 = vunpack.c.l.b16 %v2326
      %v2398 = vunpack.c.l.b16 %v2327
      %v2399 = vunpack.c.l.b16 %v2328
      %v2400 = vunpack.c.l.b16 %v2329
      %v2401 = vunpack.c.l.b16 %v2330
      %v2402 = vunpack.c.l.b16 %v2331
      %v2403 = vunpack.c.l.b16 %v2332
      %v2404 = vunpack.c.l.b16 %v2333
      %v2405 = vunpack.c.l.b16 %v2334
      %v2406 = vunpack.c.l.b16 %v2335
      %v2407 = vunpack.c.l.b16 %v2336
      %v2408 = vunpack.c.l.b16 %v2337
      %v2409 = vunpack.c.l.b16 %v2338
      %v2410 = vunpack.c.l.b16 %v2339
      %v2411 = vunpack.c.l.b16 %v2340
      %v2412 = vunpack.c.l.b16 %v2341
      %v2413 = vunpack.c.l.b16 %v2342
      %v2414 = vunpack.c.l.b16 %v2343
      %v2415 = vunpack.c.l.b16 %v2344
      %v2416 = vunpack.c.l.b16 %v2345
      %v2417 = vunpack.c.l.b16 %v2346
      %v2418 = vunpack.c.l.b16 %v2347
      %v2419 = vunpack.c.l.b16 %v2348
      %v2420 = vunpack.c.l.b16 %v2349
      %v2421 = vunpack.c.l.b16 %v2350
      %v2422 = vunpack.c.l.b16 %v2351
      %v2423 = vunpack.c.l.b16 %v2352
      %v2424 = vunpack.c.l.b16 %v2353
      %v2425 = vunpack.c.l.b16 %v2354
      %v2426 = vunpack.c.l.b16 %v2355
      %v2427 = vunpack.c.l.b16 %v2356
      %v2428 = vpack.c.b16 %v2397, %v2396
      %v2429 = vpack.c.b16 %v2399, %v2398
      %v2430 = vpack.c.b16 %v2401, %v2400
      %v2431 = vpack.c.b16 %v2403, %v2402
      %v2432 = vpack.c.b16 %v2405, %v2404
      %v2433 = vpack.c.b16 %v2407, %v2406
      %v2434 = vpack.c.b16 %v2409, %v2408
      %v2435 = vpack.c.b16 %v2411, %v2410
      %v2436 = vpack.c.b16 %v2413, %v2412
      %v2437 = vpack.c.b16 %v2415, %v2414
      %v2438 = vpack.c.b16 %v2417, %v2416
      %v2439 = vpack.c.b16 %v2419, %v2418
      %v2440 = vpack.c.b16 %v2421, %v2420
      %v2441 = vpack.c.b16 %v2423, %v2422
      %v2442 = vpack.c.b16 %v2425, %v2424
      %v2443 = vpack.c.b16 %v2427, %v2426
      %2460 = vmatprep.subr.bf16.mxu0 0
      %2461 = vmatpush1.bf16.msra.mxu0 %v2428
      %2462 = vmatprep.subr.bf16.mxu0 0
      %2463 = vmatpush1.bf16.msra.mxu0 %v2429
      %2464 = vmatprep.subr.bf16.mxu0 0
      %2465 = vmatpush1.bf16.msra.mxu0 %v2430
      %2466 = vmatprep.subr.bf16.mxu0 0
      %2467 = vmatpush1.bf16.msra.mxu0 %v2431
      %2468 = vmatprep.subr.bf16.mxu0 0
      %2469 = vmatpush1.bf16.msra.mxu0 %v2432
      %2470 = vmatprep.subr.bf16.mxu0 0
      %2471 = vmatpush1.bf16.msra.mxu0 %v2433
      %2472 = vmatprep.subr.bf16.mxu0 0
      %2473 = vmatpush1.bf16.msra.mxu0 %v2434
      %2474 = vmatprep.subr.bf16.mxu0 0
      %2475 = vmatpush1.bf16.msra.mxu0 %v2435
      %2476 = vmatprep.subr.bf16.mxu0 0
      %2477 = vmatpush1.bf16.msra.mxu0 %v2436
      %2478 = vmatprep.subr.bf16.mxu0 0
      %2479 = vmatpush1.bf16.msra.mxu0 %v2437
      %2480 = vmatprep.subr.bf16.mxu0 0
      %2481 = vmatpush1.bf16.msra.mxu0 %v2438
      %2482 = vmatprep.subr.bf16.mxu0 0
      %2483 = vmatpush1.bf16.msra.mxu0 %v2439
      %2484 = vmatprep.subr.bf16.mxu0 0
      %2485 = vmatpush1.bf16.msra.mxu0 %v2440
      %2486 = vmatprep.subr.bf16.mxu0 0
      %2487 = vmatpush1.bf16.msra.mxu0 %v2441
      %2488 = vmatprep.subr.bf16.mxu0 0
      %2489 = vmatpush1.bf16.msra.mxu0 %v2442
      %2490 = vmatprep.subr.bf16.mxu0 0
      %2491 = vmatpush1.bf16.msra.mxu0 %v2443
      %2492 = vmatprep.mubr.bf16.mxu0 %v2323
      %2493 = vmatmul.mubr.bf16.gmra.mrb[0].mxu0 %v1806
      %v2494 = vpop.f32.mrb[0].mxu0
      %v2495 = vadd.f32 %v2362, %v2494
      %v2496 = vpop.f32.mrb[0].mxu0
      %v2497 = vpop.f32.mrb[0].mxu0
      %v2498 = vpop.f32.mrb[0].mxu0
      %2499 = vdwg.mxu0
      %v2500 = vtanh.pop %v2495
      %2501 = vst [vmem:[#allocation3] sm:$0xff] %v2500
      %vm2502 = vcmask 7168
      %2503 = vst.msk [vmem:[#allocation4] sm:$0xff] %vm2502, -inf
      %2504 = vst.msk [vmem:[#allocation5] sm:$0xff] %vm2502, 0.0
    $region65: #{attn_decoder_forward.1} parent=1 // pred_fallthru
      _
    %v2505 = vld [vmem:[#allocation3] sm:$0xff]
    %v2506 = vpack.c.bf16 %v2505, %v2505
    %v2507 = vld [vmem:[#allocation16] sm:$0xf]
    %v2508 = vld [vmem:[#allocation16 + $0x4] sm:$0xf]
    %v2509 = vld [vmem:[#allocation16 + $0x8] sm:$0xf]
    %v2510 = vld [vmem:[#allocation16 + $0xc] sm:$0xf]
    %v2511 = vld [vmem:[#allocation16 + $0x10] sm:$0xf]
    %v2512 = vld [vmem:[#allocation16 + $0x14] sm:$0xf]
    %v2513 = vld [vmem:[#allocation16 + $0x18] sm:$0xf]
    %v2514 = vld [vmem:[#allocation16 + $0x1c] sm:$0xf]
    %v2515 = vld [vmem:[#allocation16 + $0x20] sm:$0xf]
    %v2516 = vld [vmem:[#allocation16 + $0x24] sm:$0xf]
    %v2517 = vld [vmem:[#allocation16 + $0x28] sm:$0xf]
    %v2518 = vld [vmem:[#allocation16 + $0x2c] sm:$0xf]
    %v2519 = vld [vmem:[#allocation16 + $0x30] sm:$0xf]
    %v2520 = vld [vmem:[#allocation16 + $0x34] sm:$0xf]
    %v2521 = vld [vmem:[#allocation16 + $0x38] sm:$0xf]
    %v2522 = vld [vmem:[#allocation16 + $0x3c] sm:$0xf]
    %v2523 = vld [vmem:[%s11] sm:$0x1]
    %v2525 = vlaneseq
    %v2526 = vshrl.u32 %v2525, 7
    %v2527 = vsub.s32 0, %v2526
    %v2528 = vrot.slane %v2523, %v2527
    %v2546 = vunpack.c.l.b16 %v2507
    %v2547 = vunpack.c.l.b16 %v2508
    %v2548 = vunpack.c.l.b16 %v2509
    %v2549 = vunpack.c.l.b16 %v2510
    %v2550 = vunpack.c.l.b16 %v2511
    %v2551 = vunpack.c.l.b16 %v2512
    %v2552 = vunpack.c.l.b16 %v2513
    %v2553 = vunpack.c.l.b16 %v2514
    %v2554 = vunpack.c.l.b16 %v2515
    %v2555 = vunpack.c.l.b16 %v2516
    %v2556 = vunpack.c.l.b16 %v2517
    %v2557 = vunpack.c.l.b16 %v2518
    %v2558 = vunpack.c.l.b16 %v2519
    %v2559 = vunpack.c.l.b16 %v2520
    %v2560 = vunpack.c.l.b16 %v2521
    %v2561 = vunpack.c.l.b16 %v2522
    %v2562 = vpack.c.b16 %v2547, %v2546
    %v2563 = vpack.c.b16 %v2549, %v2548
    %v2564 = vpack.c.b16 %v2551, %v2550
    %v2565 = vpack.c.b16 %v2553, %v2552
    %v2566 = vpack.c.b16 %v2555, %v2554
    %v2567 = vpack.c.b16 %v2557, %v2556
    %v2568 = vpack.c.b16 %v2559, %v2558
    %v2569 = vpack.c.b16 %v2561, %v2560
    %2578 = vmatprep.subr.bf16.mxu0 0
    %2579 = vmatpush1.bf16.msra.mxu0 %v2562
    %2580 = vmatprep.subr.bf16.mxu0 0
    %2581 = vmatpush1.bf16.msra.mxu0 %v2563
    %2582 = vmatprep.subr.bf16.mxu0 0
    %2583 = vmatpush1.bf16.msra.mxu0 %v2564
    %2584 = vmatprep.subr.bf16.mxu0 0
    %2585 = vmatpush1.bf16.msra.mxu0 %v2565
    %2586 = vmatprep.subr.bf16.mxu0 0
    %2587 = vmatpush1.bf16.msra.mxu0 %v2566
    %2588 = vmatprep.subr.bf16.mxu0 0
    %2589 = vmatpush1.bf16.msra.mxu0 %v2567
    %2590 = vmatprep.subr.bf16.mxu0 0
    %2591 = vmatpush1.bf16.msra.mxu0 %v2568
    %2592 = vmatprep.subr.bf16.mxu0 0
    %2593 = vmatpush1.bf16.msra.mxu0 %v2569
    %2594 = vmatprep.subr.bf16.mxu0 0
    %2595 = vmatpush1.bf16.msra.mxu0 0
    %2596 = vmatprep.subr.bf16.mxu0 0
    %2597 = vmatpush1.bf16.msra.mxu0 0
    %2598 = vmatprep.subr.bf16.mxu0 0
    %2599 = vmatpush1.bf16.msra.mxu0 0
    %2600 = vmatprep.subr.bf16.mxu0 0
    %2601 = vmatpush1.bf16.msra.mxu0 0
    %2602 = vmatprep.subr.bf16.mxu0 0
    %2603 = vmatpush1.bf16.msra.mxu0 0
    %2604 = vmatprep.subr.bf16.mxu0 0
    %2605 = vmatpush1.bf16.msra.mxu0 0
    %2606 = vmatprep.subr.bf16.mxu0 0
    %2607 = vmatpush1.bf16.msra.mxu0 0
    %2608 = vmatprep.subr.bf16.mxu0 0
    %2609 = vmatpush1.bf16.msra.mxu0 0
    %2610 = vmatprep.mubr.bf16.mxu0 0
    %2611 = vmatmul.mubr.bf16.gmra.mrb[0].mxu0 %v2506
    %v2612 = vpop.f32.mrb[0].mxu0
    %v2613 = vadd.f32 %v2528, %v2612
    %v2614 = vpop.f32.mrb[0].mxu0
    %v2615 = vpop.f32.mrb[0].mxu0
    %v2616 = vpop.f32.mrb[0].mxu0
    %2617 = vdwg.mxu0
    %v2618 = vld [vmem:[#allocation4] sm:$0xff]
    %2619 = vmax.xlane.f32.xlu0 %v2613
    %v2620 = vpop.xlane.xlu0 %2619
    %v2621 = vmax.f32 %v2618, %v2620
    %v2622 = vld [vmem:[#allocation5] sm:$0xff]
    %v2623 = vsub.f32 %v2618, %v2621
    %v2624 = vmul.f32 %v2623, 1.442695
    %v2625 = vpow.pop %v2624
    %v2626 = vmul.f32 %v2622, %v2625
    %2628 = vset.pattern.permute.xlu0 0
    %2629 = vperm.xlu0 %2628, %v2621
    %v2630 = vpop.permute.xlu0 %2629
    %v2632 = vsub.f32 %v2613, %v2630
    %v2633 = vmul.f32 %v2632, 1.442695
    %v2634 = vpow.pop %v2633
    %2635 = vadd.xlane.f32.xlu0 %v2634
    %v2636 = vpop.xlane.xlu0 %2635
    %v2637 = vadd.f32 %v2626, %v2636
    %vm2638 = vcmask 7168
    %2639 = vst.msk [vmem:[#allocation5] sm:$0xff] %vm2638, %v2637
    %2640 = vst.msk [vmem:[#allocation4] sm:$0xff] %vm2638, %v2621
    %s2641 = smul.u32 0, 128
    %s2642 = sshra.s32 %s2641, 7
    %s2643 = sand.u32 %s2641, 127
    %s2644 = scalar_lea.vmem %s12, %s2642
    %2645 = vst [vmem:[%s2644] sm:$0xff] %v2613
    // Predicated region
    $region74: #{attn_decoder_forward.1} parent=1 // pred_check
      %p2646 = pneg %p114
    $region75: #{attn_decoder_forward.1} parent=1 // pred_check_branch
      %2648 = sbr.rel (%p2646) target = $region77
    $region76: #{attn_decoder_forward.1} parent=1 // pred_region
      %v2649 = vld [vmem:[%s12] sm:$0xff]
      %v2650 = vld [vmem:[#allocation4] sm:$0xff]
      %2652 = vset.pattern.permute.xlu0 0
      %2653 = vperm.xlu0 %2652, %v2650
      %v2654 = vpop.permute.xlu0 %2653
      %v2656 = vsub.f32 %v2649, %v2654
      %v2657 = vmul.f32 %v2656, 1.442695
      %v2658 = vpow.pop %v2657
      %v2659 = vld [vmem:[#allocation5] sm:$0xff]
      %2661 = vset.pattern.permute.xlu0 0
      %2662 = vperm.xlu0 %2661, %v2659
      %v2663 = vpop.permute.xlu0 %2662
      %v2665 = vrcp.pop %v2663
      %v2666 = vmul.f32 %v2658, %v2665
      %2667 = vst [vmem:[%s12] sm:$0xff] %v2666
    $region77: #{attn_decoder_forward.1} parent=1 // pred_fallthru
      _
    // Predicated region
    $region78: #{attn_decoder_forward.1} parent=1 // pred_check
      _
    $region79: #{attn_decoder_forward.1} parent=1 // pred_check_branch
      %2669 = sbr.rel (0) target = $region81
    $region80: #{attn_decoder_forward.1} parent=1 // pred_region
      _
    $region81: #{attn_decoder_forward.1} parent=1 // pred_fallthru
      _
    // Predicated region
    $region82: #{attn_decoder_forward.1} parent=1 // pred_check
      _
    $region83: #{attn_decoder_forward.1} parent=1 // pred_check_branch
      %2671 = sbr.rel (0) target = $region85
    $region84: #{attn_decoder_forward.1} parent=1 // pred_region
      _
    $region85: #{attn_decoder_forward.1} parent=1 // pred_fallthru
      _
    // Predicated region
    $region86: #{attn_decoder_forward.1} parent=1 // pred_check
      _
    $region87: #{attn_decoder_forward.1} parent=1 // pred_check_branch
      %2673 = sbr.rel (0) target = $region89
    $region88: #{attn_decoder_forward.1} parent=1 // pred_region
      _
    $region89: #{attn_decoder_forward.1} parent=1 // pred_fallthru
      _
    // Predicated region
    $region90: #{attn_decoder_forward.1} parent=1 // pred_check
      _
    $region91: #{attn_decoder_forward.1} parent=1 // pred_check_branch
      %2675 = sbr.rel (0) target = $region93
    $region92: #{attn_decoder_forward.1} parent=1 // pred_region
      _
    $region93: #{attn_decoder_forward.1} parent=1 // pred_fallthru
      _
    %2676 = vsyncpa [#allocation10], 1
    %2677 = vsyncpa [#allocation12], 1
    %2678 = vsyncpa [#allocation15], 1
  %2679 = vsyncmov [#allocation6]
  %s2680 = vpop.sfrf %2679
  %p2681 = scmp.eq.s32.totalorder %s2680, 0
  %p2682 = pneg %p2681
  %2684 = shalt.err (%p2682)
  %s2685 = scalar_lea.sflag [#allocation6], 1
  %2686 = vsyncmov %s2685
  %s2687 = vpop.sfrf %2686
  %p2688 = scmp.eq.s32.totalorder %s2687, 0
  %p2689 = pneg %p2688
  %2691 = shalt.err (%p2689)

</llo_original>
